<compile_context>
chip_gen: v5e
topology: v5e:2x2
jax: 0.10.0
libtpu: 0.0.40
codegen_flags: <defaults>
</compile_context>

<pallas_src>
import numpy as np
import jax
import jax.numpy as jnp
from jax import lax
from jax.experimental import pallas as pl
from jax.experimental.pallas import tpu as pltpu

_TV_MAX = 512    # lane tile over propositions V: 512 is v7x-safe (64 MiB VMEM) and
                 # near the DMA-efficiency knee; v6e/v5e could raise to 1024.
_UNROLL_T = 32   # fully unroll the time recursion when T (static) is small


def _crf_kernel(score_ref, log_ref, gold_ref, mask_ref, gtrans_ref,
                etrans_ref, start_ref, end_ref, tshift_ref,
                loss_ref, pred_ref):
    # score_ref / log_ref : (T, L, TV) f32  emissions / log-probs, V on lanes
    # gold_ref            : (T, TV)    i32  gold tags (T dense on sublanes)
    # mask_ref            : (T, TV)    f32  {0,1} contiguous-prefix masks
    # gtrans_ref          : (T-1, TV)  f32  trans[gold[t], gold[t+1]] (wrapper gather)
    # etrans_ref          : (L_next, L_prev, TV) f32 exp(trans[prev,next]-tshift[next])
    # start_ref/end_ref   : (L, 1) f32
    # tshift_ref          : (L, 1) f32      max_prev trans[prev, next]
    # loss_ref            : (1, TV) f32     per-proposition (logZ - gold_score)*valid
    # pred_ref            : (T, TV) i32     argmax over tags
    T, L, TV = score_ref.shape
    lidx = lax.broadcasted_iota(jnp.int32, (L, TV), 0)
    start_c = start_ref[...]
    end_c = end_ref[...]
    tshift_c = tshift_ref[...]

    def pred_emit(t):
        # per-time-step (L, TV) working set: argmax row, gold one-hot emission,
        # end-transition score of the gold tag at this position.
        logp_t = log_ref[t]                                           # (L, TV)
        mx = jnp.max(logp_t, axis=0, keepdims=True)                   # (1, TV)
        pred_t = jnp.min(jnp.where(logp_t == mx, lidx, L), axis=0, keepdims=True)
        pred_ref[pl.ds(t, 1)] = pred_t.astype(jnp.int32)
        oh_t = (lidx == gold_ref[pl.ds(t, 1)]).astype(jnp.float32)    # (L, TV)
        emit_t = jnp.sum(score_ref[t] * oh_t, axis=0, keepdims=True)  # (1, TV)
        end_g_t = jnp.sum(oh_t * end_c, axis=0, keepdims=True)        # (1, TV)
        return oh_t, emit_t, end_g_t

    # ---------------- t = 0: start term, first emission, alpha init ---------
    oh0, emit0, end_g0 = pred_emit(0)
    mask0 = mask_ref[pl.ds(0, 1)]                                     # (1, TV)
    start_term = jnp.sum(oh0 * start_c, axis=0, keepdims=True)        # (1, TV)
    num0 = start_term + emit0 * mask0
    alpha0 = start_c + score_ref[0]                                   # (L, TV)

    def step(t, carry):
        alpha, num, end_g_prev, mask_prev = carry
        mask_t = mask_ref[pl.ds(t, 1)]                                # (1, TV)
        _, emit_t, end_g_t = pred_emit(t)
        # gold path: wrapper-gathered transition + emission at t, end term when
        # position t-1 is the last real position (masks are contiguous prefixes).
        num = num + (gtrans_ref[pl.ds(t - 1, 1)] + emit_t) * mask_t
        num = num + end_g_prev * mask_prev * (1.0 - mask_t)
        # scaled forward recursion: only ~2*L*TV transcendentals per step.
        m = jnp.max(alpha, axis=0, keepdims=True)                     # (1, TV)
        p = jnp.exp(alpha - m)                                        # (L, TV)
        s = jnp.sum(p[None, :, :] * etrans_ref[...], axis=1)          # (L, TV)
        new_alpha = jnp.log(s) + score_ref[t] + m + tshift_c          # (L, TV)
        alpha = jnp.where(mask_t > 0.0, new_alpha, alpha)
        return alpha, num, end_g_t, mask_t

    carry = (alpha0, num0, end_g0, mask0)
    if T <= _UNROLL_T:
        for t in range(1, T):          # T is a trace-time constant: full unroll
            carry = step(t, carry)
    else:
        carry = lax.fori_loop(1, T, step, carry)
    alpha, num, end_g_last, mask_last = carry
    num = num + end_g_last * mask_last     # sequences that run to the final step

    # ---------------- log partition ------------------------------------------
    stops = alpha + end_c                                             # (L, TV)
    m2 = jnp.max(stops, axis=0, keepdims=True)
    log_z = m2 + jnp.log(jnp.sum(jnp.exp(stops - m2), axis=0, keepdims=True))

    # padded propositions (all-zero mask columns) must not contribute.
    valid = (mask0 > 0.0).astype(jnp.float32)                         # (1, TV)
    loss_ref[...] = (log_z - num) * valid


def crf_loss_pallas(flat_score, flat_log, flat_gold, flat_mask, transitions,
                    start_transitions, end_transitions):
    V, T, L = flat_score.shape
    assert T >= 2, "CRF kernel assumes at least 2 sequence positions"
    tv = min(_TV_MAX, 128 * pl.cdiv(V, 128))
    num_tiles = pl.cdiv(V, tv)
    Vpad = num_tiles * tv
    pad_v = Vpad - V
    f32 = jnp.float32

    # Lane-dense re-layout: V (padded to a multiple of tv) on the last axis.
    # TODO(synk): ideally the upstream producer emits emissions already in
    # (T, L, V) layout (or allow_input_fusion is used) so this transpose is not
    # a separate HBM pass.
    score_t = jnp.pad(jnp.transpose(flat_score.astype(f32), (1, 2, 0)),
                      ((0, 0), (0, 0), (0, pad_v)))                    # (T, L, Vpad)
    log_t = jnp.pad(jnp.transpose(flat_log.astype(f32), (1, 2, 0)),
                    ((0, 0), (0, 0), (0, pad_v)))                      # (T, L, Vpad)
    gold2 = jnp.pad(flat_gold.astype(jnp.int32).T, ((0, 0), (0, pad_v)))  # (T, Vpad)
    mask2 = jnp.pad(flat_mask.astype(f32).T, ((0, 0), (0, pad_v)))        # (T, Vpad)

    trans = transitions.astype(f32)
    gold_i = flat_gold.astype(jnp.int32)
    # gold-path transition scores gathered once in plain JAX (cheap O(V*T) gather)
    gtrans = trans[gold_i[:, :-1], gold_i[:, 1:]]                      # (V, T-1)
    gtrans2 = jnp.pad(gtrans.T, ((0, 0), (0, pad_v)))                  # (T-1, Vpad)

    # Scaled forward constants: exp(trans - colmax) is in (0, 1] -> never overflows.
    tshift = jnp.max(trans, axis=0)                                    # (L_next,)
    etrans = jnp.exp(trans - tshift[None, :])                          # (prev, next)
    etrans_b = jnp.broadcast_to(jnp.transpose(etrans)[:, :, None], (L, L, tv))
    start_col = start_transitions.astype(f32).reshape(L, 1)
    end_col = end_transitions.astype(f32).reshape(L, 1)
    tshift_col = tshift.reshape(L, 1)

    cost = pl.CostEstimate(
        flops=int((3 * L * L + 10 * L) * T * Vpad),
        transcendentals=int(2 * L * (T + 1) * Vpad),
        bytes_accessed=int(4 * (2 * T * L * Vpad + 4 * T * Vpad
                                + L * L * tv + T * Vpad + Vpad)),
    )

    # Derived VMEM footprint (double-buffered blocks) with headroom, clamped to
    # stay inside v7x's 64 MiB physical VMEM.
    block_bytes = 4 * tv * (2 * 2 * T * L + 2 * L * L + 2 * 3 * T + 2 * T + 2)
    vmem_limit = int(min(max(2 * block_bytes, 16 << 20), 64 << 20))

    kernel = pl.pallas_call(
        _crf_kernel,
        grid=(num_tiles,),
        in_specs=[
            pl.BlockSpec((T, L, tv), lambda i: (0, 0, i)),    # emissions (score)
            pl.BlockSpec((T, L, tv), lambda i: (0, 0, i)),    # log-probs (argmax)
            pl.BlockSpec((T, tv), lambda i: (0, i)),          # gold tags
            pl.BlockSpec((T, tv), lambda i: (0, i)),          # mask
            pl.BlockSpec((T - 1, tv), lambda i: (0, i)),      # gold transition scores
            pl.BlockSpec((L, L, tv), lambda i: (0, 0, 0)),    # exp(trans) broadcast
            pl.BlockSpec((L, 1), lambda i: (0, 0)),           # start_transitions
            pl.BlockSpec((L, 1), lambda i: (0, 0)),           # end_transitions
            pl.BlockSpec((L, 1), lambda i: (0, 0)),           # transition col-max shift
        ],
        out_specs=[
            pl.BlockSpec((1, tv), lambda i: (0, i)),          # per-proposition loss
            pl.BlockSpec((T, tv), lambda i: (0, i)),          # pred (lane-dense)
        ],
        out_shape=(
            jax.ShapeDtypeStruct((1, Vpad), jnp.float32),
            jax.ShapeDtypeStruct((T, Vpad), jnp.int32),       # PyTorch uses int64
        ),
        compiler_params=pltpu.CompilerParams(
            dimension_semantics=("parallel",),
            vmem_limit_bytes=vmem_limit,
        ),
        cost_estimate=cost,
    )
    per_prop, pred_t = kernel(score_t, log_t, gold2, mask2, gtrans2,
                              etrans_b, start_col, end_col, tshift_col)
    # divide by the REAL number of propositions (not the padded count)
    loss = jnp.sum(per_prop[0, :V]) / V
    pred = pred_t[:, :V].T                                    # (V, T) int32
    return loss, pred


def _crf_nll_ref(score, gold, mask, trans, start, end):
    """Pure-JAX reference of the AllenNLP-style CRF NLL (for verification)."""
    V, T, L = score.shape
    maskf = mask.astype(jnp.float32)
    ar = jnp.arange(V)
    num = start[gold[:, 0]]
    for t in range(T - 1):
        num = num + trans[gold[:, t], gold[:, t + 1]] * maskf[:, t + 1]
        num = num + score[ar, t, gold[:, t]] * maskf[:, t]
    lengths = maskf.sum(-1).astype(jnp.int32)
    last_tags = gold[ar, lengths - 1]
    num = num + end[last_tags] + score[ar, T - 1, last_tags] * maskf[:, -1]
    alpha = start[None, :] + score[:, 0, :]
    for t in range(1, T):
        inner = alpha[:, :, None] + trans[None, :, :] + score[:, t, None, :]
        new_alpha = jax.scipy.special.logsumexp(inner, axis=1)
        alpha = jnp.where(maskf[:, t:t + 1] > 0, new_alpha, alpha)
    log_z = jax.scipy.special.logsumexp(alpha + end[None, :], axis=-1)
    return jnp.sum(log_z - num)


def _check_case(flat_score, flat_log, flat_gold, flat_mask,
                trans, start, end, tag):
    V = flat_score.shape[0]
    loss, pred = crf_loss_pallas(flat_score, flat_log, flat_gold, flat_mask,
                                 trans, start, end)
    loss = jax.block_until_ready(loss)
    pred = jax.block_until_ready(pred)
    ref_loss = _crf_nll_ref(flat_score, flat_gold, flat_mask, trans, start, end) / V
    ref_pred = jnp.argmax(flat_log, axis=-1).astype(jnp.int32)
    assert np.allclose(np.asarray(loss), np.asarray(ref_loss),
                       rtol=1e-4, atol=1e-4), (tag, float(loss), float(ref_loss))
    assert np.array_equal(np.asarray(pred), np.asarray(ref_pred)), tag


if __name__ == "__main__":
    key = jax.random.PRNGKey(0)
    batch_l = 2
    max_orig_l = 8            # T
    num_label = 16            # L (num CRF tags)
    source_l = 10             # raw seq length before [:, :max_orig_l] slice
    orig_l = np.array([8, 6])
    v_l = np.array([2, 1])
    num_v = int(v_l.sum())    # 3 propositions

    k1, k2, k3, k4, k5, k6 = jax.random.split(key, 6)
    # pack['vn_score'] / pack['log_vn'] equivalents: (num_v, source_l, num_label)
    raw_score = jax.random.normal(k1, (num_v, source_l, num_label), jnp.float32)
    raw_log = jax.random.normal(k2, (num_v, source_l, num_label), jnp.float32)
    # shared role labels: (batch_l, max_v, max_orig_l)
    role_label = jax.random.randint(k3, (batch_l, int(v_l.max()), max_orig_l),
                                    0, num_label)

    # CRF parameters (shapes per ConditionalRandomField)
    transitions = 0.1 * jax.random.normal(k4, (num_label, num_label), jnp.float32)
    start_transitions = 0.1 * jax.random.normal(k5, (num_label,), jnp.float32)
    end_transitions = 0.1 * jax.random.normal(k6, (num_label,), jnp.float32)

    # --- glue mirroring CRFLoss.forward flattening (plain numpy) ---
    role_np = np.asarray(role_label)
    flat_gold_list, flat_mask_list = [], []
    for i in range(batch_l):
        gold_i = np.zeros((v_l[i], max_orig_l), dtype=np.int32)
        gold_i[:, :orig_l[i]] = role_np[i, :v_l[i], :orig_l[i]]
        mask_i = np.zeros((v_l[i], max_orig_l), dtype=np.float32)
        mask_i[:, :orig_l[i]] = 1.0
        flat_gold_list.append(gold_i)
        flat_mask_list.append(mask_i)
    flat_gold = jnp.asarray(np.concatenate(flat_gold_list, axis=0))
    flat_mask = jnp.asarray(np.concatenate(flat_mask_list, axis=0))
    flat_score = raw_score[:, :max_orig_l]
    flat_log = raw_log[:, :max_orig_l]

    # case 1: module-shaped small input (single V tile)
    _check_case(flat_score, flat_log, flat_gold, flat_mask,
                transitions, start_transitions, end_transitions, "small")

    # case 2: multi-128 V with lane padding (exercises lane tiling + masking)
    V2, T2, L2 = 130, max_orig_l, num_label
    kk = jax.random.split(jax.random.PRNGKey(1), 4)
    score2 = jax.random.normal(kk[0], (V2, T2, L2), jnp.float32)
    log2 = jax.random.normal(kk[1], (V2, T2, L2), jnp.float32)
    lens2 = jax.random.randint(kk[2], (V2,), 1, T2 + 1)
    mask2 = (jnp.arange(T2)[None, :] < lens2[:, None]).astype(jnp.float32)
    gold2 = jax.random.randint(kk[3], (V2, T2), 0, L2) * mask2.astype(jnp.int32)
    _check_case(score2, log2, gold2, mask2,
                transitions, start_transitions, end_transitions, "tiled")

    # TODO(synk): viterbi_tags decoding (eval branch), CoNLL logging / file I/O,
    # and Python bookkeeping stats have no Pallas equivalent and are omitted.
    print("KERNEL_OK")
</pallas_src>

<mosaic_0001>
module attributes {stable_mosaic.version = 11 : i64} {
  func.func @_crf_kernel(%arg0: i32, %arg1: memref<8x16x128xf32, #tpu.memory_space<vmem>>, %arg2: memref<8x16x128xf32, #tpu.memory_space<vmem>>, %arg3: memref<8x128xi32, #tpu.memory_space<vmem>>, %arg4: memref<8x128xf32, #tpu.memory_space<vmem>>, %arg5: memref<7x128xf32, #tpu.memory_space<vmem>>, %arg6: memref<16x16x128xf32, #tpu.memory_space<vmem>>, %arg7: memref<16x1xf32, #tpu.memory_space<vmem>>, %arg8: memref<16x1xf32, #tpu.memory_space<vmem>>, %arg9: memref<16x1xf32, #tpu.memory_space<vmem>>, %arg10: memref<1x128xf32, #tpu.memory_space<vmem>>, %arg11: memref<8x128xi32, #tpu.memory_space<vmem>>) attributes {dimension_semantics = [#tpu.dimension_semantics<parallel>], iteration_bounds = array<i64: 1>, scalar_prefetch = 0 : i64, scratch_operands = 0 : i64, tpu.core_type = #tpu.core_type<tc>, window_params = [{transform_indices = @transform_0, window_bounds = array<i64: 8, 16, 128>}, {transform_indices = @transform_1, window_bounds = array<i64: 8, 16, 128>}, {transform_indices = @transform_2, window_bounds = array<i64: 8, 128>}, {transform_indices = @transform_3, window_bounds = array<i64: 8, 128>}, {transform_indices = @transform_4, window_bounds = array<i64: 7, 128>}, {pipeline_mode = #tpu.pipeline_mode<synchronous>, transform_indices = @transform_5, window_bounds = array<i64: 16, 16, 128>}, {pipeline_mode = #tpu.pipeline_mode<synchronous>, transform_indices = @transform_6, window_bounds = array<i64: 16, 1>}, {pipeline_mode = #tpu.pipeline_mode<synchronous>, transform_indices = @transform_7, window_bounds = array<i64: 16, 1>}, {pipeline_mode = #tpu.pipeline_mode<synchronous>, transform_indices = @transform_8, window_bounds = array<i64: 16, 1>}, {transform_indices = @transform_9, window_bounds = array<i64: 1, 128>}, {transform_indices = @transform_10, window_bounds = array<i64: 8, 128>}]} {
    %0 = tpu.iota {dimensions = array<i32: 0>} : vector<16x128xi32>
    %c0 = arith.constant 0 : index
    %c0_0 = arith.constant 0 : index
    %1 = vector.load %arg7[%c0, %c0_0] : memref<16x1xf32, #tpu.memory_space<vmem>>, vector<16x1xf32>
    %c0_1 = arith.constant 0 : index
    %c0_2 = arith.constant 0 : index
    %2 = vector.load %arg8[%c0_1, %c0_2] : memref<16x1xf32, #tpu.memory_space<vmem>>, vector<16x1xf32>
    %c0_3 = arith.constant 0 : index
    %c0_4 = arith.constant 0 : index
    %3 = vector.load %arg9[%c0_3, %c0_4] : memref<16x1xf32, #tpu.memory_space<vmem>>, vector<16x1xf32>
    %c0_5 = arith.constant 0 : index
    %c0_6 = arith.constant 0 : index
    %c0_7 = arith.constant 0 : index
    %4 = vector.load %arg2[%c0_5, %c0_6, %c0_7] : memref<8x16x128xf32, #tpu.memory_space<vmem>>, vector<1x16x128xf32>
    %5 = vector.shape_cast %4 : vector<1x16x128xf32> to vector<16x128xf32>
    %cst = arith.constant dense<0xFF800000> : vector<128xf32>
    %6 = vector.multi_reduction <maximumf>, %5, %cst [0] : vector<16x128xf32> to vector<128xf32>
    %7 = vector.shape_cast %6 : vector<128xf32> to vector<1x128xf32>
    %8 = vector.broadcast %7 : vector<1x128xf32> to vector<16x128xf32>
    %9 = arith.cmpf oeq, %5, %8 : vector<16x128xf32>
    %c16_i32 = arith.constant 16 : i32
    %10 = vector.broadcast %c16_i32 : i32 to vector<16x128xi32>
    %11 = arith.select %9, %0, %10 : vector<16x128xi1>, vector<16x128xi32>
    %cst_8 = arith.constant dense<2147483647> : vector<128xi32>
    %12 = vector.multi_reduction <minsi>, %11, %cst_8 [0] : vector<16x128xi32> to vector<128xi32>
    %13 = vector.shape_cast %12 : vector<128xi32> to vector<1x128xi32>
    %c0_9 = arith.constant 0 : index
    %c0_10 = arith.constant 0 : index
    %14 = vector.load %arg11[%c0_9, %c0_10] : memref<8x128xi32, #tpu.memory_space<vmem>>, vector<1x128xi32>
    tpu.vector_store %arg11[%c0_9, %c0_10], %13 {strides = array<i32>} : memref<8x128xi32, #tpu.memory_space<vmem>>, vector<1x128xi32>,
    %c0_11 = arith.constant 0 : index
    %c0_12 = arith.constant 0 : index
    %15 = vector.load %arg3[%c0_11, %c0_12] : memref<8x128xi32, #tpu.memory_space<vmem>>, vector<1x128xi32>
    %16 = vector.broadcast %15 : vector<1x128xi32> to vector<16x128xi32>
    %17 = arith.cmpi eq, %0, %16 : vector<16x128xi32>
    %18 = arith.extui %17 : vector<16x128xi1> to vector<16x128xi32>
    %19 = arith.sitofp %18 : vector<16x128xi32> to vector<16x128xf32>
    %c0_13 = arith.constant 0 : index
    %c0_14 = arith.constant 0 : index
    %c0_15 = arith.constant 0 : index
    %20 = vector.load %arg1[%c0_13, %c0_14, %c0_15] : memref<8x16x128xf32, #tpu.memory_space<vmem>>, vector<1x16x128xf32>
    %21 = vector.shape_cast %20 : vector<1x16x128xf32> to vector<16x128xf32>
    %22 = arith.mulf %21, %19 : vector<16x128xf32>
    %cst_16 = arith.constant dense<0.000000e+00> : vector<128xf32>
    %23 = vector.multi_reduction <add>, %22, %cst_16 [0] : vector<16x128xf32> to vector<128xf32>
    %24 = vector.shape_cast %23 : vector<128xf32> to vector<1x128xf32>
    %25 = vector.broadcast %2 : vector<16x1xf32> to vector<16x128xf32>
    %26 = arith.mulf %19, %25 : vector<16x128xf32>
    %cst_17 = arith.constant dense<0.000000e+00> : vector<128xf32>
    %27 = vector.multi_reduction <add>, %26, %cst_17 [0] : vector<16x128xf32> to vector<128xf32>
    %28 = vector.shape_cast %27 : vector<128xf32> to vector<1x128xf32>
    %c0_18 = arith.constant 0 : index
    %c0_19 = arith.constant 0 : index
    %29 = vector.load %arg4[%c0_18, %c0_19] : memref<8x128xf32, #tpu.memory_space<vmem>>, vector<1x128xf32>
    %30 = vector.broadcast %1 : vector<16x1xf32> to vector<16x128xf32>
    %31 = arith.mulf %19, %30 : vector<16x128xf32>
    %cst_20 = arith.constant dense<0.000000e+00> : vector<128xf32>
    %32 = vector.multi_reduction <add>, %31, %cst_20 [0] : vector<16x128xf32> to vector<128xf32>
    %33 = vector.shape_cast %32 : vector<128xf32> to vector<1x128xf32>
    %34 = arith.mulf %24, %29 : vector<1x128xf32>
    %35 = arith.addf %33, %34 : vector<1x128xf32>
    %c0_21 = arith.constant 0 : index
    %c0_22 = arith.constant 0 : index
    %c0_23 = arith.constant 0 : index
    %36 = vector.load %arg1[%c0_21, %c0_22, %c0_23] : memref<8x16x128xf32, #tpu.memory_space<vmem>>, vector<1x16x128xf32>
    %37 = vector.shape_cast %36 : vector<1x16x128xf32> to vector<16x128xf32>
    %38 = vector.broadcast %1 : vector<16x1xf32> to vector<16x128xf32>
    %39 = arith.addf %38, %37 : vector<16x128xf32>
    %c1 = arith.constant 1 : index
    %c0_24 = arith.constant 0 : index
    %40 = vector.load %arg4[%c1, %c0_24] : memref<8x128xf32, #tpu.memory_space<vmem>>, vector<1x128xf32>
    %c1_25 = arith.constant 1 : index
    %c0_26 = arith.constant 0 : index
    %c0_27 = arith.constant 0 : index
    %41 = vector.load %arg2[%c1_25, %c0_26, %c0_27] : memref<8x16x128xf32, #tpu.memory_space<vmem>>, vector<1x16x128xf32>
    %42 = vector.shape_cast %41 : vector<1x16x128xf32> to vector<16x128xf32>
    %cst_28 = arith.constant dense<0xFF800000> : vector<128xf32>
    %43 = vector.multi_reduction <maximumf>, %42, %cst_28 [0] : vector<16x128xf32> to vector<128xf32>
    %44 = vector.shape_cast %43 : vector<128xf32> to vector<1x128xf32>
    %45 = vector.broadcast %44 : vector<1x128xf32> to vector<16x128xf32>
    %46 = arith.cmpf oeq, %42, %45 : vector<16x128xf32>
    %c16_i32_29 = arith.constant 16 : i32
    %47 = vector.broadcast %c16_i32_29 : i32 to vector<16x128xi32>
    %48 = arith.select %46, %0, %47 : vector<16x128xi1>, vector<16x128xi32>
    %cst_30 = arith.constant dense<2147483647> : vector<128xi32>
    %49 = vector.multi_reduction <minsi>, %48, %cst_30 [0] : vector<16x128xi32> to vector<128xi32>
    %50 = vector.shape_cast %49 : vector<128xi32> to vector<1x128xi32>
    %c1_31 = arith.constant 1 : index
    %c0_32 = arith.constant 0 : index
    %51 = vector.load %arg11[%c1_31, %c0_32] : memref<8x128xi32, #tpu.memory_space<vmem>>, vector<1x128xi32>
    tpu.vector_store %arg11[%c1_31, %c0_32], %50 {strides = array<i32>} : memref<8x128xi32, #tpu.memory_space<vmem>>, vector<1x128xi32>,
    %c1_33 = arith.constant 1 : index
    %c0_34 = arith.constant 0 : index
    %52 = vector.load %arg3[%c1_33, %c0_34] : memref<8x128xi32, #tpu.memory_space<vmem>>, vector<1x128xi32>
    %53 = vector.broadcast %52 : vector<1x128xi32> to vector<16x128xi32>
    %54 = arith.cmpi eq, %0, %53 : vector<16x128xi32>
    %55 = arith.extui %54 : vector<16x128xi1> to vector<16x128xi32>
    %56 = arith.sitofp %55 : vector<16x128xi32> to vector<16x128xf32>
    %c1_35 = arith.constant 1 : index
    %c0_36 = arith.constant 0 : index
    %c0_37 = arith.constant 0 : index
    %57 = vector.load %arg1[%c1_35, %c0_36, %c0_37] : memref<8x16x128xf32, #tpu.memory_space<vmem>>, vector<1x16x128xf32>
    %58 = vector.shape_cast %57 : vector<1x16x128xf32> to vector<16x128xf32>
    %59 = arith.mulf %58, %56 : vector<16x128xf32>
    %cst_38 = arith.constant dense<0.000000e+00> : vector<128xf32>
    %60 = vector.multi_reduction <add>, %59, %cst_38 [0] : vector<16x128xf32> to vector<128xf32>
    %61 = vector.shape_cast %60 : vector<128xf32> to vector<1x128xf32>
    %62 = vector.broadcast %2 : vector<16x1xf32> to vector<16x128xf32>
    %63 = arith.mulf %56, %62 : vector<16x128xf32>
    %cst_39 = arith.constant dense<0.000000e+00> : vector<128xf32>
    %64 = vector.multi_reduction <add>, %63, %cst_39 [0] : vector<16x128xf32> to vector<128xf32>
    %65 = vector.shape_cast %64 : vector<128xf32> to vector<1x128xf32>
    %c0_40 = arith.constant 0 : index
    %c0_41 = arith.constant 0 : index
    %66 = vector.load %arg5[%c0_40, %c0_41] : memref<7x128xf32, #tpu.memory_space<vmem>>, vector<1x128xf32>
    %67 = arith.addf %66, %61 : vector<1x128xf32>
    %68 = arith.mulf %67, %40 : vector<1x128xf32>
    %69 = arith.addf %35, %68 : vector<1x128xf32>
    %70 = arith.mulf %28, %29 : vector<1x128xf32>
    %cst_42 = arith.constant 1.000000e+00 : f32
    %71 = vector.broadcast %cst_42 : f32 to vector<1x128xf32>
    %72 = arith.subf %71, %40 : vector<1x128xf32>
    %73 = arith.mulf %70, %72 : vector<1x128xf32>
    %74 = arith.addf %69, %73 : vector<1x128xf32>
    %cst_43 = arith.constant dense<0xFF800000> : vector<128xf32>
    %75 = vector.multi_reduction <maximumf>, %39, %cst_43 [0] : vector<16x128xf32> to vector<128xf32>
    %76 = vector.shape_cast %75 : vector<128xf32> to vector<1x128xf32>
    %77 = vector.broadcast %76 : vector<1x128xf32> to vector<16x128xf32>
    %78 = arith.subf %39, %77 : vector<16x128xf32>
    %79 = math.exp %78 : vector<16x128xf32>
    %80 = vector.shape_cast %79 : vector<16x128xf32> to vector<1x16x128xf32>
    %c0_44 = arith.constant 0 : index
    %c0_45 = arith.constant 0 : index
    %c0_46 = arith.constant 0 : index
    %81 = vector.load %arg6[%c0_44, %c0_45, %c0_46] : memref<16x16x128xf32, #tpu.memory_space<vmem>>, vector<16x16x128xf32>
    %82 = vector.broadcast %80 : vector<1x16x128xf32> to vector<16x16x128xf32>
    %83 = arith.mulf %82, %81 : vector<16x16x128xf32>
    %cst_47 = arith.constant dense<0.000000e+00> : vector<16x128xf32>
    %84 = vector.multi_reduction <add>, %83, %cst_47 [1] : vector<16x16x128xf32> to vector<16x128xf32>
    %85 = math.log %84 : vector<16x128xf32>
    %c1_48 = arith.constant 1 : index
    %c0_49 = arith.constant 0 : index
    %c0_50 = arith.constant 0 : index
    %86 = vector.load %arg1[%c1_48, %c0_49, %c0_50] : memref<8x16x128xf32, #tpu.memory_space<vmem>>, vector<1x16x128xf32>
    %87 = vector.shape_cast %86 : vector<1x16x128xf32> to vector<16x128xf32>
    %88 = arith.addf %85, %87 : vector<16x128xf32>
    %89 = vector.broadcast %76 : vector<1x128xf32> to vector<16x128xf32>
    %90 = arith.addf %88, %89 : vector<16x128xf32>
    %91 = vector.broadcast %3 : vector<16x1xf32> to vector<16x128xf32>
    %92 = arith.addf %90, %91 : vector<16x128xf32>
    %cst_51 = arith.constant 0.000000e+00 : f32
    %93 = vector.broadcast %cst_51 : f32 to vector<1x128xf32>
    %94 = arith.cmpf ogt, %40, %93 : vector<1x128xf32>
    %95 = vector.shape_cast %94 : vector<1x128xi1> to vector<1x128xi1>
    %96 = vector.broadcast %95 : vector<1x128xi1> to vector<16x128xi1>
    %97 = arith.select %96, %92, %39 : vector<16x128xi1>, vector<16x128xf32>
    %c2 = arith.constant 2 : index
    %c0_52 = arith.constant 0 : index
    %98 = vector.load %arg4[%c2, %c0_52] : memref<8x128xf32, #tpu.memory_space<vmem>>, vector<1x128xf32>
    %c2_53 = arith.constant 2 : index
    %c0_54 = arith.constant 0 : index
    %c0_55 = arith.constant 0 : index
    %99 = vector.load %arg2[%c2_53, %c0_54, %c0_55] : memref<8x16x128xf32, #tpu.memory_space<vmem>>, vector<1x16x128xf32>
    %100 = vector.shape_cast %99 : vector<1x16x128xf32> to vector<16x128xf32>
    %cst_56 = arith.constant dense<0xFF800000> : vector<128xf32>
    %101 = vector.multi_reduction <maximumf>, %100, %cst_56 [0] : vector<16x128xf32> to vector<128xf32>
    %102 = vector.shape_cast %101 : vector<128xf32> to vector<1x128xf32>
    %103 = vector.broadcast %102 : vector<1x128xf32> to vector<16x128xf32>
    %104 = arith.cmpf oeq, %100, %103 : vector<16x128xf32>
    %c16_i32_57 = arith.constant 16 : i32
    %105 = vector.broadcast %c16_i32_57 : i32 to vector<16x128xi32>
    %106 = arith.select %104, %0, %105 : vector<16x128xi1>, vector<16x128xi32>
    %cst_58 = arith.constant dense<2147483647> : vector<128xi32>
    %107 = vector.multi_reduction <minsi>, %106, %cst_58 [0] : vector<16x128xi32> to vector<128xi32>
    %108 = vector.shape_cast %107 : vector<128xi32> to vector<1x128xi32>
    %c2_59 = arith.constant 2 : index
    %c0_60 = arith.constant 0 : index
    %109 = vector.load %arg11[%c2_59, %c0_60] : memref<8x128xi32, #tpu.memory_space<vmem>>, vector<1x128xi32>
    tpu.vector_store %arg11[%c2_59, %c0_60], %108 {strides = array<i32>} : memref<8x128xi32, #tpu.memory_space<vmem>>, vector<1x128xi32>,
    %c2_61 = arith.constant 2 : index
    %c0_62 = arith.constant 0 : index
    %110 = vector.load %arg3[%c2_61, %c0_62] : memref<8x128xi32, #tpu.memory_space<vmem>>, vector<1x128xi32>
    %111 = vector.broadcast %110 : vector<1x128xi32> to vector<16x128xi32>
    %112 = arith.cmpi eq, %0, %111 : vector<16x128xi32>
    %113 = arith.extui %112 : vector<16x128xi1> to vector<16x128xi32>
    %114 = arith.sitofp %113 : vector<16x128xi32> to vector<16x128xf32>
    %c2_63 = arith.constant 2 : index
    %c0_64 = arith.constant 0 : index
    %c0_65 = arith.constant 0 : index
    %115 = vector.load %arg1[%c2_63, %c0_64, %c0_65] : memref<8x16x128xf32, #tpu.memory_space<vmem>>, vector<1x16x128xf32>
    %116 = vector.shape_cast %115 : vector<1x16x128xf32> to vector<16x128xf32>
    %117 = arith.mulf %116, %114 : vector<16x128xf32>
    %cst_66 = arith.constant dense<0.000000e+00> : vector<128xf32>
    %118 = vector.multi_reduction <add>, %117, %cst_66 [0] : vector<16x128xf32> to vector<128xf32>
    %119 = vector.shape_cast %118 : vector<128xf32> to vector<1x128xf32>
    %120 = vector.broadcast %2 : vector<16x1xf32> to vector<16x128xf32>
    %121 = arith.mulf %114, %120 : vector<16x128xf32>
    %cst_67 = arith.constant dense<0.000000e+00> : vector<128xf32>
    %122 = vector.multi_reduction <add>, %121, %cst_67 [0] : vector<16x128xf32> to vector<128xf32>
    %123 = vector.shape_cast %122 : vector<128xf32> to vector<1x128xf32>
    %c1_68 = arith.constant 1 : index
    %c0_69 = arith.constant 0 : index
    %124 = vector.load %arg5[%c1_68, %c0_69] : memref<7x128xf32, #tpu.memory_space<vmem>>, vector<1x128xf32>
    %125 = arith.addf %124, %119 : vector<1x128xf32>
    %126 = arith.mulf %125, %98 : vector<1x128xf32>
    %127 = arith.addf %74, %126 : vector<1x128xf32>
    %128 = arith.mulf %65, %40 : vector<1x128xf32>
    %cst_70 = arith.constant 1.000000e+00 : f32
    %129 = vector.broadcast %cst_70 : f32 to vector<1x128xf32>
    %130 = arith.subf %129, %98 : vector<1x128xf32>
    %131 = arith.mulf %128, %130 : vector<1x128xf32>
    %132 = arith.addf %127, %131 : vector<1x128xf32>
    %cst_71 = arith.constant dense<0xFF800000> : vector<128xf32>
    %133 = vector.multi_reduction <maximumf>, %97, %cst_71 [0] : vector<16x128xf32> to vector<128xf32>
    %134 = vector.shape_cast %133 : vector<128xf32> to vector<1x128xf32>
    %135 = vector.broadcast %134 : vector<1x128xf32> to vector<16x128xf32>
    %136 = arith.subf %97, %135 : vector<16x128xf32>
    %137 = math.exp %136 : vector<16x128xf32>
    %138 = vector.shape_cast %137 : vector<16x128xf32> to vector<1x16x128xf32>
    %c0_72 = arith.constant 0 : index
    %c0_73 = arith.constant 0 : index
    %c0_74 = arith.constant 0 : index
    %139 = vector.load %arg6[%c0_72, %c0_73, %c0_74] : memref<16x16x128xf32, #tpu.memory_space<vmem>>, vector<16x16x128xf32>
    %140 = vector.broadcast %138 : vector<1x16x128xf32> to vector<16x16x128xf32>
    %141 = arith.mulf %140, %139 : vector<16x16x128xf32>
    %cst_75 = arith.constant dense<0.000000e+00> : vector<16x128xf32>
    %142 = vector.multi_reduction <add>, %141, %cst_75 [1] : vector<16x16x128xf32> to vector<16x128xf32>
    %143 = math.log %142 : vector<16x128xf32>
    %c2_76 = arith.constant 2 : index
    %c0_77 = arith.constant 0 : index
    %c0_78 = arith.constant 0 : index
    %144 = vector.load %arg1[%c2_76, %c0_77, %c0_78] : memref<8x16x128xf32, #tpu.memory_space<vmem>>, vector<1x16x128xf32>
    %145 = vector.shape_cast %144 : vector<1x16x128xf32> to vector<16x128xf32>
    %146 = arith.addf %143, %145 : vector<16x128xf32>
    %147 = vector.broadcast %134 : vector<1x128xf32> to vector<16x128xf32>
    %148 = arith.addf %146, %147 : vector<16x128xf32>
    %149 = vector.broadcast %3 : vector<16x1xf32> to vector<16x128xf32>
    %150 = arith.addf %148, %149 : vector<16x128xf32>
    %cst_79 = arith.constant 0.000000e+00 : f32
    %151 = vector.broadcast %cst_79 : f32 to vector<1x128xf32>
    %152 = arith.cmpf ogt, %98, %151 : vector<1x128xf32>
    %153 = vector.shape_cast %152 : vector<1x128xi1> to vector<1x128xi1>
    %154 = vector.broadcast %153 : vector<1x128xi1> to vector<16x128xi1>
    %155 = arith.select %154, %150, %97 : vector<16x128xi1>, vector<16x128xf32>
    %c3 = arith.constant 3 : index
    %c0_80 = arith.constant 0 : index
    %156 = vector.load %arg4[%c3, %c0_80] : memref<8x128xf32, #tpu.memory_space<vmem>>, vector<1x128xf32>
    %c3_81 = arith.constant 3 : index
    %c0_82 = arith.constant 0 : index
    %c0_83 = arith.constant 0 : index
    %157 = vector.load %arg2[%c3_81, %c0_82, %c0_83] : memref<8x16x128xf32, #tpu.memory_space<vmem>>, vector<1x16x128xf32>
    %158 = vector.shape_cast %157 : vector<1x16x128xf32> to vector<16x128xf32>
    %cst_84 = arith.constant dense<0xFF800000> : vector<128xf32>
    %159 = vector.multi_reduction <maximumf>, %158, %cst_84 [0] : vector<16x128xf32> to vector<128xf32>
    %160 = vector.shape_cast %159 : vector<128xf32> to vector<1x128xf32>
    %161 = vector.broadcast %160 : vector<1x128xf32> to vector<16x128xf32>
    %162 = arith.cmpf oeq, %158, %161 : vector<16x128xf32>
    %c16_i32_85 = arith.constant 16 : i32
    %163 = vector.broadcast %c16_i32_85 : i32 to vector<16x128xi32>
    %164 = arith.select %162, %0, %163 : vector<16x128xi1>, vector<16x128xi32>
    %cst_86 = arith.constant dense<2147483647> : vector<128xi32>
    %165 = vector.multi_reduction <minsi>, %164, %cst_86 [0] : vector<16x128xi32> to vector<128xi32>
    %166 = vector.shape_cast %165 : vector<128xi32> to vector<1x128xi32>
    %c3_87 = arith.constant 3 : index
    %c0_88 = arith.constant 0 : index
    %167 = vector.load %arg11[%c3_87, %c0_88] : memref<8x128xi32, #tpu.memory_space<vmem>>, vector<1x128xi32>
    tpu.vector_store %arg11[%c3_87, %c0_88], %166 {strides = array<i32>} : memref<8x128xi32, #tpu.memory_space<vmem>>, vector<1x128xi32>,
    %c3_89 = arith.constant 3 : index
    %c0_90 = arith.constant 0 : index
    %168 = vector.load %arg3[%c3_89, %c0_90] : memref<8x128xi32, #tpu.memory_space<vmem>>, vector<1x128xi32>
    %169 = vector.broadcast %168 : vector<1x128xi32> to vector<16x128xi32>
    %170 = arith.cmpi eq, %0, %169 : vector<16x128xi32>
    %171 = arith.extui %170 : vector<16x128xi1> to vector<16x128xi32>
    %172 = arith.sitofp %171 : vector<16x128xi32> to vector<16x128xf32>
    %c3_91 = arith.constant 3 : index
    %c0_92 = arith.constant 0 : index
    %c0_93 = arith.constant 0 : index
    %173 = vector.load %arg1[%c3_91, %c0_92, %c0_93] : memref<8x16x128xf32, #tpu.memory_space<vmem>>, vector<1x16x128xf32>
    %174 = vector.shape_cast %173 : vector<1x16x128xf32> to vector<16x128xf32>
    %175 = arith.mulf %174, %172 : vector<16x128xf32>
    %cst_94 = arith.constant dense<0.000000e+00> : vector<128xf32>
    %176 = vector.multi_reduction <add>, %175, %cst_94 [0] : vector<16x128xf32> to vector<128xf32>
    %177 = vector.shape_cast %176 : vector<128xf32> to vector<1x128xf32>
    %178 = vector.broadcast %2 : vector<16x1xf32> to vector<16x128xf32>
    %179 = arith.mulf %172, %178 : vector<16x128xf32>
    %cst_95 = arith.constant dense<0.000000e+00> : vector<128xf32>
    %180 = vector.multi_reduction <add>, %179, %cst_95 [0] : vector<16x128xf32> to vector<128xf32>
    %181 = vector.shape_cast %180 : vector<128xf32> to vector<1x128xf32>
    %c2_96 = arith.constant 2 : index
    %c0_97 = arith.constant 0 : index
    %182 = vector.load %arg5[%c2_96, %c0_97] : memref<7x128xf32, #tpu.memory_space<vmem>>, vector<1x128xf32>
    %183 = arith.addf %182, %177 : vector<1x128xf32>
    %184 = arith.mulf %183, %156 : vector<1x128xf32>
    %185 = arith.addf %132, %184 : vector<1x128xf32>
    %186 = arith.mulf %123, %98 : vector<1x128xf32>
    %cst_98 = arith.constant 1.000000e+00 : f32
    %187 = vector.broadcast %cst_98 : f32 to vector<1x128xf32>
    %188 = arith.subf %187, %156 : vector<1x128xf32>
    %189 = arith.mulf %186, %188 : vector<1x128xf32>
    %190 = arith.addf %185, %189 : vector<1x128xf32>
    %cst_99 = arith.constant dense<0xFF800000> : vector<128xf32>
    %191 = vector.multi_reduction <maximumf>, %155, %cst_99 [0] : vector<16x128xf32> to vector<128xf32>
    %192 = vector.shape_cast %191 : vector<128xf32> to vector<1x128xf32>
    %193 = vector.broadcast %192 : vector<1x128xf32> to vector<16x128xf32>
    %194 = arith.subf %155, %193 : vector<16x128xf32>
    %195 = math.exp %194 : vector<16x128xf32>
    %196 = vector.shape_cast %195 : vector<16x128xf32> to vector<1x16x128xf32>
    %c0_100 = arith.constant 0 : index
    %c0_101 = arith.constant 0 : index
    %c0_102 = arith.constant 0 : index
    %197 = vector.load %arg6[%c0_100, %c0_101, %c0_102] : memref<16x16x128xf32, #tpu.memory_space<vmem>>, vector<16x16x128xf32>
    %198 = vector.broadcast %196 : vector<1x16x128xf32> to vector<16x16x128xf32>
    %199 = arith.mulf %198, %197 : vector<16x16x128xf32>
    %cst_103 = arith.constant dense<0.000000e+00> : vector<16x128xf32>
    %200 = vector.multi_reduction <add>, %199, %cst_103 [1] : vector<16x16x128xf32> to vector<16x128xf32>
    %201 = math.log %200 : vector<16x128xf32>
    %c3_104 = arith.constant 3 : index
    %c0_105 = arith.constant 0 : index
    %c0_106 = arith.constant 0 : index
    %202 = vector.load %arg1[%c3_104, %c0_105, %c0_106] : memref<8x16x128xf32, #tpu.memory_space<vmem>>, vector<1x16x128xf32>
    %203 = vector.shape_cast %202 : vector<1x16x128xf32> to vector<16x128xf32>
    %204 = arith.addf %201, %203 : vector<16x128xf32>
    %205 = vector.broadcast %192 : vector<1x128xf32> to vector<16x128xf32>
    %206 = arith.addf %204, %205 : vector<16x128xf32>
    %207 = vector.broadcast %3 : vector<16x1xf32> to vector<16x128xf32>
    %208 = arith.addf %206, %207 : vector<16x128xf32>
    %cst_107 = arith.constant 0.000000e+00 : f32
    %209 = vector.broadcast %cst_107 : f32 to vector<1x128xf32>
    %210 = arith.cmpf ogt, %156, %209 : vector<1x128xf32>
    %211 = vector.shape_cast %210 : vector<1x128xi1> to vector<1x128xi1>
    %212 = vector.broadcast %211 : vector<1x128xi1> to vector<16x128xi1>
    %213 = arith.select %212, %208, %155 : vector<16x128xi1>, vector<16x128xf32>
    %c4 = arith.constant 4 : index
    %c0_108 = arith.constant 0 : index
    %214 = vector.load %arg4[%c4, %c0_108] : memref<8x128xf32, #tpu.memory_space<vmem>>, vector<1x128xf32>
    %c4_109 = arith.constant 4 : index
    %c0_110 = arith.constant 0 : index
    %c0_111 = arith.constant 0 : index
    %215 = vector.load %arg2[%c4_109, %c0_110, %c0_111] : memref<8x16x128xf32, #tpu.memory_space<vmem>>, vector<1x16x128xf32>
    %216 = vector.shape_cast %215 : vector<1x16x128xf32> to vector<16x128xf32>
    %cst_112 = arith.constant dense<0xFF800000> : vector<128xf32>
    %217 = vector.multi_reduction <maximumf>, %216, %cst_112 [0] : vector<16x128xf32> to vector<128xf32>
    %218 = vector.shape_cast %217 : vector<128xf32> to vector<1x128xf32>
    %219 = vector.broadcast %218 : vector<1x128xf32> to vector<16x128xf32>
    %220 = arith.cmpf oeq, %216, %219 : vector<16x128xf32>
    %c16_i32_113 = arith.constant 16 : i32
    %221 = vector.broadcast %c16_i32_113 : i32 to vector<16x128xi32>
    %222 = arith.select %220, %0, %221 : vector<16x128xi1>, vector<16x128xi32>
    %cst_114 = arith.constant dense<2147483647> : vector<128xi32>
    %223 = vector.multi_reduction <minsi>, %222, %cst_114 [0] : vector<16x128xi32> to vector<128xi32>
    %224 = vector.shape_cast %223 : vector<128xi32> to vector<1x128xi32>
    %c4_115 = arith.constant 4 : index
    %c0_116 = arith.constant 0 : index
    %225 = vector.load %arg11[%c4_115, %c0_116] : memref<8x128xi32, #tpu.memory_space<vmem>>, vector<1x128xi32>
    tpu.vector_store %arg11[%c4_115, %c0_116], %224 {strides = array<i32>} : memref<8x128xi32, #tpu.memory_space<vmem>>, vector<1x128xi32>,
    %c4_117 = arith.constant 4 : index
    %c0_118 = arith.constant 0 : index
    %226 = vector.load %arg3[%c4_117, %c0_118] : memref<8x128xi32, #tpu.memory_space<vmem>>, vector<1x128xi32>
    %227 = vector.broadcast %226 : vector<1x128xi32> to vector<16x128xi32>
    %228 = arith.cmpi eq, %0, %227 : vector<16x128xi32>
    %229 = arith.extui %228 : vector<16x128xi1> to vector<16x128xi32>
    %230 = arith.sitofp %229 : vector<16x128xi32> to vector<16x128xf32>
    %c4_119 = arith.constant 4 : index
    %c0_120 = arith.constant 0 : index
    %c0_121 = arith.constant 0 : index
    %231 = vector.load %arg1[%c4_119, %c0_120, %c0_121] : memref<8x16x128xf32, #tpu.memory_space<vmem>>, vector<1x16x128xf32>
    %232 = vector.shape_cast %231 : vector<1x16x128xf32> to vector<16x128xf32>
    %233 = arith.mulf %232, %230 : vector<16x128xf32>
    %cst_122 = arith.constant dense<0.000000e+00> : vector<128xf32>
    %234 = vector.multi_reduction <add>, %233, %cst_122 [0] : vector<16x128xf32> to vector<128xf32>
    %235 = vector.shape_cast %234 : vector<128xf32> to vector<1x128xf32>
    %236 = vector.broadcast %2 : vector<16x1xf32> to vector<16x128xf32>
    %237 = arith.mulf %230, %236 : vector<16x128xf32>
    %cst_123 = arith.constant dense<0.000000e+00> : vector<128xf32>
    %238 = vector.multi_reduction <add>, %237, %cst_123 [0] : vector<16x128xf32> to vector<128xf32>
    %239 = vector.shape_cast %238 : vector<128xf32> to vector<1x128xf32>
    %c3_124 = arith.constant 3 : index
    %c0_125 = arith.constant 0 : index
    %240 = vector.load %arg5[%c3_124, %c0_125] : memref<7x128xf32, #tpu.memory_space<vmem>>, vector<1x128xf32>
    %241 = arith.addf %240, %235 : vector<1x128xf32>
    %242 = arith.mulf %241, %214 : vector<1x128xf32>
    %243 = arith.addf %190, %242 : vector<1x128xf32>
    %244 = arith.mulf %181, %156 : vector<1x128xf32>
    %cst_126 = arith.constant 1.000000e+00 : f32
    %245 = vector.broadcast %cst_126 : f32 to vector<1x128xf32>
    %246 = arith.subf %245, %214 : vector<1x128xf32>
    %247 = arith.mulf %244, %246 : vector<1x128xf32>
    %248 = arith.addf %243, %247 : vector<1x128xf32>
    %cst_127 = arith.constant dense<0xFF800000> : vector<128xf32>
    %249 = vector.multi_reduction <maximumf>, %213, %cst_127 [0] : vector<16x128xf32> to vector<128xf32>
    %250 = vector.shape_cast %249 : vector<128xf32> to vector<1x128xf32>
    %251 = vector.broadcast %250 : vector<1x128xf32> to vector<16x128xf32>
    %252 = arith.subf %213, %251 : vector<16x128xf32>
    %253 = math.exp %252 : vector<16x128xf32>
    %254 = vector.shape_cast %253 : vector<16x128xf32> to vector<1x16x128xf32>
    %c0_128 = arith.constant 0 : index
    %c0_129 = arith.constant 0 : index
    %c0_130 = arith.constant 0 : index
    %255 = vector.load %arg6[%c0_128, %c0_129, %c0_130] : memref<16x16x128xf32, #tpu.memory_space<vmem>>, vector<16x16x128xf32>
    %256 = vector.broadcast %254 : vector<1x16x128xf32> to vector<16x16x128xf32>
    %257 = arith.mulf %256, %255 : vector<16x16x128xf32>
    %cst_131 = arith.constant dense<0.000000e+00> : vector<16x128xf32>
    %258 = vector.multi_reduction <add>, %257, %cst_131 [1] : vector<16x16x128xf32> to vector<16x128xf32>
    %259 = math.log %258 : vector<16x128xf32>
    %c4_132 = arith.constant 4 : index
    %c0_133 = arith.constant 0 : index
    %c0_134 = arith.constant 0 : index
    %260 = vector.load %arg1[%c4_132, %c0_133, %c0_134] : memref<8x16x128xf32, #tpu.memory_space<vmem>>, vector<1x16x128xf32>
    %261 = vector.shape_cast %260 : vector<1x16x128xf32> to vector<16x128xf32>
    %262 = arith.addf %259, %261 : vector<16x128xf32>
    %263 = vector.broadcast %250 : vector<1x128xf32> to vector<16x128xf32>
    %264 = arith.addf %262, %263 : vector<16x128xf32>
    %265 = vector.broadcast %3 : vector<16x1xf32> to vector<16x128xf32>
    %266 = arith.addf %264, %265 : vector<16x128xf32>
    %cst_135 = arith.constant 0.000000e+00 : f32
    %267 = vector.broadcast %cst_135 : f32 to vector<1x128xf32>
    %268 = arith.cmpf ogt, %214, %267 : vector<1x128xf32>
    %269 = vector.shape_cast %268 : vector<1x128xi1> to vector<1x128xi1>
    %270 = vector.broadcast %269 : vector<1x128xi1> to vector<16x128xi1>
    %271 = arith.select %270, %266, %213 : vector<16x128xi1>, vector<16x128xf32>
    %c5 = arith.constant 5 : index
    %c0_136 = arith.constant 0 : index
    %272 = vector.load %arg4[%c5, %c0_136] : memref<8x128xf32, #tpu.memory_space<vmem>>, vector<1x128xf32>
    %c5_137 = arith.constant 5 : index
    %c0_138 = arith.constant 0 : index
    %c0_139 = arith.constant 0 : index
    %273 = vector.load %arg2[%c5_137, %c0_138, %c0_139] : memref<8x16x128xf32, #tpu.memory_space<vmem>>, vector<1x16x128xf32>
    %274 = vector.shape_cast %273 : vector<1x16x128xf32> to vector<16x128xf32>
    %cst_140 = arith.constant dense<0xFF800000> : vector<128xf32>
    %275 = vector.multi_reduction <maximumf>, %274, %cst_140 [0] : vector<16x128xf32> to vector<128xf32>
    %276 = vector.shape_cast %275 : vector<128xf32> to vector<1x128xf32>
    %277 = vector.broadcast %276 : vector<1x128xf32> to vector<16x128xf32>
    %278 = arith.cmpf oeq, %274, %277 : vector<16x128xf32>
    %c16_i32_141 = arith.constant 16 : i32
    %279 = vector.broadcast %c16_i32_141 : i32 to vector<16x128xi32>
    %280 = arith.select %278, %0, %279 : vector<16x128xi1>, vector<16x128xi32>
    %cst_142 = arith.constant dense<2147483647> : vector<128xi32>
    %281 = vector.multi_reduction <minsi>, %280, %cst_142 [0] : vector<16x128xi32> to vector<128xi32>
    %282 = vector.shape_cast %281 : vector<128xi32> to vector<1x128xi32>
    %c5_143 = arith.constant 5 : index
    %c0_144 = arith.constant 0 : index
    %283 = vector.load %arg11[%c5_143, %c0_144] : memref<8x128xi32, #tpu.memory_space<vmem>>, vector<1x128xi32>
    tpu.vector_store %arg11[%c5_143, %c0_144], %282 {strides = array<i32>} : memref<8x128xi32, #tpu.memory_space<vmem>>, vector<1x128xi32>,
    %c5_145 = arith.constant 5 : index
    %c0_146 = arith.constant 0 : index
    %284 = vector.load %arg3[%c5_145, %c0_146] : memref<8x128xi32, #tpu.memory_space<vmem>>, vector<1x128xi32>
    %285 = vector.broadcast %284 : vector<1x128xi32> to vector<16x128xi32>
    %286 = arith.cmpi eq, %0, %285 : vector<16x128xi32>
    %287 = arith.extui %286 : vector<16x128xi1> to vector<16x128xi32>
    %288 = arith.sitofp %287 : vector<16x128xi32> to vector<16x128xf32>
    %c5_147 = arith.constant 5 : index
    %c0_148 = arith.constant 0 : index
    %c0_149 = arith.constant 0 : index
    %289 = vector.load %arg1[%c5_147, %c0_148, %c0_149] : memref<8x16x128xf32, #tpu.memory_space<vmem>>, vector<1x16x128xf32>
    %290 = vector.shape_cast %289 : vector<1x16x128xf32> to vector<16x128xf32>
    %291 = arith.mulf %290, %288 : vector<16x128xf32>
    %cst_150 = arith.constant dense<0.000000e+00> : vector<128xf32>
    %292 = vector.multi_reduction <add>, %291, %cst_150 [0] : vector<16x128xf32> to vector<128xf32>
    %293 = vector.shape_cast %292 : vector<128xf32> to vector<1x128xf32>
    %294 = vector.broadcast %2 : vector<16x1xf32> to vector<16x128xf32>
    %295 = arith.mulf %288, %294 : vector<16x128xf32>
    %cst_151 = arith.constant dense<0.000000e+00> : vector<128xf32>
    %296 = vector.multi_reduction <add>, %295, %cst_151 [0] : vector<16x128xf32> to vector<128xf32>
    %297 = vector.shape_cast %296 : vector<128xf32> to vector<1x128xf32>
    %c4_152 = arith.constant 4 : index
    %c0_153 = arith.constant 0 : index
    %298 = vector.load %arg5[%c4_152, %c0_153] : memref<7x128xf32, #tpu.memory_space<vmem>>, vector<1x128xf32>
    %299 = arith.addf %298, %293 : vector<1x128xf32>
    %300 = arith.mulf %299, %272 : vector<1x128xf32>
    %301 = arith.addf %248, %300 : vector<1x128xf32>
    %302 = arith.mulf %239, %214 : vector<1x128xf32>
    %cst_154 = arith.constant 1.000000e+00 : f32
    %303 = vector.broadcast %cst_154 : f32 to vector<1x128xf32>
    %304 = arith.subf %303, %272 : vector<1x128xf32>
    %305 = arith.mulf %302, %304 : vector<1x128xf32>
    %306 = arith.addf %301, %305 : vector<1x128xf32>
    %cst_155 = arith.constant dense<0xFF800000> : vector<128xf32>
    %307 = vector.multi_reduction <maximumf>, %271, %cst_155 [0] : vector<16x128xf32> to vector<128xf32>
    %308 = vector.shape_cast %307 : vector<128xf32> to vector<1x128xf32>
    %309 = vector.broadcast %308 : vector<1x128xf32> to vector<16x128xf32>
    %310 = arith.subf %271, %309 : vector<16x128xf32>
    %311 = math.exp %310 : vector<16x128xf32>
    %312 = vector.shape_cast %311 : vector<16x128xf32> to vector<1x16x128xf32>
    %c0_156 = arith.constant 0 : index
    %c0_157 = arith.constant 0 : index
    %c0_158 = arith.constant 0 : index
    %313 = vector.load %arg6[%c0_156, %c0_157, %c0_158] : memref<16x16x128xf32, #tpu.memory_space<vmem>>, vector<16x16x128xf32>
    %314 = vector.broadcast %312 : vector<1x16x128xf32> to vector<16x16x128xf32>
    %315 = arith.mulf %314, %313 : vector<16x16x128xf32>
    %cst_159 = arith.constant dense<0.000000e+00> : vector<16x128xf32>
    %316 = vector.multi_reduction <add>, %315, %cst_159 [1] : vector<16x16x128xf32> to vector<16x128xf32>
    %317 = math.log %316 : vector<16x128xf32>
    %c5_160 = arith.constant 5 : index
    %c0_161 = arith.constant 0 : index
    %c0_162 = arith.constant 0 : index
    %318 = vector.load %arg1[%c5_160, %c0_161, %c0_162] : memref<8x16x128xf32, #tpu.memory_space<vmem>>, vector<1x16x128xf32>
    %319 = vector.shape_cast %318 : vector<1x16x128xf32> to vector<16x128xf32>
    %320 = arith.addf %317, %319 : vector<16x128xf32>
    %321 = vector.broadcast %308 : vector<1x128xf32> to vector<16x128xf32>
    %322 = arith.addf %320, %321 : vector<16x128xf32>
    %323 = vector.broadcast %3 : vector<16x1xf32> to vector<16x128xf32>
    %324 = arith.addf %322, %323 : vector<16x128xf32>
    %cst_163 = arith.constant 0.000000e+00 : f32
    %325 = vector.broadcast %cst_163 : f32 to vector<1x128xf32>
    %326 = arith.cmpf ogt, %272, %325 : vector<1x128xf32>
    %327 = vector.shape_cast %326 : vector<1x128xi1> to vector<1x128xi1>
    %328 = vector.broadcast %327 : vector<1x128xi1> to vector<16x128xi1>
    %329 = arith.select %328, %324, %271 : vector<16x128xi1>, vector<16x128xf32>
    %c6 = arith.constant 6 : index
    %c0_164 = arith.constant 0 : index
    %330 = vector.load %arg4[%c6, %c0_164] : memref<8x128xf32, #tpu.memory_space<vmem>>, vector<1x128xf32>
    %c6_165 = arith.constant 6 : index
    %c0_166 = arith.constant 0 : index
    %c0_167 = arith.constant 0 : index
    %331 = vector.load %arg2[%c6_165, %c0_166, %c0_167] : memref<8x16x128xf32, #tpu.memory_space<vmem>>, vector<1x16x128xf32>
    %332 = vector.shape_cast %331 : vector<1x16x128xf32> to vector<16x128xf32>
    %cst_168 = arith.constant dense<0xFF800000> : vector<128xf32>
    %333 = vector.multi_reduction <maximumf>, %332, %cst_168 [0] : vector<16x128xf32> to vector<128xf32>
    %334 = vector.shape_cast %333 : vector<128xf32> to vector<1x128xf32>
    %335 = vector.broadcast %334 : vector<1x128xf32> to vector<16x128xf32>
    %336 = arith.cmpf oeq, %332, %335 : vector<16x128xf32>
    %c16_i32_169 = arith.constant 16 : i32
    %337 = vector.broadcast %c16_i32_169 : i32 to vector<16x128xi32>
    %338 = arith.select %336, %0, %337 : vector<16x128xi1>, vector<16x128xi32>
    %cst_170 = arith.constant dense<2147483647> : vector<128xi32>
    %339 = vector.multi_reduction <minsi>, %338, %cst_170 [0] : vector<16x128xi32> to vector<128xi32>
    %340 = vector.shape_cast %339 : vector<128xi32> to vector<1x128xi32>
    %c6_171 = arith.constant 6 : index
    %c0_172 = arith.constant 0 : index
    %341 = vector.load %arg11[%c6_171, %c0_172] : memref<8x128xi32, #tpu.memory_space<vmem>>, vector<1x128xi32>
    tpu.vector_store %arg11[%c6_171, %c0_172], %340 {strides = array<i32>} : memref<8x128xi32, #tpu.memory_space<vmem>>, vector<1x128xi32>,
    %c6_173 = arith.constant 6 : index
    %c0_174 = arith.constant 0 : index
    %342 = vector.load %arg3[%c6_173, %c0_174] : memref<8x128xi32, #tpu.memory_space<vmem>>, vector<1x128xi32>
    %343 = vector.broadcast %342 : vector<1x128xi32> to vector<16x128xi32>
    %344 = arith.cmpi eq, %0, %343 : vector<16x128xi32>
    %345 = arith.extui %344 : vector<16x128xi1> to vector<16x128xi32>
    %346 = arith.sitofp %345 : vector<16x128xi32> to vector<16x128xf32>
    %c6_175 = arith.constant 6 : index
    %c0_176 = arith.constant 0 : index
    %c0_177 = arith.constant 0 : index
    %347 = vector.load %arg1[%c6_175, %c0_176, %c0_177] : memref<8x16x128xf32, #tpu.memory_space<vmem>>, vector<1x16x128xf32>
    %348 = vector.shape_cast %347 : vector<1x16x128xf32> to vector<16x128xf32>
    %349 = arith.mulf %348, %346 : vector<16x128xf32>
    %cst_178 = arith.constant dense<0.000000e+00> : vector<128xf32>
    %350 = vector.multi_reduction <add>, %349, %cst_178 [0] : vector<16x128xf32> to vector<128xf32>
    %351 = vector.shape_cast %350 : vector<128xf32> to vector<1x128xf32>
    %352 = vector.broadcast %2 : vector<16x1xf32> to vector<16x128xf32>
    %353 = arith.mulf %346, %352 : vector<16x128xf32>
    %cst_179 = arith.constant dense<0.000000e+00> : vector<128xf32>
    %354 = vector.multi_reduction <add>, %353, %cst_179 [0] : vector<16x128xf32> to vector<128xf32>
    %355 = vector.shape_cast %354 : vector<128xf32> to vector<1x128xf32>
    %c5_180 = arith.constant 5 : index
    %c0_181 = arith.constant 0 : index
    %356 = vector.load %arg5[%c5_180, %c0_181] : memref<7x128xf32, #tpu.memory_space<vmem>>, vector<1x128xf32>
    %357 = arith.addf %356, %351 : vector<1x128xf32>
    %358 = arith.mulf %357, %330 : vector<1x128xf32>
    %359 = arith.addf %306, %358 : vector<1x128xf32>
    %360 = arith.mulf %297, %272 : vector<1x128xf32>
    %cst_182 = arith.constant 1.000000e+00 : f32
    %361 = vector.broadcast %cst_182 : f32 to vector<1x128xf32>
    %362 = arith.subf %361, %330 : vector<1x128xf32>
    %363 = arith.mulf %360, %362 : vector<1x128xf32>
    %364 = arith.addf %359, %363 : vector<1x128xf32>
    %cst_183 = arith.constant dense<0xFF800000> : vector<128xf32>
    %365 = vector.multi_reduction <maximumf>, %329, %cst_183 [0] : vector<16x128xf32> to vector<128xf32>
    %366 = vector.shape_cast %365 : vector<128xf32> to vector<1x128xf32>
    %367 = vector.broadcast %366 : vector<1x128xf32> to vector<16x128xf32>
    %368 = arith.subf %329, %367 : vector<16x128xf32>
    %369 = math.exp %368 : vector<16x128xf32>
    %370 = vector.shape_cast %369 : vector<16x128xf32> to vector<1x16x128xf32>
    %c0_184 = arith.constant 0 : index
    %c0_185 = arith.constant 0 : index
    %c0_186 = arith.constant 0 : index
    %371 = vector.load %arg6[%c0_184, %c0_185, %c0_186] : memref<16x16x128xf32, #tpu.memory_space<vmem>>, vector<16x16x128xf32>
    %372 = vector.broadcast %370 : vector<1x16x128xf32> to vector<16x16x128xf32>
    %373 = arith.mulf %372, %371 : vector<16x16x128xf32>
    %cst_187 = arith.constant dense<0.000000e+00> : vector<16x128xf32>
    %374 = vector.multi_reduction <add>, %373, %cst_187 [1] : vector<16x16x128xf32> to vector<16x128xf32>
    %375 = math.log %374 : vector<16x128xf32>
    %c6_188 = arith.constant 6 : index
    %c0_189 = arith.constant 0 : index
    %c0_190 = arith.constant 0 : index
    %376 = vector.load %arg1[%c6_188, %c0_189, %c0_190] : memref<8x16x128xf32, #tpu.memory_space<vmem>>, vector<1x16x128xf32>
    %377 = vector.shape_cast %376 : vector<1x16x128xf32> to vector<16x128xf32>
    %378 = arith.addf %375, %377 : vector<16x128xf32>
    %379 = vector.broadcast %366 : vector<1x128xf32> to vector<16x128xf32>
    %380 = arith.addf %378, %379 : vector<16x128xf32>
    %381 = vector.broadcast %3 : vector<16x1xf32> to vector<16x128xf32>
    %382 = arith.addf %380, %381 : vector<16x128xf32>
    %cst_191 = arith.constant 0.000000e+00 : f32
    %383 = vector.broadcast %cst_191 : f32 to vector<1x128xf32>
    %384 = arith.cmpf ogt, %330, %383 : vector<1x128xf32>
    %385 = vector.shape_cast %384 : vector<1x128xi1> to vector<1x128xi1>
    %386 = vector.broadcast %385 : vector<1x128xi1> to vector<16x128xi1>
    %387 = arith.select %386, %382, %329 : vector<16x128xi1>, vector<16x128xf32>
    %c7 = arith.constant 7 : index
    %c0_192 = arith.constant 0 : index
    %388 = vector.load %arg4[%c7, %c0_192] : memref<8x128xf32, #tpu.memory_space<vmem>>, vector<1x128xf32>
    %c7_193 = arith.constant 7 : index
    %c0_194 = arith.constant 0 : index
    %c0_195 = arith.constant 0 : index
    %389 = vector.load %arg2[%c7_193, %c0_194, %c0_195] : memref<8x16x128xf32, #tpu.memory_space<vmem>>, vector<1x16x128xf32>
    %390 = vector.shape_cast %389 : vector<1x16x128xf32> to vector<16x128xf32>
    %cst_196 = arith.constant dense<0xFF800000> : vector<128xf32>
    %391 = vector.multi_reduction <maximumf>, %390, %cst_196 [0] : vector<16x128xf32> to vector<128xf32>
    %392 = vector.shape_cast %391 : vector<128xf32> to vector<1x128xf32>
    %393 = vector.broadcast %392 : vector<1x128xf32> to vector<16x128xf32>
    %394 = arith.cmpf oeq, %390, %393 : vector<16x128xf32>
    %c16_i32_197 = arith.constant 16 : i32
    %395 = vector.broadcast %c16_i32_197 : i32 to vector<16x128xi32>
    %396 = arith.select %394, %0, %395 : vector<16x128xi1>, vector<16x128xi32>
    %cst_198 = arith.constant dense<2147483647> : vector<128xi32>
    %397 = vector.multi_reduction <minsi>, %396, %cst_198 [0] : vector<16x128xi32> to vector<128xi32>
    %398 = vector.shape_cast %397 : vector<128xi32> to vector<1x128xi32>
    %c7_199 = arith.constant 7 : index
    %c0_200 = arith.constant 0 : index
    %399 = vector.load %arg11[%c7_199, %c0_200] : memref<8x128xi32, #tpu.memory_space<vmem>>, vector<1x128xi32>
    tpu.vector_store %arg11[%c7_199, %c0_200], %398 {strides = array<i32>} : memref<8x128xi32, #tpu.memory_space<vmem>>, vector<1x128xi32>,
    %c7_201 = arith.constant 7 : index
    %c0_202 = arith.constant 0 : index
    %400 = vector.load %arg3[%c7_201, %c0_202] : memref<8x128xi32, #tpu.memory_space<vmem>>, vector<1x128xi32>
    %401 = vector.broadcast %400 : vector<1x128xi32> to vector<16x128xi32>
    %402 = arith.cmpi eq, %0, %401 : vector<16x128xi32>
    %403 = arith.extui %402 : vector<16x128xi1> to vector<16x128xi32>
    %404 = arith.sitofp %403 : vector<16x128xi32> to vector<16x128xf32>
    %c7_203 = arith.constant 7 : index
    %c0_204 = arith.constant 0 : index
    %c0_205 = arith.constant 0 : index
    %405 = vector.load %arg1[%c7_203, %c0_204, %c0_205] : memref<8x16x128xf32, #tpu.memory_space<vmem>>, vector<1x16x128xf32>
    %406 = vector.shape_cast %405 : vector<1x16x128xf32> to vector<16x128xf32>
    %407 = arith.mulf %406, %404 : vector<16x128xf32>
    %cst_206 = arith.constant dense<0.000000e+00> : vector<128xf32>
    %408 = vector.multi_reduction <add>, %407, %cst_206 [0] : vector<16x128xf32> to vector<128xf32>
    %409 = vector.shape_cast %408 : vector<128xf32> to vector<1x128xf32>
    %410 = vector.broadcast %2 : vector<16x1xf32> to vector<16x128xf32>
    %411 = arith.mulf %404, %410 : vector<16x128xf32>
    %cst_207 = arith.constant dense<0.000000e+00> : vector<128xf32>
    %412 = vector.multi_reduction <add>, %411, %cst_207 [0] : vector<16x128xf32> to vector<128xf32>
    %413 = vector.shape_cast %412 : vector<128xf32> to vector<1x128xf32>
    %c6_208 = arith.constant 6 : index
    %c0_209 = arith.constant 0 : index
    %414 = vector.load %arg5[%c6_208, %c0_209] : memref<7x128xf32, #tpu.memory_space<vmem>>, vector<1x128xf32>
    %415 = arith.addf %414, %409 : vector<1x128xf32>
    %416 = arith.mulf %415, %388 : vector<1x128xf32>
    %417 = arith.addf %364, %416 : vector<1x128xf32>
    %418 = arith.mulf %355, %330 : vector<1x128xf32>
    %cst_210 = arith.constant 1.000000e+00 : f32
    %419 = vector.broadcast %cst_210 : f32 to vector<1x128xf32>
    %420 = arith.subf %419, %388 : vector<1x128xf32>
    %421 = arith.mulf %418, %420 : vector<1x128xf32>
    %422 = arith.addf %417, %421 : vector<1x128xf32>
    %cst_211 = arith.constant dense<0xFF800000> : vector<128xf32>
    %423 = vector.multi_reduction <maximumf>, %387, %cst_211 [0] : vector<16x128xf32> to vector<128xf32>
    %424 = vector.shape_cast %423 : vector<128xf32> to vector<1x128xf32>
    %425 = vector.broadcast %424 : vector<1x128xf32> to vector<16x128xf32>
    %426 = arith.subf %387, %425 : vector<16x128xf32>
    %427 = math.exp %426 : vector<16x128xf32>
    %428 = vector.shape_cast %427 : vector<16x128xf32> to vector<1x16x128xf32>
    %c0_212 = arith.constant 0 : index
    %c0_213 = arith.constant 0 : index
    %c0_214 = arith.constant 0 : index
    %429 = vector.load %arg6[%c0_212, %c0_213, %c0_214] : memref<16x16x128xf32, #tpu.memory_space<vmem>>, vector<16x16x128xf32>
    %430 = vector.broadcast %428 : vector<1x16x128xf32> to vector<16x16x128xf32>
    %431 = arith.mulf %430, %429 : vector<16x16x128xf32>
    %cst_215 = arith.constant dense<0.000000e+00> : vector<16x128xf32>
    %432 = vector.multi_reduction <add>, %431, %cst_215 [1] : vector<16x16x128xf32> to vector<16x128xf32>
    %433 = math.log %432 : vector<16x128xf32>
    %c7_216 = arith.constant 7 : index
    %c0_217 = arith.constant 0 : index
    %c0_218 = arith.constant 0 : index
    %434 = vector.load %arg1[%c7_216, %c0_217, %c0_218] : memref<8x16x128xf32, #tpu.memory_space<vmem>>, vector<1x16x128xf32>
    %435 = vector.shape_cast %434 : vector<1x16x128xf32> to vector<16x128xf32>
    %436 = arith.addf %433, %435 : vector<16x128xf32>
    %437 = vector.broadcast %424 : vector<1x128xf32> to vector<16x128xf32>
    %438 = arith.addf %436, %437 : vector<16x128xf32>
    %439 = vector.broadcast %3 : vector<16x1xf32> to vector<16x128xf32>
    %440 = arith.addf %438, %439 : vector<16x128xf32>
    %cst_219 = arith.constant 0.000000e+00 : f32
    %441 = vector.broadcast %cst_219 : f32 to vector<1x128xf32>
    %442 = arith.cmpf ogt, %388, %441 : vector<1x128xf32>
    %443 = vector.shape_cast %442 : vector<1x128xi1> to vector<1x128xi1>
    %444 = vector.broadcast %443 : vector<1x128xi1> to vector<16x128xi1>
    %445 = arith.select %444, %440, %387 : vector<16x128xi1>, vector<16x128xf32>
    %446 = arith.mulf %413, %388 : vector<1x128xf32>
    %447 = arith.addf %422, %446 : vector<1x128xf32>
    %448 = vector.broadcast %2 : vector<16x1xf32> to vector<16x128xf32>
    %449 = arith.addf %445, %448 : vector<16x128xf32>
    %cst_220 = arith.constant dense<0xFF800000> : vector<128xf32>
    %450 = vector.multi_reduction <maximumf>, %449, %cst_220 [0] : vector<16x128xf32> to vector<128xf32>
    %451 = vector.shape_cast %450 : vector<128xf32> to vector<1x128xf32>
    %452 = vector.broadcast %451 : vector<1x128xf32> to vector<16x128xf32>
    %453 = arith.subf %449, %452 : vector<16x128xf32>
    %454 = math.exp %453 : vector<16x128xf32>
    %cst_221 = arith.constant dense<0.000000e+00> : vector<128xf32>
    %455 = vector.multi_reduction <add>, %454, %cst_221 [0] : vector<16x128xf32> to vector<128xf32>
    %456 = vector.shape_cast %455 : vector<128xf32> to vector<1x128xf32>
    %457 = math.log %456 : vector<1x128xf32>
    %458 = arith.addf %451, %457 : vector<1x128xf32>
    %cst_222 = arith.constant 0.000000e+00 : f32
    %459 = vector.broadcast %cst_222 : f32 to vector<1x128xf32>
    %460 = arith.cmpf ogt, %29, %459 : vector<1x128xf32>
    %461 = arith.extui %460 : vector<1x128xi1> to vector<1x128xi32>
    %462 = arith.sitofp %461 : vector<1x128xi32> to vector<1x128xf32>
    %463 = arith.subf %458, %447 : vector<1x128xf32>
    %464 = arith.mulf %463, %462 : vector<1x128xf32>
    %c0_223 = arith.constant 0 : index
    %c0_224 = arith.constant 0 : index
    %465 = vector.load %arg10[%c0_223, %c0_224] : memref<1x128xf32, #tpu.memory_space<vmem>>, vector<1x128xf32>
    tpu.vector_store %arg10[%c0_223, %c0_224], %464 {strides = array<i32>} : memref<1x128xf32, #tpu.memory_space<vmem>>, vector<1x128xf32>,
    return
  }
  func.func @transform_0(%arg0: i32) -> (i32, i32, i32) {
    %c0_i32 = arith.constant 0 : i32
    %c0_i32_0 = arith.constant 0 : i32
    %c0_i32_1 = arith.constant 0 : i32
    return %c0_i32, %c0_i32_0, %arg0 : i32, i32, i32
  }
  func.func @transform_1(%arg0: i32) -> (i32, i32, i32) {
    %c0_i32 = arith.constant 0 : i32
    %c0_i32_0 = arith.constant 0 : i32
    %c0_i32_1 = arith.constant 0 : i32
    return %c0_i32, %c0_i32_0, %arg0 : i32, i32, i32
  }
  func.func @transform_2(%arg0: i32) -> (i32, i32) {
    %c0_i32 = arith.constant 0 : i32
    %c0_i32_0 = arith.constant 0 : i32
    return %c0_i32, %arg0 : i32, i32
  }
  func.func @transform_3(%arg0: i32) -> (i32, i32) {
    %c0_i32 = arith.constant 0 : i32
    %c0_i32_0 = arith.constant 0 : i32
    return %c0_i32, %arg0 : i32, i32
  }
  func.func @transform_4(%arg0: i32) -> (i32, i32) {
    %c0_i32 = arith.constant 0 : i32
    %c0_i32_0 = arith.constant 0 : i32
    return %c0_i32, %arg0 : i32, i32
  }
  func.func @transform_5(%arg0: i32) -> (i32, i32, i32) {
    %c0_i32 = arith.constant 0 : i32
    %c0_i32_0 = arith.constant 0 : i32
    %c0_i32_1 = arith.constant 0 : i32
    %c0_i32_2 = arith.constant 0 : i32
    return %c0_i32, %c0_i32_0, %c0_i32_1 : i32, i32, i32
  }
  func.func @transform_6(%arg0: i32) -> (i32, i32) {
    %c0_i32 = arith.constant 0 : i32
    %c0_i32_0 = arith.constant 0 : i32
    %c0_i32_1 = arith.constant 0 : i32
    return %c0_i32, %c0_i32_0 : i32, i32
  }
  func.func @transform_7(%arg0: i32) -> (i32, i32) {
    %c0_i32 = arith.constant 0 : i32
    %c0_i32_0 = arith.constant 0 : i32
    %c0_i32_1 = arith.constant 0 : i32
    return %c0_i32, %c0_i32_0 : i32, i32
  }
  func.func @transform_8(%arg0: i32) -> (i32, i32) {
    %c0_i32 = arith.constant 0 : i32
    %c0_i32_0 = arith.constant 0 : i32
    %c0_i32_1 = arith.constant 0 : i32
    return %c0_i32, %c0_i32_0 : i32, i32
  }
  func.func @transform_9(%arg0: i32) -> (i32, i32) {
    %c0_i32 = arith.constant 0 : i32
    %c0_i32_0 = arith.constant 0 : i32
    return %c0_i32, %arg0 : i32, i32
  }
  func.func @transform_10(%arg0: i32) -> (i32, i32) {
    %c0_i32 = arith.constant 0 : i32
    %c0_i32_0 = arith.constant 0 : i32
    return %c0_i32, %arg0 : i32, i32
  }
}

</mosaic_0001>

<llo_original>
// kernel: tpu_custom_call.1
$region0: #{tpu_custom_call.1}
  #allocation0 [shape = 'u32[]', space=smem, size = 0x4, offset = 0x4, fixed_abs, tag = 'smem constant byte address 0x4 - core index']
  #allocation1 [shape = 'u32[72,128]{1,0:T(1,128)}', space=vmem, size = 0x9000, scoped, tag = 'internal scratch']
  %s0 = inlined_call_operand.hbm [shape: f32[8,16,128], index: 0, kind: input, shape index: {}]
  %s1 = inlined_call_operand.hbm [shape: f32[8,16,128], index: 1, kind: input, shape index: {}]
  %s2 = inlined_call_operand.vmem [shape: s32[8,128], index: 2, kind: input, shape index: {}]
  %s3 = inlined_call_operand.vmem [shape: f32[8,128], index: 3, kind: input, shape index: {}]
  %s4 = inlined_call_operand.vmem [shape: f32[7,128], index: 4, kind: input, shape index: {}]
  %s5 = inlined_call_operand.hbm [shape: f32[16,16,128], index: 5, kind: input, shape index: {}]
  %s6 = inlined_call_operand.vmem [shape: f32[16,1], index: 6, kind: input, shape index: {}]
  %s7 = inlined_call_operand.vmem [shape: f32[16,1], index: 7, kind: input, shape index: {}]
  %s8 = inlined_call_operand.vmem [shape: f32[16,1], index: 8, kind: input, shape index: {}]
  %s9 = inlined_call_operand.hbm [shape: f32[1,128], index: 9, kind: output, shape index: {0}]
  %s10 = inlined_call_operand.hbm [shape: s32[8,128], index: 10, kind: output, shape index: {1}]
  %11 = xla_tuple %s9, %s10
  %s12 = sld [smem:[#allocation0]]
  $region66: #{tpu_custom_call.1} parent=0
    _
  %s14 = ssub.s32 1, %s12
  %s15 = scalar_select 0, %s14, %s12
  $region1: #{tpu_custom_call.1} parent=0
    #allocation2 [shape = 'u8[65536]{0}', space=vmem, size = 0x10000, scoped, tag = 'input window, operand 0, single buffered']
    #allocation3 [shape = 's32[1]{0}', space=sflag, size = 0x4, scoped, tag = 'scoped memory for tpu_custom_call.1']
    #allocation4 [shape = 's32[1]{0}', space=sflag, size = 0x4, scoped, tag = 'scoped memory for tpu_custom_call.1']
    #allocation5 [shape = 'u8[65536]{0}', space=vmem, size = 0x10000, scoped, tag = 'input window, operand 1, single buffered']
    #allocation6 [shape = 's32[1]{0}', space=sflag, size = 0x4, scoped, tag = 'scoped memory for tpu_custom_call.1']
    #allocation7 [shape = 'u8[131072]{0}', space=vmem, size = 0x20000, scoped, tag = 'input window, operand 5, single buffered']
    #allocation8 [shape = 'u8[512]{0}', space=vmem, size = 0x400, scoped, tag = 'output window, operand 0, single buffered']
    #allocation9 [shape = 'u8[4096]{0}', space=vmem, size = 0x1000, scoped, tag = 'output window, operand 1, single buffered']
    #allocation10 [shape = 's32[1]{0}', space=sflag, size = 0x4, scoped, tag = 'scoped memory for tpu_custom_call.1']
    %16 = vsyncpa [#allocation3], 0
    %17 = vsyncpa [#allocation6], 0
    %18 = vsyncpa [#allocation4], 0
    %19 = vsyncpa [#allocation10], 0
    // Predicated region
    $region2: #{tpu_custom_call.1} parent=1 // pred_check
      _
    $region3: #{tpu_custom_call.1} parent=1 // pred_check_branch
      %21 = sbr.rel (0) target = $region5
    $region4: #{tpu_custom_call.1} parent=1 // pred_region
      %23 = vsyncadd [#allocation3], 0
      %s24 = sshll.u32 %s0, 4
      %s25 = int_to_ptr.hbm [resolvable:$true] %s24
      %s26 = sshll.u32 [#allocation2], 4
      %s27 = int_to_ptr.vmem [resolvable:$true] %s26
      %32 = dma.hbm_to_vmem [thread:$0]  %s25, 2048, %s27, [#allocation3], 128, 128, 8
    $region5: #{tpu_custom_call.1} parent=1 // pred_fallthru
      _
    // Predicated region
    $region6: #{tpu_custom_call.1} parent=1 // pred_check
      _
    $region7: #{tpu_custom_call.1} parent=1 // pred_check_branch
      %34 = sbr.rel (0) target = $region9
    $region8: #{tpu_custom_call.1} parent=1 // pred_region
      %36 = vsyncadd [#allocation6], 0
      %s37 = sshll.u32 %s1, 4
      %s38 = int_to_ptr.hbm [resolvable:$true] %s37
      %s39 = sshll.u32 [#allocation5], 4
      %s40 = int_to_ptr.vmem [resolvable:$true] %s39
      %45 = dma.hbm_to_vmem [thread:$0]  %s38, 2048, %s40, [#allocation6], 128, 128, 8
    $region9: #{tpu_custom_call.1} parent=1 // pred_fallthru
      _
    // Predicated region
    $region10: #{tpu_custom_call.1} parent=1 // pred_check
      _
    $region11: #{tpu_custom_call.1} parent=1 // pred_check_branch
      %47 = sbr.rel (0) target = $region13
    $region12: #{tpu_custom_call.1} parent=1 // pred_region
      _
    $region13: #{tpu_custom_call.1} parent=1 // pred_fallthru
      _
    // Predicated region
    $region14: #{tpu_custom_call.1} parent=1 // pred_check
      _
    $region15: #{tpu_custom_call.1} parent=1 // pred_check_branch
      %49 = sbr.rel (0) target = $region17
    $region16: #{tpu_custom_call.1} parent=1 // pred_region
      _
    $region17: #{tpu_custom_call.1} parent=1 // pred_fallthru
      _
    // Predicated region
    $region18: #{tpu_custom_call.1} parent=1 // pred_check
      _
    $region19: #{tpu_custom_call.1} parent=1 // pred_check_branch
      %51 = sbr.rel (0) target = $region21
    $region20: #{tpu_custom_call.1} parent=1 // pred_region
      _
    $region21: #{tpu_custom_call.1} parent=1 // pred_fallthru
      _
    // Predicated region
    $region22: #{tpu_custom_call.1} parent=1 // pred_check
      _
    $region23: #{tpu_custom_call.1} parent=1 // pred_check_branch
      %53 = sbr.rel (0) target = $region25
    $region24: #{tpu_custom_call.1} parent=1 // pred_region
      %55 = vsyncadd [#allocation6], 0
      %s56 = sshll.u32 %s5, 4
      %s57 = int_to_ptr.hbm [resolvable:$true] %s56
      %s58 = sshll.u32 [#allocation7], 4
      %s59 = int_to_ptr.vmem [resolvable:$true] %s58
      %64 = dma.hbm_to_vmem [thread:$0]  %s57, 4096, %s59, [#allocation6], 128, 128, 8
    $region25: #{tpu_custom_call.1} parent=1 // pred_fallthru
      _
    // Predicated region
    $region26: #{tpu_custom_call.1} parent=1 // pred_check
      _
    $region27: #{tpu_custom_call.1} parent=1 // pred_check_branch
      %66 = sbr.rel (0) target = $region29
    $region28: #{tpu_custom_call.1} parent=1 // pred_region
      _
    $region29: #{tpu_custom_call.1} parent=1 // pred_fallthru
      _
    // Predicated region
    $region30: #{tpu_custom_call.1} parent=1 // pred_check
      _
    $region31: #{tpu_custom_call.1} parent=1 // pred_check_branch
      %68 = sbr.rel (0) target = $region33
    $region32: #{tpu_custom_call.1} parent=1 // pred_region
      _
    $region33: #{tpu_custom_call.1} parent=1 // pred_fallthru
      _
    // Predicated region
    $region34: #{tpu_custom_call.1} parent=1 // pred_check
      _
    $region35: #{tpu_custom_call.1} parent=1 // pred_check_branch
      %70 = sbr.rel (0) target = $region37
    $region36: #{tpu_custom_call.1} parent=1 // pred_region
      _
    $region37: #{tpu_custom_call.1} parent=1 // pred_fallthru
      _
    // Predicated region
    $region38: #{tpu_custom_call.1} parent=1 // pred_check
      _
    $region39: #{tpu_custom_call.1} parent=1 // pred_check_branch
      %72 = sbr.rel (0) target = $region41
    $region40: #{tpu_custom_call.1} parent=1 // pred_region
      %74 = dma.done [#allocation3], 2048
    $region41: #{tpu_custom_call.1} parent=1 // pred_fallthru
      _
    // Predicated region
    $region42: #{tpu_custom_call.1} parent=1 // pred_check
      _
    $region43: #{tpu_custom_call.1} parent=1 // pred_check_branch
      %76 = sbr.rel (0) target = $region45
    $region44: #{tpu_custom_call.1} parent=1 // pred_region
      %78 = dma.done [#allocation6], 2048
    $region45: #{tpu_custom_call.1} parent=1 // pred_fallthru
      _
    // Predicated region
    $region46: #{tpu_custom_call.1} parent=1 // pred_check
      _
    $region47: #{tpu_custom_call.1} parent=1 // pred_check_branch
      %80 = sbr.rel (0) target = $region49
    $region48: #{tpu_custom_call.1} parent=1 // pred_region
      %82 = dma.done [#allocation6], 4096
    $region49: #{tpu_custom_call.1} parent=1 // pred_fallthru
      _
    %v83 = vlaneseq
    %v84 = vshrl.u32 %v83, 7
    %v85 = vadd.s32 %v84, 8
    %v86 = vld [vmem:[%s6] sm:$0xff]
    %v87 = vld [vmem:[%s6 + $0x8] sm:$0xff]
    %v88 = vld [vmem:[%s7] sm:$0xff]
    %v89 = vld [vmem:[%s7 + $0x8] sm:$0xff]
    %v90 = vld [vmem:[%s8] sm:$0xff]
    %v91 = vld [vmem:[%s8 + $0x8] sm:$0xff]
    %v92 = vld [vmem:[#allocation5] sm:$0xff]
    %v93 = vld [vmem:[#allocation5 + $0x8] sm:$0xff]
    %v94 = vmax.f32 %v92, %v93
    %v95 = vrot.slane %v94, 4
    %v96 = vmax.f32 %v94, %v95
    %v97 = vrot.slane %v96, 2
    %v98 = vmax.f32 %v96, %v97
    %v99 = vrot.slane %v98, 1
    %v100 = vmax.f32 %v98, %v99
    %vm101 = vcmp.eq.f32.partialorder %v92, %v100
    %vm102 = vcmp.eq.f32.partialorder %v93, %v100
    %v103 = vsel %vm101, %v84, 16
    %v104 = vsel %vm102, %v85, 16
    %vm105 = vcmp.lt.s32.totalorder %v103, %v104
    %v106 = vsel %vm105, %v103, %v104
    %v107 = vrot.slane %v106, 4
    %vm108 = vcmp.lt.s32.totalorder %v106, %v107
    %v109 = vsel %vm108, %v106, %v107
    %v110 = vrot.slane %v109, 2
    %vm111 = vcmp.lt.s32.totalorder %v109, %v110
    %v112 = vsel %vm111, %v109, %v110
    %v113 = vrot.slane %v112, 1
    %vm114 = vcmp.lt.s32.totalorder %v112, %v113
    %v115 = vsel %vm114, %v112, %v113
    %116 = vst [vmem:[#allocation9] sm:$0x1] %v115
    %v117 = vld [vmem:[%s2] sm:$0x1]
    %v118 = vperm.slane %v117, 0
    %vm119 = vcmp.eq.s32.totalorder %v84, %v118
    %vm120 = vcmp.eq.s32.totalorder %v85, %v118
    %v121 = vsel %vm119, 1, 0
    %v122 = vsel %vm120, 1, 0
    %v123 = vcvt.s32.f32 %v121
    %v124 = vcvt.s32.f32 %v122
    %v125 = vld [vmem:[#allocation2] sm:$0xff]
    %v126 = vld [vmem:[#allocation2 + $0x8] sm:$0xff]
    %v127 = vmul.f32 %v125, %v123
    %v128 = vmul.f32 %v126, %v124
    %v129 = vadd.f32 %v127, %v128
    %v130 = vrot.slane %v129, 4
    %v131 = vadd.f32 %v129, %v130
    %v132 = vrot.slane %v131, 2
    %v133 = vadd.f32 %v131, %v132
    %v134 = vrot.slane %v133, 1
    %v135 = vadd.f32 %v133, %v134
    %137 = vset.pattern.permute.xlu0 0
    %138 = vperm.xlu0 %137, %v88
    %v139 = vpop.permute.xlu0 %138
    %142 = vset.pattern.permute.xlu0 0
    %143 = vperm.xlu0 %142, %v89
    %v144 = vpop.permute.xlu0 %143
    %v146 = vmul.f32 %v123, %v139
    %v147 = vmul.f32 %v124, %v144
    %v148 = vadd.f32 %v146, %v147
    %v149 = vrot.slane %v148, 4
    %v150 = vadd.f32 %v148, %v149
    %v151 = vrot.slane %v150, 2
    %v152 = vadd.f32 %v150, %v151
    %v153 = vrot.slane %v152, 1
    %v154 = vadd.f32 %v152, %v153
    %v155 = vld [vmem:[%s3] sm:$0x1]
    %157 = vset.pattern.permute.xlu0 0
    %158 = vperm.xlu0 %157, %v86
    %v159 = vpop.permute.xlu0 %158
    %162 = vset.pattern.permute.xlu0 0
    %163 = vperm.xlu0 %162, %v87
    %v164 = vpop.permute.xlu0 %163
    %v166 = vmul.f32 %v123, %v159
    %v167 = vmul.f32 %v124, %v164
    %v168 = vadd.f32 %v166, %v167
    %v169 = vrot.slane %v168, 4
    %v170 = vadd.f32 %v168, %v169
    %v171 = vrot.slane %v170, 2
    %v172 = vadd.f32 %v170, %v171
    %v173 = vrot.slane %v172, 1
    %v174 = vadd.f32 %v172, %v173
    %v175 = vmul.f32 %v135, %v155
    %v176 = vadd.f32 %v174, %v175
    %v177 = vadd.f32 %v159, %v125
    %v178 = vadd.f32 %v164, %v126
    %v179 = vld [vmem:[%s3 + $0x1] sm:$0x1]
    %s180 = scalar_lea.vmem [#allocation5], 16
    %v181 = vld [vmem:[%s180] sm:$0xff]
    %v182 = vld [vmem:[%s180 + $0x8] sm:$0xff]
    %v183 = vmax.f32 %v181, %v182
    %v184 = vrot.slane %v183, 4
    %v185 = vmax.f32 %v183, %v184
    %v186 = vrot.slane %v185, 2
    %v187 = vmax.f32 %v185, %v186
    %v188 = vrot.slane %v187, 1
    %v189 = vmax.f32 %v187, %v188
    %vm190 = vcmp.eq.f32.partialorder %v181, %v189
    %vm191 = vcmp.eq.f32.partialorder %v182, %v189
    %v192 = vsel %vm190, %v84, 16
    %v193 = vsel %vm191, %v85, 16
    %vm194 = vcmp.lt.s32.totalorder %v192, %v193
    %v195 = vsel %vm194, %v192, %v193
    %v196 = vrot.slane %v195, 4
    %vm197 = vcmp.lt.s32.totalorder %v195, %v196
    %v198 = vsel %vm197, %v195, %v196
    %v199 = vrot.slane %v198, 2
    %vm200 = vcmp.lt.s32.totalorder %v198, %v199
    %v201 = vsel %vm200, %v198, %v199
    %v202 = vrot.slane %v201, 1
    %vm203 = vcmp.lt.s32.totalorder %v201, %v202
    %v204 = vsel %vm203, %v201, %v202
    %205 = vst [vmem:[#allocation9 + $0x1] sm:$0x1] %v204
    %v206 = vld [vmem:[%s2 + $0x1] sm:$0x1]
    %v207 = vperm.slane %v206, 0
    %vm208 = vcmp.eq.s32.totalorder %v84, %v207
    %vm209 = vcmp.eq.s32.totalorder %v85, %v207
    %v210 = vsel %vm208, 1, 0
    %v211 = vsel %vm209, 1, 0
    %v212 = vcvt.s32.f32 %v210
    %v213 = vcvt.s32.f32 %v211
    %s214 = scalar_lea.vmem [#allocation2], 16
    %v215 = vld [vmem:[%s214] sm:$0xff]
    %v216 = vld [vmem:[%s214 + $0x8] sm:$0xff]
    %v217 = vmul.f32 %v215, %v212
    %v218 = vmul.f32 %v216, %v213
    %v219 = vadd.f32 %v217, %v218
    %v220 = vrot.slane %v219, 4
    %v221 = vadd.f32 %v219, %v220
    %v222 = vrot.slane %v221, 2
    %v223 = vadd.f32 %v221, %v222
    %v224 = vrot.slane %v223, 1
    %v225 = vadd.f32 %v223, %v224
    %v226 = vmul.f32 %v212, %v139
    %v227 = vmul.f32 %v213, %v144
    %v228 = vadd.f32 %v226, %v227
    %v229 = vrot.slane %v228, 4
    %v230 = vadd.f32 %v228, %v229
    %v231 = vrot.slane %v230, 2
    %v232 = vadd.f32 %v230, %v231
    %v233 = vrot.slane %v232, 1
    %v234 = vadd.f32 %v232, %v233
    %v235 = vld [vmem:[%s4] sm:$0x1]
    %v236 = vadd.f32 %v235, %v225
    %v237 = vmul.f32 %v236, %v179
    %v238 = vadd.f32 %v176, %v237
    %v239 = vmul.f32 %v154, %v155
    %v240 = vsub.f32 1.0, %v179
    %v241 = vmul.f32 %v239, %v240
    %v242 = vadd.f32 %v238, %v241
    %v243 = vmax.f32 %v177, %v178
    %v244 = vrot.slane %v243, 4
    %v245 = vmax.f32 %v243, %v244
    %v246 = vrot.slane %v245, 2
    %v247 = vmax.f32 %v245, %v246
    %v248 = vrot.slane %v247, 1
    %v249 = vmax.f32 %v247, %v248
    %v250 = vsub.f32 %v177, %v249
    %v251 = vsub.f32 %v178, %v249
    %v252 = vmul.f32 %v250, 1.442695
    %v253 = vpow.pop %v252
    %v254 = vmul.f32 %v251, 1.442695
    %v255 = vpow.pop %v254
    %v256 = vld [vmem:[#allocation7] sm:$0xff]
    %v257 = vld [vmem:[#allocation7 + $0x8] sm:$0xff]
    %v258 = vld [vmem:[#allocation7 + $0x10] sm:$0xff]
    %v259 = vld [vmem:[#allocation7 + $0x18] sm:$0xff]
    %v260 = vld [vmem:[#allocation7 + $0x20] sm:$0xff]
    %v261 = vld [vmem:[#allocation7 + $0x28] sm:$0xff]
    %v262 = vld [vmem:[#allocation7 + $0x30] sm:$0xff]
    %v263 = vld [vmem:[#allocation7 + $0x38] sm:$0xff]
    %v264 = vld [vmem:[#allocation7 + $0x40] sm:$0xff]
    %v265 = vld [vmem:[#allocation7 + $0x48] sm:$0xff]
    %v266 = vld [vmem:[#allocation7 + $0x50] sm:$0xff]
    %v267 = vld [vmem:[#allocation7 + $0x58] sm:$0xff]
    %v268 = vld [vmem:[#allocation7 + $0x60] sm:$0xff]
    %v269 = vld [vmem:[#allocation7 + $0x68] sm:$0xff]
    %v270 = vld [vmem:[#allocation7 + $0x70] sm:$0xff]
    %v271 = vld [vmem:[#allocation7 + $0x78] sm:$0xff]
    %v272 = vld [vmem:[#allocation7 + $0x80] sm:$0xff]
    %v273 = vld [vmem:[#allocation7 + $0x88] sm:$0xff]
    %v274 = vld [vmem:[#allocation7 + $0x90] sm:$0xff]
    %v275 = vld [vmem:[#allocation7 + $0x98] sm:$0xff]
    %v276 = vld [vmem:[#allocation7 + $0xa0] sm:$0xff]
    %v277 = vld [vmem:[#allocation7 + $0xa8] sm:$0xff]
    %v278 = vld [vmem:[#allocation7 + $0xb0] sm:$0xff]
    %v279 = vld [vmem:[#allocation7 + $0xb8] sm:$0xff]
    %v280 = vld [vmem:[#allocation7 + $0xc0] sm:$0xff]
    %v281 = vld [vmem:[#allocation7 + $0xc8] sm:$0xff]
    %v282 = vld [vmem:[#allocation7 + $0xd0] sm:$0xff]
    %v283 = vld [vmem:[#allocation7 + $0xd8] sm:$0xff]
    %v284 = vld [vmem:[#allocation7 + $0xe0] sm:$0xff]
    %v285 = vld [vmem:[#allocation7 + $0xe8] sm:$0xff]
    %v286 = vld [vmem:[#allocation7 + $0xf0] sm:$0xff]
    %v287 = vld [vmem:[#allocation7 + $0xf8] sm:$0xff]
    %v288 = vmul.f32 %v253, %v256
    %v289 = vmul.f32 %v255, %v257
    %v290 = vmul.f32 %v253, %v258
    %v291 = vmul.f32 %v255, %v259
    %v292 = vmul.f32 %v253, %v260
    %v293 = vmul.f32 %v255, %v261
    %v294 = vmul.f32 %v253, %v262
    %v295 = vmul.f32 %v255, %v263
    %v296 = vmul.f32 %v253, %v264
    %v297 = vmul.f32 %v255, %v265
    %v298 = vmul.f32 %v253, %v266
    %v299 = vmul.f32 %v255, %v267
    %v300 = vmul.f32 %v253, %v268
    %v301 = vmul.f32 %v255, %v269
    %v302 = vmul.f32 %v253, %v270
    %v303 = vmul.f32 %v255, %v271
    %v304 = vmul.f32 %v253, %v272
    %v305 = vmul.f32 %v255, %v273
    %v306 = vmul.f32 %v253, %v274
    %v307 = vmul.f32 %v255, %v275
    %v308 = vmul.f32 %v253, %v276
    %v309 = vmul.f32 %v255, %v277
    %v310 = vmul.f32 %v253, %v278
    %v311 = vmul.f32 %v255, %v279
    %v312 = vmul.f32 %v253, %v280
    %v313 = vmul.f32 %v255, %v281
    %v314 = vmul.f32 %v253, %v282
    %v315 = vmul.f32 %v255, %v283
    %v316 = vmul.f32 %v253, %v284
    %v317 = vmul.f32 %v255, %v285
    %v318 = vmul.f32 %v253, %v286
    %v319 = vmul.f32 %v255, %v287
    %v320 = vadd.f32 %v288, %v289
    %v321 = vrot.slane %v320, 4
    %v322 = vadd.f32 %v320, %v321
    %v323 = vrot.slane %v322, 2
    %v324 = vadd.f32 %v322, %v323
    %v325 = vrot.slane %v324, 1
    %v326 = vadd.f32 %v324, %v325
    %v327 = vadd.f32 %v290, %v291
    %v328 = vrot.slane %v327, 4
    %v329 = vadd.f32 %v327, %v328
    %v330 = vrot.slane %v329, 2
    %v331 = vadd.f32 %v329, %v330
    %v332 = vrot.slane %v331, 1
    %v333 = vadd.f32 %v331, %v332
    %v334 = vadd.f32 %v292, %v293
    %v335 = vrot.slane %v334, 4
    %v336 = vadd.f32 %v334, %v335
    %v337 = vrot.slane %v336, 2
    %v338 = vadd.f32 %v336, %v337
    %v339 = vrot.slane %v338, 1
    %v340 = vadd.f32 %v338, %v339
    %v341 = vadd.f32 %v294, %v295
    %v342 = vrot.slane %v341, 4
    %v343 = vadd.f32 %v341, %v342
    %v344 = vrot.slane %v343, 2
    %v345 = vadd.f32 %v343, %v344
    %v346 = vrot.slane %v345, 1
    %v347 = vadd.f32 %v345, %v346
    %v348 = vadd.f32 %v296, %v297
    %v349 = vrot.slane %v348, 4
    %v350 = vadd.f32 %v348, %v349
    %v351 = vrot.slane %v350, 2
    %v352 = vadd.f32 %v350, %v351
    %v353 = vrot.slane %v352, 1
    %v354 = vadd.f32 %v352, %v353
    %v355 = vadd.f32 %v298, %v299
    %v356 = vrot.slane %v355, 4
    %v357 = vadd.f32 %v355, %v356
    %v358 = vrot.slane %v357, 2
    %v359 = vadd.f32 %v357, %v358
    %v360 = vrot.slane %v359, 1
    %v361 = vadd.f32 %v359, %v360
    %v362 = vadd.f32 %v300, %v301
    %v363 = vrot.slane %v362, 4
    %v364 = vadd.f32 %v362, %v363
    %v365 = vrot.slane %v364, 2
    %v366 = vadd.f32 %v364, %v365
    %v367 = vrot.slane %v366, 1
    %v368 = vadd.f32 %v366, %v367
    %v369 = vadd.f32 %v302, %v303
    %v370 = vrot.slane %v369, 4
    %v371 = vadd.f32 %v369, %v370
    %v372 = vrot.slane %v371, 2
    %v373 = vadd.f32 %v371, %v372
    %v374 = vrot.slane %v373, 1
    %v375 = vadd.f32 %v373, %v374
    %v376 = vadd.f32 %v304, %v305
    %v377 = vrot.slane %v376, 4
    %v378 = vadd.f32 %v376, %v377
    %v379 = vrot.slane %v378, 2
    %v380 = vadd.f32 %v378, %v379
    %v381 = vrot.slane %v380, 1
    %v382 = vadd.f32 %v380, %v381
    %v383 = vadd.f32 %v306, %v307
    %v384 = vrot.slane %v383, 4
    %v385 = vadd.f32 %v383, %v384
    %v386 = vrot.slane %v385, 2
    %v387 = vadd.f32 %v385, %v386
    %v388 = vrot.slane %v387, 1
    %v389 = vadd.f32 %v387, %v388
    %v390 = vadd.f32 %v308, %v309
    %v391 = vrot.slane %v390, 4
    %v392 = vadd.f32 %v390, %v391
    %v393 = vrot.slane %v392, 2
    %v394 = vadd.f32 %v392, %v393
    %v395 = vrot.slane %v394, 1
    %v396 = vadd.f32 %v394, %v395
    %v397 = vadd.f32 %v310, %v311
    %v398 = vrot.slane %v397, 4
    %v399 = vadd.f32 %v397, %v398
    %v400 = vrot.slane %v399, 2
    %v401 = vadd.f32 %v399, %v400
    %v402 = vrot.slane %v401, 1
    %v403 = vadd.f32 %v401, %v402
    %v404 = vadd.f32 %v312, %v313
    %v405 = vrot.slane %v404, 4
    %v406 = vadd.f32 %v404, %v405
    %v407 = vrot.slane %v406, 2
    %v408 = vadd.f32 %v406, %v407
    %v409 = vrot.slane %v408, 1
    %v410 = vadd.f32 %v408, %v409
    %v411 = vadd.f32 %v314, %v315
    %v412 = vrot.slane %v411, 4
    %v413 = vadd.f32 %v411, %v412
    %v414 = vrot.slane %v413, 2
    %v415 = vadd.f32 %v413, %v414
    %v416 = vrot.slane %v415, 1
    %v417 = vadd.f32 %v415, %v416
    %v418 = vadd.f32 %v316, %v317
    %v419 = vrot.slane %v418, 4
    %v420 = vadd.f32 %v418, %v419
    %v421 = vrot.slane %v420, 2
    %v422 = vadd.f32 %v420, %v421
    %v423 = vrot.slane %v422, 1
    %v424 = vadd.f32 %v422, %v423
    %v425 = vadd.f32 %v318, %v319
    %v426 = vrot.slane %v425, 4
    %v427 = vadd.f32 %v425, %v426
    %v428 = vrot.slane %v427, 2
    %v429 = vadd.f32 %v427, %v428
    %v430 = vrot.slane %v429, 1
    %v431 = vadd.f32 %v429, %v430
    %v432 = vlog2.pop %v326
    %v433 = vmul.f32 %v432, 0.6931472
    %v434 = vlog2.pop %v333
    %v435 = vmul.f32 %v434, 0.6931472
    %v436 = vlog2.pop %v340
    %v437 = vmul.f32 %v436, 0.6931472
    %v438 = vlog2.pop %v347
    %v439 = vmul.f32 %v438, 0.6931472
    %v440 = vlog2.pop %v354
    %v441 = vmul.f32 %v440, 0.6931472
    %v442 = vlog2.pop %v361
    %v443 = vmul.f32 %v442, 0.6931472
    %v444 = vlog2.pop %v368
    %v445 = vmul.f32 %v444, 0.6931472
    %v446 = vlog2.pop %v375
    %v447 = vmul.f32 %v446, 0.6931472
    %v448 = vlog2.pop %v382
    %v449 = vmul.f32 %v448, 0.6931472
    %v450 = vlog2.pop %v389
    %v451 = vmul.f32 %v450, 0.6931472
    %v452 = vlog2.pop %v396
    %v453 = vmul.f32 %v452, 0.6931472
    %v454 = vlog2.pop %v403
    %v455 = vmul.f32 %v454, 0.6931472
    %v456 = vlog2.pop %v410
    %v457 = vmul.f32 %v456, 0.6931472
    %v458 = vlog2.pop %v417
    %v459 = vmul.f32 %v458, 0.6931472
    %v460 = vlog2.pop %v424
    %v461 = vmul.f32 %v460, 0.6931472
    %v462 = vlog2.pop %v431
    %v463 = vmul.f32 %v462, 0.6931472
    %v466 = vrot.slane %v215, 1
    %v467 = vrot.slane %v215, 2
    %v468 = vrot.slane %v215, 3
    %v469 = vrot.slane %v215, 4
    %v470 = vrot.slane %v215, 5
    %v471 = vrot.slane %v215, 6
    %v472 = vrot.slane %v215, 7
    %v473 = vrot.slane %v216, 1
    %v474 = vrot.slane %v216, 2
    %v475 = vrot.slane %v216, 3
    %v476 = vrot.slane %v216, 4
    %v477 = vrot.slane %v216, 5
    %v478 = vrot.slane %v216, 6
    %v479 = vrot.slane %v216, 7
    %v496 = vadd.f32 %v433, %v215
    %v497 = vadd.f32 %v435, %v466
    %v498 = vadd.f32 %v437, %v467
    %v499 = vadd.f32 %v439, %v468
    %v500 = vadd.f32 %v441, %v469
    %v501 = vadd.f32 %v443, %v470
    %v502 = vadd.f32 %v445, %v471
    %v503 = vadd.f32 %v447, %v472
    %v504 = vadd.f32 %v449, %v216
    %v505 = vadd.f32 %v451, %v473
    %v506 = vadd.f32 %v453, %v474
    %v507 = vadd.f32 %v455, %v475
    %v508 = vadd.f32 %v457, %v476
    %v509 = vadd.f32 %v459, %v477
    %v510 = vadd.f32 %v461, %v478
    %v511 = vadd.f32 %v463, %v479
    %v512 = vadd.f32 %v496, %v249
    %v513 = vadd.f32 %v497, %v249
    %v514 = vadd.f32 %v498, %v249
    %v515 = vadd.f32 %v499, %v249
    %v516 = vadd.f32 %v500, %v249
    %v517 = vadd.f32 %v501, %v249
    %v518 = vadd.f32 %v502, %v249
    %v519 = vadd.f32 %v503, %v249
    %v520 = vadd.f32 %v504, %v249
    %v521 = vadd.f32 %v505, %v249
    %v522 = vadd.f32 %v506, %v249
    %v523 = vadd.f32 %v507, %v249
    %v524 = vadd.f32 %v508, %v249
    %v525 = vadd.f32 %v509, %v249
    %v526 = vadd.f32 %v510, %v249
    %v527 = vadd.f32 %v511, %v249
    %529 = vset.pattern.permute.xlu0 0
    %530 = vperm.xlu0 %529, %v90
    %v531 = vpop.permute.xlu0 %530
    %533 = vset.pattern.permute.xlu0 0
    %534 = vperm.xlu0 %533, %v91
    %v535 = vpop.permute.xlu0 %534
    %v536 = vrot.slane %v531, 1
    %v537 = vrot.slane %v531, 2
    %v538 = vrot.slane %v531, 3
    %v539 = vrot.slane %v531, 4
    %v540 = vrot.slane %v531, 5
    %v541 = vrot.slane %v531, 6
    %v542 = vrot.slane %v531, 7
    %v543 = vrot.slane %v535, 1
    %v544 = vrot.slane %v535, 2
    %v545 = vrot.slane %v535, 3
    %v546 = vrot.slane %v535, 4
    %v547 = vrot.slane %v535, 5
    %v548 = vrot.slane %v535, 6
    %v549 = vrot.slane %v535, 7
    %v566 = vadd.f32 %v512, %v531
    %v567 = vadd.f32 %v513, %v536
    %v568 = vadd.f32 %v514, %v537
    %v569 = vadd.f32 %v515, %v538
    %v570 = vadd.f32 %v516, %v539
    %v571 = vadd.f32 %v517, %v540
    %v572 = vadd.f32 %v518, %v541
    %v573 = vadd.f32 %v519, %v542
    %v574 = vadd.f32 %v520, %v535
    %v575 = vadd.f32 %v521, %v543
    %v576 = vadd.f32 %v522, %v544
    %v577 = vadd.f32 %v523, %v545
    %v578 = vadd.f32 %v524, %v546
    %v579 = vadd.f32 %v525, %v547
    %v580 = vadd.f32 %v526, %v548
    %v581 = vadd.f32 %v527, %v549
    %vm582 = vcmp.gt.f32.partialorder %v179, 0.0
    %v583 = vsel %vm582, 1, 0
    %v584 = vperm.slane %v583, 0
    %vm585 = vcmp.eq.s32.totalorder %v584, 1
    %v602 = vrot.slane %v567, 7
    %vm603 = vcmask 1041409
    %v604 = vsel %vm603, %v602, %v566
    %v605 = vrot.slane %v568, 6
    %vm606 = vcmask 1042434
    %v607 = vsel %vm606, %v605, %v604
    %v608 = vrot.slane %v569, 5
    %vm609 = vcmask 1043459
    %v610 = vsel %vm609, %v608, %v607
    %v611 = vrot.slane %v570, 4
    %vm612 = vcmask 1044484
    %v613 = vsel %vm612, %v611, %v610
    %v614 = vrot.slane %v571, 3
    %vm615 = vcmask 1045509
    %v616 = vsel %vm615, %v614, %v613
    %v617 = vrot.slane %v572, 2
    %vm618 = vcmask 1046534
    %v619 = vsel %vm618, %v617, %v616
    %v620 = vrot.slane %v573, 1
    %vm621 = vcmask 1047559
    %v622 = vsel %vm621, %v620, %v619
    %v623 = vrot.slane %v575, 7
    %v624 = vsel %vm603, %v623, %v574
    %v625 = vrot.slane %v576, 6
    %v626 = vsel %vm606, %v625, %v624
    %v627 = vrot.slane %v577, 5
    %v628 = vsel %vm609, %v627, %v626
    %v629 = vrot.slane %v578, 4
    %v630 = vsel %vm612, %v629, %v628
    %v631 = vrot.slane %v579, 3
    %v632 = vsel %vm615, %v631, %v630
    %v633 = vrot.slane %v580, 2
    %v634 = vsel %vm618, %v633, %v632
    %v635 = vrot.slane %v581, 1
    %v636 = vsel %vm621, %v635, %v634
    %v639 = vsel %vm585, %v622, %v177
    %v640 = vsel %vm585, %v636, %v178
    %v641 = vld [vmem:[%s3 + $0x2] sm:$0x1]
    %s642 = scalar_lea.vmem [#allocation5], 32
    %v643 = vld [vmem:[%s642] sm:$0xff]
    %v644 = vld [vmem:[%s642 + $0x8] sm:$0xff]
    %v645 = vmax.f32 %v643, %v644
    %v646 = vrot.slane %v645, 4
    %v647 = vmax.f32 %v645, %v646
    %v648 = vrot.slane %v647, 2
    %v649 = vmax.f32 %v647, %v648
    %v650 = vrot.slane %v649, 1
    %v651 = vmax.f32 %v649, %v650
    %vm652 = vcmp.eq.f32.partialorder %v643, %v651
    %vm653 = vcmp.eq.f32.partialorder %v644, %v651
    %v654 = vsel %vm652, %v84, 16
    %v655 = vsel %vm653, %v85, 16
    %vm656 = vcmp.lt.s32.totalorder %v654, %v655
    %v657 = vsel %vm656, %v654, %v655
    %v658 = vrot.slane %v657, 4
    %vm659 = vcmp.lt.s32.totalorder %v657, %v658
    %v660 = vsel %vm659, %v657, %v658
    %v661 = vrot.slane %v660, 2
    %vm662 = vcmp.lt.s32.totalorder %v660, %v661
    %v663 = vsel %vm662, %v660, %v661
    %v664 = vrot.slane %v663, 1
    %vm665 = vcmp.lt.s32.totalorder %v663, %v664
    %v666 = vsel %vm665, %v663, %v664
    %667 = vst [vmem:[#allocation9 + $0x2] sm:$0x1] %v666
    %v668 = vld [vmem:[%s2 + $0x2] sm:$0x1]
    %v669 = vperm.slane %v668, 0
    %vm670 = vcmp.eq.s32.totalorder %v84, %v669
    %vm671 = vcmp.eq.s32.totalorder %v85, %v669
    %v672 = vsel %vm670, 1, 0
    %v673 = vsel %vm671, 1, 0
    %v674 = vcvt.s32.f32 %v672
    %v675 = vcvt.s32.f32 %v673
    %s676 = scalar_lea.vmem [#allocation2], 32
    %v677 = vld [vmem:[%s676] sm:$0xff]
    %v678 = vld [vmem:[%s676 + $0x8] sm:$0xff]
    %v679 = vmul.f32 %v677, %v674
    %v680 = vmul.f32 %v678, %v675
    %v681 = vadd.f32 %v679, %v680
    %v682 = vrot.slane %v681, 4
    %v683 = vadd.f32 %v681, %v682
    %v684 = vrot.slane %v683, 2
    %v685 = vadd.f32 %v683, %v684
    %v686 = vrot.slane %v685, 1
    %v687 = vadd.f32 %v685, %v686
    %v688 = vmul.f32 %v674, %v139
    %v689 = vmul.f32 %v675, %v144
    %v690 = vadd.f32 %v688, %v689
    %v691 = vrot.slane %v690, 4
    %v692 = vadd.f32 %v690, %v691
    %v693 = vrot.slane %v692, 2
    %v694 = vadd.f32 %v692, %v693
    %v695 = vrot.slane %v694, 1
    %v696 = vadd.f32 %v694, %v695
    %v697 = vld [vmem:[%s4 + $0x1] sm:$0x1]
    %v698 = vadd.f32 %v697, %v687
    %v699 = vmul.f32 %v698, %v641
    %v700 = vadd.f32 %v242, %v699
    %v701 = vmul.f32 %v234, %v179
    %v702 = vsub.f32 1.0, %v641
    %v703 = vmul.f32 %v701, %v702
    %v704 = vadd.f32 %v700, %v703
    %v705 = vmax.f32 %v639, %v640
    %v706 = vrot.slane %v705, 4
    %v707 = vmax.f32 %v705, %v706
    %v708 = vrot.slane %v707, 2
    %v709 = vmax.f32 %v707, %v708
    %v710 = vrot.slane %v709, 1
    %v711 = vmax.f32 %v709, %v710
    %v712 = vsub.f32 %v639, %v711
    %v713 = vsub.f32 %v640, %v711
    %v714 = vmul.f32 %v712, 1.442695
    %v715 = vpow.pop %v714
    %v716 = vmul.f32 %v713, 1.442695
    %v717 = vpow.pop %v716
    %v718 = vld [vmem:[#allocation7] sm:$0xff]
    %v719 = vld [vmem:[#allocation7 + $0x8] sm:$0xff]
    %v720 = vld [vmem:[#allocation7 + $0x10] sm:$0xff]
    %v721 = vld [vmem:[#allocation7 + $0x18] sm:$0xff]
    %v722 = vld [vmem:[#allocation7 + $0x20] sm:$0xff]
    %v723 = vld [vmem:[#allocation7 + $0x28] sm:$0xff]
    %v724 = vld [vmem:[#allocation7 + $0x30] sm:$0xff]
    %v725 = vld [vmem:[#allocation7 + $0x38] sm:$0xff]
    %v726 = vld [vmem:[#allocation7 + $0x40] sm:$0xff]
    %v727 = vld [vmem:[#allocation7 + $0x48] sm:$0xff]
    %v728 = vld [vmem:[#allocation7 + $0x50] sm:$0xff]
    %v729 = vld [vmem:[#allocation7 + $0x58] sm:$0xff]
    %v730 = vld [vmem:[#allocation7 + $0x60] sm:$0xff]
    %v731 = vld [vmem:[#allocation7 + $0x68] sm:$0xff]
    %v732 = vld [vmem:[#allocation7 + $0x70] sm:$0xff]
    %v733 = vld [vmem:[#allocation7 + $0x78] sm:$0xff]
    %v734 = vld [vmem:[#allocation7 + $0x80] sm:$0xff]
    %v735 = vld [vmem:[#allocation7 + $0x88] sm:$0xff]
    %v736 = vld [vmem:[#allocation7 + $0x90] sm:$0xff]
    %v737 = vld [vmem:[#allocation7 + $0x98] sm:$0xff]
    %v738 = vld [vmem:[#allocation7 + $0xa0] sm:$0xff]
    %v739 = vld [vmem:[#allocation7 + $0xa8] sm:$0xff]
    %v740 = vld [vmem:[#allocation7 + $0xb0] sm:$0xff]
    %v741 = vld [vmem:[#allocation7 + $0xb8] sm:$0xff]
    %v742 = vld [vmem:[#allocation7 + $0xc0] sm:$0xff]
    %v743 = vld [vmem:[#allocation7 + $0xc8] sm:$0xff]
    %v744 = vld [vmem:[#allocation7 + $0xd0] sm:$0xff]
    %v745 = vld [vmem:[#allocation7 + $0xd8] sm:$0xff]
    %v746 = vld [vmem:[#allocation7 + $0xe0] sm:$0xff]
    %v747 = vld [vmem:[#allocation7 + $0xe8] sm:$0xff]
    %v748 = vld [vmem:[#allocation7 + $0xf0] sm:$0xff]
    %v749 = vld [vmem:[#allocation7 + $0xf8] sm:$0xff]
    %v750 = vmul.f32 %v715, %v718
    %v751 = vmul.f32 %v717, %v719
    %v752 = vmul.f32 %v715, %v720
    %v753 = vmul.f32 %v717, %v721
    %v754 = vmul.f32 %v715, %v722
    %v755 = vmul.f32 %v717, %v723
    %v756 = vmul.f32 %v715, %v724
    %v757 = vmul.f32 %v717, %v725
    %v758 = vmul.f32 %v715, %v726
    %v759 = vmul.f32 %v717, %v727
    %v760 = vmul.f32 %v715, %v728
    %v761 = vmul.f32 %v717, %v729
    %v762 = vmul.f32 %v715, %v730
    %v763 = vmul.f32 %v717, %v731
    %v764 = vmul.f32 %v715, %v732
    %v765 = vmul.f32 %v717, %v733
    %v766 = vmul.f32 %v715, %v734
    %v767 = vmul.f32 %v717, %v735
    %v768 = vmul.f32 %v715, %v736
    %v769 = vmul.f32 %v717, %v737
    %v770 = vmul.f32 %v715, %v738
    %v771 = vmul.f32 %v717, %v739
    %v772 = vmul.f32 %v715, %v740
    %v773 = vmul.f32 %v717, %v741
    %v774 = vmul.f32 %v715, %v742
    %v775 = vmul.f32 %v717, %v743
    %v776 = vmul.f32 %v715, %v744
    %v777 = vmul.f32 %v717, %v745
    %v778 = vmul.f32 %v715, %v746
    %v779 = vmul.f32 %v717, %v747
    %v780 = vmul.f32 %v715, %v748
    %v781 = vmul.f32 %v717, %v749
    %v782 = vadd.f32 %v750, %v751
    %v783 = vrot.slane %v782, 4
    %v784 = vadd.f32 %v782, %v783
    %v785 = vrot.slane %v784, 2
    %v786 = vadd.f32 %v784, %v785
    %v787 = vrot.slane %v786, 1
    %v788 = vadd.f32 %v786, %v787
    %v789 = vadd.f32 %v752, %v753
    %v790 = vrot.slane %v789, 4
    %v791 = vadd.f32 %v789, %v790
    %v792 = vrot.slane %v791, 2
    %v793 = vadd.f32 %v791, %v792
    %v794 = vrot.slane %v793, 1
    %v795 = vadd.f32 %v793, %v794
    %v796 = vadd.f32 %v754, %v755
    %v797 = vrot.slane %v796, 4
    %v798 = vadd.f32 %v796, %v797
    %v799 = vrot.slane %v798, 2
    %v800 = vadd.f32 %v798, %v799
    %v801 = vrot.slane %v800, 1
    %v802 = vadd.f32 %v800, %v801
    %v803 = vadd.f32 %v756, %v757
    %v804 = vrot.slane %v803, 4
    %v805 = vadd.f32 %v803, %v804
    %v806 = vrot.slane %v805, 2
    %v807 = vadd.f32 %v805, %v806
    %v808 = vrot.slane %v807, 1
    %v809 = vadd.f32 %v807, %v808
    %v810 = vadd.f32 %v758, %v759
    %v811 = vrot.slane %v810, 4
    %v812 = vadd.f32 %v810, %v811
    %v813 = vrot.slane %v812, 2
    %v814 = vadd.f32 %v812, %v813
    %v815 = vrot.slane %v814, 1
    %v816 = vadd.f32 %v814, %v815
    %v817 = vadd.f32 %v760, %v761
    %v818 = vrot.slane %v817, 4
    %v819 = vadd.f32 %v817, %v818
    %v820 = vrot.slane %v819, 2
    %v821 = vadd.f32 %v819, %v820
    %v822 = vrot.slane %v821, 1
    %v823 = vadd.f32 %v821, %v822
    %v824 = vadd.f32 %v762, %v763
    %v825 = vrot.slane %v824, 4
    %v826 = vadd.f32 %v824, %v825
    %v827 = vrot.slane %v826, 2
    %v828 = vadd.f32 %v826, %v827
    %v829 = vrot.slane %v828, 1
    %v830 = vadd.f32 %v828, %v829
    %v831 = vadd.f32 %v764, %v765
    %v832 = vrot.slane %v831, 4
    %v833 = vadd.f32 %v831, %v832
    %v834 = vrot.slane %v833, 2
    %v835 = vadd.f32 %v833, %v834
    %v836 = vrot.slane %v835, 1
    %v837 = vadd.f32 %v835, %v836
    %v838 = vadd.f32 %v766, %v767
    %v839 = vrot.slane %v838, 4
    %v840 = vadd.f32 %v838, %v839
    %v841 = vrot.slane %v840, 2
    %v842 = vadd.f32 %v840, %v841
    %v843 = vrot.slane %v842, 1
    %v844 = vadd.f32 %v842, %v843
    %v845 = vadd.f32 %v768, %v769
    %v846 = vrot.slane %v845, 4
    %v847 = vadd.f32 %v845, %v846
    %v848 = vrot.slane %v847, 2
    %v849 = vadd.f32 %v847, %v848
    %v850 = vrot.slane %v849, 1
    %v851 = vadd.f32 %v849, %v850
    %v852 = vadd.f32 %v770, %v771
    %v853 = vrot.slane %v852, 4
    %v854 = vadd.f32 %v852, %v853
    %v855 = vrot.slane %v854, 2
    %v856 = vadd.f32 %v854, %v855
    %v857 = vrot.slane %v856, 1
    %v858 = vadd.f32 %v856, %v857
    %v859 = vadd.f32 %v772, %v773
    %v860 = vrot.slane %v859, 4
    %v861 = vadd.f32 %v859, %v860
    %v862 = vrot.slane %v861, 2
    %v863 = vadd.f32 %v861, %v862
    %v864 = vrot.slane %v863, 1
    %v865 = vadd.f32 %v863, %v864
    %v866 = vadd.f32 %v774, %v775
    %v867 = vrot.slane %v866, 4
    %v868 = vadd.f32 %v866, %v867
    %v869 = vrot.slane %v868, 2
    %v870 = vadd.f32 %v868, %v869
    %v871 = vrot.slane %v870, 1
    %v872 = vadd.f32 %v870, %v871
    %v873 = vadd.f32 %v776, %v777
    %v874 = vrot.slane %v873, 4
    %v875 = vadd.f32 %v873, %v874
    %v876 = vrot.slane %v875, 2
    %v877 = vadd.f32 %v875, %v876
    %v878 = vrot.slane %v877, 1
    %v879 = vadd.f32 %v877, %v878
    %v880 = vadd.f32 %v778, %v779
    %v881 = vrot.slane %v880, 4
    %v882 = vadd.f32 %v880, %v881
    %v883 = vrot.slane %v882, 2
    %v884 = vadd.f32 %v882, %v883
    %v885 = vrot.slane %v884, 1
    %v886 = vadd.f32 %v884, %v885
    %v887 = vadd.f32 %v780, %v781
    %v888 = vrot.slane %v887, 4
    %v889 = vadd.f32 %v887, %v888
    %v890 = vrot.slane %v889, 2
    %v891 = vadd.f32 %v889, %v890
    %v892 = vrot.slane %v891, 1
    %v893 = vadd.f32 %v891, %v892
    %v894 = vlog2.pop %v788
    %v895 = vmul.f32 %v894, 0.6931472
    %v896 = vlog2.pop %v795
    %v897 = vmul.f32 %v896, 0.6931472
    %v898 = vlog2.pop %v802
    %v899 = vmul.f32 %v898, 0.6931472
    %v900 = vlog2.pop %v809
    %v901 = vmul.f32 %v900, 0.6931472
    %v902 = vlog2.pop %v816
    %v903 = vmul.f32 %v902, 0.6931472
    %v904 = vlog2.pop %v823
    %v905 = vmul.f32 %v904, 0.6931472
    %v906 = vlog2.pop %v830
    %v907 = vmul.f32 %v906, 0.6931472
    %v908 = vlog2.pop %v837
    %v909 = vmul.f32 %v908, 0.6931472
    %v910 = vlog2.pop %v844
    %v911 = vmul.f32 %v910, 0.6931472
    %v912 = vlog2.pop %v851
    %v913 = vmul.f32 %v912, 0.6931472
    %v914 = vlog2.pop %v858
    %v915 = vmul.f32 %v914, 0.6931472
    %v916 = vlog2.pop %v865
    %v917 = vmul.f32 %v916, 0.6931472
    %v918 = vlog2.pop %v872
    %v919 = vmul.f32 %v918, 0.6931472
    %v920 = vlog2.pop %v879
    %v921 = vmul.f32 %v920, 0.6931472
    %v922 = vlog2.pop %v886
    %v923 = vmul.f32 %v922, 0.6931472
    %v924 = vlog2.pop %v893
    %v925 = vmul.f32 %v924, 0.6931472
    %v928 = vrot.slane %v677, 1
    %v929 = vrot.slane %v677, 2
    %v930 = vrot.slane %v677, 3
    %v931 = vrot.slane %v677, 4
    %v932 = vrot.slane %v677, 5
    %v933 = vrot.slane %v677, 6
    %v934 = vrot.slane %v677, 7
    %v935 = vrot.slane %v678, 1
    %v936 = vrot.slane %v678, 2
    %v937 = vrot.slane %v678, 3
    %v938 = vrot.slane %v678, 4
    %v939 = vrot.slane %v678, 5
    %v940 = vrot.slane %v678, 6
    %v941 = vrot.slane %v678, 7
    %v958 = vadd.f32 %v895, %v677
    %v959 = vadd.f32 %v897, %v928
    %v960 = vadd.f32 %v899, %v929
    %v961 = vadd.f32 %v901, %v930
    %v962 = vadd.f32 %v903, %v931
    %v963 = vadd.f32 %v905, %v932
    %v964 = vadd.f32 %v907, %v933
    %v965 = vadd.f32 %v909, %v934
    %v966 = vadd.f32 %v911, %v678
    %v967 = vadd.f32 %v913, %v935
    %v968 = vadd.f32 %v915, %v936
    %v969 = vadd.f32 %v917, %v937
    %v970 = vadd.f32 %v919, %v938
    %v971 = vadd.f32 %v921, %v939
    %v972 = vadd.f32 %v923, %v940
    %v973 = vadd.f32 %v925, %v941
    %v974 = vadd.f32 %v958, %v711
    %v975 = vadd.f32 %v959, %v711
    %v976 = vadd.f32 %v960, %v711
    %v977 = vadd.f32 %v961, %v711
    %v978 = vadd.f32 %v962, %v711
    %v979 = vadd.f32 %v963, %v711
    %v980 = vadd.f32 %v964, %v711
    %v981 = vadd.f32 %v965, %v711
    %v982 = vadd.f32 %v966, %v711
    %v983 = vadd.f32 %v967, %v711
    %v984 = vadd.f32 %v968, %v711
    %v985 = vadd.f32 %v969, %v711
    %v986 = vadd.f32 %v970, %v711
    %v987 = vadd.f32 %v971, %v711
    %v988 = vadd.f32 %v972, %v711
    %v989 = vadd.f32 %v973, %v711
    %v990 = vadd.f32 %v974, %v531
    %v991 = vadd.f32 %v975, %v536
    %v992 = vadd.f32 %v976, %v537
    %v993 = vadd.f32 %v977, %v538
    %v994 = vadd.f32 %v978, %v539
    %v995 = vadd.f32 %v979, %v540
    %v996 = vadd.f32 %v980, %v541
    %v997 = vadd.f32 %v981, %v542
    %v998 = vadd.f32 %v982, %v535
    %v999 = vadd.f32 %v983, %v543
    %v1000 = vadd.f32 %v984, %v544
    %v1001 = vadd.f32 %v985, %v545
    %v1002 = vadd.f32 %v986, %v546
    %v1003 = vadd.f32 %v987, %v547
    %v1004 = vadd.f32 %v988, %v548
    %v1005 = vadd.f32 %v989, %v549
    %vm1006 = vcmp.gt.f32.partialorder %v641, 0.0
    %v1007 = vsel %vm1006, 1, 0
    %v1008 = vperm.slane %v1007, 0
    %vm1009 = vcmp.eq.s32.totalorder %v1008, 1
    %v1026 = vrot.slane %v991, 7
    %v1027 = vsel %vm603, %v1026, %v990
    %v1028 = vrot.slane %v992, 6
    %v1029 = vsel %vm606, %v1028, %v1027
    %v1030 = vrot.slane %v993, 5
    %v1031 = vsel %vm609, %v1030, %v1029
    %v1032 = vrot.slane %v994, 4
    %v1033 = vsel %vm612, %v1032, %v1031
    %v1034 = vrot.slane %v995, 3
    %v1035 = vsel %vm615, %v1034, %v1033
    %v1036 = vrot.slane %v996, 2
    %v1037 = vsel %vm618, %v1036, %v1035
    %v1038 = vrot.slane %v997, 1
    %v1039 = vsel %vm621, %v1038, %v1037
    %v1040 = vrot.slane %v999, 7
    %v1041 = vsel %vm603, %v1040, %v998
    %v1042 = vrot.slane %v1000, 6
    %v1043 = vsel %vm606, %v1042, %v1041
    %v1044 = vrot.slane %v1001, 5
    %v1045 = vsel %vm609, %v1044, %v1043
    %v1046 = vrot.slane %v1002, 4
    %v1047 = vsel %vm612, %v1046, %v1045
    %v1048 = vrot.slane %v1003, 3
    %v1049 = vsel %vm615, %v1048, %v1047
    %v1050 = vrot.slane %v1004, 2
    %v1051 = vsel %vm618, %v1050, %v1049
    %v1052 = vrot.slane %v1005, 1
    %v1053 = vsel %vm621, %v1052, %v1051
    %v1056 = vsel %vm1009, %v1039, %v639
    %v1057 = vsel %vm1009, %v1053, %v640
    %v1058 = vld [vmem:[%s3 + $0x3] sm:$0x1]
    %s1059 = scalar_lea.vmem [#allocation5], 48
    %v1060 = vld [vmem:[%s1059] sm:$0xff]
    %v1061 = vld [vmem:[%s1059 + $0x8] sm:$0xff]
    %v1062 = vmax.f32 %v1060, %v1061
    %v1063 = vrot.slane %v1062, 4
    %v1064 = vmax.f32 %v1062, %v1063
    %v1065 = vrot.slane %v1064, 2
    %v1066 = vmax.f32 %v1064, %v1065
    %v1067 = vrot.slane %v1066, 1
    %v1068 = vmax.f32 %v1066, %v1067
    %vm1069 = vcmp.eq.f32.partialorder %v1060, %v1068
    %vm1070 = vcmp.eq.f32.partialorder %v1061, %v1068
    %v1071 = vsel %vm1069, %v84, 16
    %v1072 = vsel %vm1070, %v85, 16
    %vm1073 = vcmp.lt.s32.totalorder %v1071, %v1072
    %v1074 = vsel %vm1073, %v1071, %v1072
    %v1075 = vrot.slane %v1074, 4
    %vm1076 = vcmp.lt.s32.totalorder %v1074, %v1075
    %v1077 = vsel %vm1076, %v1074, %v1075
    %v1078 = vrot.slane %v1077, 2
    %vm1079 = vcmp.lt.s32.totalorder %v1077, %v1078
    %v1080 = vsel %vm1079, %v1077, %v1078
    %v1081 = vrot.slane %v1080, 1
    %vm1082 = vcmp.lt.s32.totalorder %v1080, %v1081
    %v1083 = vsel %vm1082, %v1080, %v1081
    %1084 = vst [vmem:[#allocation9 + $0x3] sm:$0x1] %v1083
    %v1085 = vld [vmem:[%s2 + $0x3] sm:$0x1]
    %v1086 = vperm.slane %v1085, 0
    %vm1087 = vcmp.eq.s32.totalorder %v84, %v1086
    %vm1088 = vcmp.eq.s32.totalorder %v85, %v1086
    %v1089 = vsel %vm1087, 1, 0
    %v1090 = vsel %vm1088, 1, 0
    %v1091 = vcvt.s32.f32 %v1089
    %v1092 = vcvt.s32.f32 %v1090
    %s1093 = scalar_lea.vmem [#allocation2], 48
    %v1094 = vld [vmem:[%s1093] sm:$0xff]
    %v1095 = vld [vmem:[%s1093 + $0x8] sm:$0xff]
    %v1096 = vmul.f32 %v1094, %v1091
    %v1097 = vmul.f32 %v1095, %v1092
    %v1098 = vadd.f32 %v1096, %v1097
    %v1099 = vrot.slane %v1098, 4
    %v1100 = vadd.f32 %v1098, %v1099
    %v1101 = vrot.slane %v1100, 2
    %v1102 = vadd.f32 %v1100, %v1101
    %v1103 = vrot.slane %v1102, 1
    %v1104 = vadd.f32 %v1102, %v1103
    %v1105 = vmul.f32 %v1091, %v139
    %v1106 = vmul.f32 %v1092, %v144
    %v1107 = vadd.f32 %v1105, %v1106
    %v1108 = vrot.slane %v1107, 4
    %v1109 = vadd.f32 %v1107, %v1108
    %v1110 = vrot.slane %v1109, 2
    %v1111 = vadd.f32 %v1109, %v1110
    %v1112 = vrot.slane %v1111, 1
    %v1113 = vadd.f32 %v1111, %v1112
    %v1114 = vld [vmem:[%s4 + $0x2] sm:$0x1]
    %v1115 = vadd.f32 %v1114, %v1104
    %v1116 = vmul.f32 %v1115, %v1058
    %v1117 = vadd.f32 %v704, %v1116
    %v1118 = vmul.f32 %v696, %v641
    %v1119 = vsub.f32 1.0, %v1058
    %v1120 = vmul.f32 %v1118, %v1119
    %v1121 = vadd.f32 %v1117, %v1120
    %v1122 = vmax.f32 %v1056, %v1057
    %v1123 = vrot.slane %v1122, 4
    %v1124 = vmax.f32 %v1122, %v1123
    %v1125 = vrot.slane %v1124, 2
    %v1126 = vmax.f32 %v1124, %v1125
    %v1127 = vrot.slane %v1126, 1
    %v1128 = vmax.f32 %v1126, %v1127
    %v1129 = vsub.f32 %v1056, %v1128
    %v1130 = vsub.f32 %v1057, %v1128
    %v1131 = vmul.f32 %v1129, 1.442695
    %v1132 = vpow.pop %v1131
    %v1133 = vmul.f32 %v1130, 1.442695
    %v1134 = vpow.pop %v1133
    %v1135 = vld [vmem:[#allocation7] sm:$0xff]
    %v1136 = vld [vmem:[#allocation7 + $0x8] sm:$0xff]
    %v1137 = vld [vmem:[#allocation7 + $0x10] sm:$0xff]
    %v1138 = vld [vmem:[#allocation7 + $0x18] sm:$0xff]
    %v1139 = vld [vmem:[#allocation7 + $0x20] sm:$0xff]
    %v1140 = vld [vmem:[#allocation7 + $0x28] sm:$0xff]
    %v1141 = vld [vmem:[#allocation7 + $0x30] sm:$0xff]
    %v1142 = vld [vmem:[#allocation7 + $0x38] sm:$0xff]
    %v1143 = vld [vmem:[#allocation7 + $0x40] sm:$0xff]
    %v1144 = vld [vmem:[#allocation7 + $0x48] sm:$0xff]
    %v1145 = vld [vmem:[#allocation7 + $0x50] sm:$0xff]
    %v1146 = vld [vmem:[#allocation7 + $0x58] sm:$0xff]
    %v1147 = vld [vmem:[#allocation7 + $0x60] sm:$0xff]
    %v1148 = vld [vmem:[#allocation7 + $0x68] sm:$0xff]
    %v1149 = vld [vmem:[#allocation7 + $0x70] sm:$0xff]
    %v1150 = vld [vmem:[#allocation7 + $0x78] sm:$0xff]
    %v1151 = vld [vmem:[#allocation7 + $0x80] sm:$0xff]
    %v1152 = vld [vmem:[#allocation7 + $0x88] sm:$0xff]
    %v1153 = vld [vmem:[#allocation7 + $0x90] sm:$0xff]
    %v1154 = vld [vmem:[#allocation7 + $0x98] sm:$0xff]
    %v1155 = vld [vmem:[#allocation7 + $0xa0] sm:$0xff]
    %v1156 = vld [vmem:[#allocation7 + $0xa8] sm:$0xff]
    %v1157 = vld [vmem:[#allocation7 + $0xb0] sm:$0xff]
    %v1158 = vld [vmem:[#allocation7 + $0xb8] sm:$0xff]
    %v1159 = vld [vmem:[#allocation7 + $0xc0] sm:$0xff]
    %v1160 = vld [vmem:[#allocation7 + $0xc8] sm:$0xff]
    %v1161 = vld [vmem:[#allocation7 + $0xd0] sm:$0xff]
    %v1162 = vld [vmem:[#allocation7 + $0xd8] sm:$0xff]
    %v1163 = vld [vmem:[#allocation7 + $0xe0] sm:$0xff]
    %v1164 = vld [vmem:[#allocation7 + $0xe8] sm:$0xff]
    %v1165 = vld [vmem:[#allocation7 + $0xf0] sm:$0xff]
    %v1166 = vld [vmem:[#allocation7 + $0xf8] sm:$0xff]
    %v1167 = vmul.f32 %v1132, %v1135
    %v1168 = vmul.f32 %v1134, %v1136
    %v1169 = vmul.f32 %v1132, %v1137
    %v1170 = vmul.f32 %v1134, %v1138
    %v1171 = vmul.f32 %v1132, %v1139
    %v1172 = vmul.f32 %v1134, %v1140
    %v1173 = vmul.f32 %v1132, %v1141
    %v1174 = vmul.f32 %v1134, %v1142
    %v1175 = vmul.f32 %v1132, %v1143
    %v1176 = vmul.f32 %v1134, %v1144
    %v1177 = vmul.f32 %v1132, %v1145
    %v1178 = vmul.f32 %v1134, %v1146
    %v1179 = vmul.f32 %v1132, %v1147
    %v1180 = vmul.f32 %v1134, %v1148
    %v1181 = vmul.f32 %v1132, %v1149
    %v1182 = vmul.f32 %v1134, %v1150
    %v1183 = vmul.f32 %v1132, %v1151
    %v1184 = vmul.f32 %v1134, %v1152
    %v1185 = vmul.f32 %v1132, %v1153
    %v1186 = vmul.f32 %v1134, %v1154
    %v1187 = vmul.f32 %v1132, %v1155
    %v1188 = vmul.f32 %v1134, %v1156
    %v1189 = vmul.f32 %v1132, %v1157
    %v1190 = vmul.f32 %v1134, %v1158
    %v1191 = vmul.f32 %v1132, %v1159
    %v1192 = vmul.f32 %v1134, %v1160
    %v1193 = vmul.f32 %v1132, %v1161
    %v1194 = vmul.f32 %v1134, %v1162
    %v1195 = vmul.f32 %v1132, %v1163
    %v1196 = vmul.f32 %v1134, %v1164
    %v1197 = vmul.f32 %v1132, %v1165
    %v1198 = vmul.f32 %v1134, %v1166
    %v1199 = vadd.f32 %v1167, %v1168
    %v1200 = vrot.slane %v1199, 4
    %v1201 = vadd.f32 %v1199, %v1200
    %v1202 = vrot.slane %v1201, 2
    %v1203 = vadd.f32 %v1201, %v1202
    %v1204 = vrot.slane %v1203, 1
    %v1205 = vadd.f32 %v1203, %v1204
    %v1206 = vadd.f32 %v1169, %v1170
    %v1207 = vrot.slane %v1206, 4
    %v1208 = vadd.f32 %v1206, %v1207
    %v1209 = vrot.slane %v1208, 2
    %v1210 = vadd.f32 %v1208, %v1209
    %v1211 = vrot.slane %v1210, 1
    %v1212 = vadd.f32 %v1210, %v1211
    %v1213 = vadd.f32 %v1171, %v1172
    %v1214 = vrot.slane %v1213, 4
    %v1215 = vadd.f32 %v1213, %v1214
    %v1216 = vrot.slane %v1215, 2
    %v1217 = vadd.f32 %v1215, %v1216
    %v1218 = vrot.slane %v1217, 1
    %v1219 = vadd.f32 %v1217, %v1218
    %v1220 = vadd.f32 %v1173, %v1174
    %v1221 = vrot.slane %v1220, 4
    %v1222 = vadd.f32 %v1220, %v1221
    %v1223 = vrot.slane %v1222, 2
    %v1224 = vadd.f32 %v1222, %v1223
    %v1225 = vrot.slane %v1224, 1
    %v1226 = vadd.f32 %v1224, %v1225
    %v1227 = vadd.f32 %v1175, %v1176
    %v1228 = vrot.slane %v1227, 4
    %v1229 = vadd.f32 %v1227, %v1228
    %v1230 = vrot.slane %v1229, 2
    %v1231 = vadd.f32 %v1229, %v1230
    %v1232 = vrot.slane %v1231, 1
    %v1233 = vadd.f32 %v1231, %v1232
    %v1234 = vadd.f32 %v1177, %v1178
    %v1235 = vrot.slane %v1234, 4
    %v1236 = vadd.f32 %v1234, %v1235
    %v1237 = vrot.slane %v1236, 2
    %v1238 = vadd.f32 %v1236, %v1237
    %v1239 = vrot.slane %v1238, 1
    %v1240 = vadd.f32 %v1238, %v1239
    %v1241 = vadd.f32 %v1179, %v1180
    %v1242 = vrot.slane %v1241, 4
    %v1243 = vadd.f32 %v1241, %v1242
    %v1244 = vrot.slane %v1243, 2
    %v1245 = vadd.f32 %v1243, %v1244
    %v1246 = vrot.slane %v1245, 1
    %v1247 = vadd.f32 %v1245, %v1246
    %v1248 = vadd.f32 %v1181, %v1182
    %v1249 = vrot.slane %v1248, 4
    %v1250 = vadd.f32 %v1248, %v1249
    %v1251 = vrot.slane %v1250, 2
    %v1252 = vadd.f32 %v1250, %v1251
    %v1253 = vrot.slane %v1252, 1
    %v1254 = vadd.f32 %v1252, %v1253
    %v1255 = vadd.f32 %v1183, %v1184
    %v1256 = vrot.slane %v1255, 4
    %v1257 = vadd.f32 %v1255, %v1256
    %v1258 = vrot.slane %v1257, 2
    %v1259 = vadd.f32 %v1257, %v1258
    %v1260 = vrot.slane %v1259, 1
    %v1261 = vadd.f32 %v1259, %v1260
    %v1262 = vadd.f32 %v1185, %v1186
    %v1263 = vrot.slane %v1262, 4
    %v1264 = vadd.f32 %v1262, %v1263
    %v1265 = vrot.slane %v1264, 2
    %v1266 = vadd.f32 %v1264, %v1265
    %v1267 = vrot.slane %v1266, 1
    %v1268 = vadd.f32 %v1266, %v1267
    %v1269 = vadd.f32 %v1187, %v1188
    %v1270 = vrot.slane %v1269, 4
    %v1271 = vadd.f32 %v1269, %v1270
    %v1272 = vrot.slane %v1271, 2
    %v1273 = vadd.f32 %v1271, %v1272
    %v1274 = vrot.slane %v1273, 1
    %v1275 = vadd.f32 %v1273, %v1274
    %v1276 = vadd.f32 %v1189, %v1190
    %v1277 = vrot.slane %v1276, 4
    %v1278 = vadd.f32 %v1276, %v1277
    %v1279 = vrot.slane %v1278, 2
    %v1280 = vadd.f32 %v1278, %v1279
    %v1281 = vrot.slane %v1280, 1
    %v1282 = vadd.f32 %v1280, %v1281
    %v1283 = vadd.f32 %v1191, %v1192
    %v1284 = vrot.slane %v1283, 4
    %v1285 = vadd.f32 %v1283, %v1284
    %v1286 = vrot.slane %v1285, 2
    %v1287 = vadd.f32 %v1285, %v1286
    %v1288 = vrot.slane %v1287, 1
    %v1289 = vadd.f32 %v1287, %v1288
    %v1290 = vadd.f32 %v1193, %v1194
    %v1291 = vrot.slane %v1290, 4
    %v1292 = vadd.f32 %v1290, %v1291
    %v1293 = vrot.slane %v1292, 2
    %v1294 = vadd.f32 %v1292, %v1293
    %v1295 = vrot.slane %v1294, 1
    %v1296 = vadd.f32 %v1294, %v1295
    %v1297 = vadd.f32 %v1195, %v1196
    %v1298 = vrot.slane %v1297, 4
    %v1299 = vadd.f32 %v1297, %v1298
    %v1300 = vrot.slane %v1299, 2
    %v1301 = vadd.f32 %v1299, %v1300
    %v1302 = vrot.slane %v1301, 1
    %v1303 = vadd.f32 %v1301, %v1302
    %v1304 = vadd.f32 %v1197, %v1198
    %v1305 = vrot.slane %v1304, 4
    %v1306 = vadd.f32 %v1304, %v1305
    %v1307 = vrot.slane %v1306, 2
    %v1308 = vadd.f32 %v1306, %v1307
    %v1309 = vrot.slane %v1308, 1
    %v1310 = vadd.f32 %v1308, %v1309
    %v1311 = vlog2.pop %v1205
    %v1312 = vmul.f32 %v1311, 0.6931472
    %v1313 = vlog2.pop %v1212
    %v1314 = vmul.f32 %v1313, 0.6931472
    %v1315 = vlog2.pop %v1219
    %v1316 = vmul.f32 %v1315, 0.6931472
    %v1317 = vlog2.pop %v1226
    %v1318 = vmul.f32 %v1317, 0.6931472
    %v1319 = vlog2.pop %v1233
    %v1320 = vmul.f32 %v1319, 0.6931472
    %v1321 = vlog2.pop %v1240
    %v1322 = vmul.f32 %v1321, 0.6931472
    %v1323 = vlog2.pop %v1247
    %v1324 = vmul.f32 %v1323, 0.6931472
    %v1325 = vlog2.pop %v1254
    %v1326 = vmul.f32 %v1325, 0.6931472
    %v1327 = vlog2.pop %v1261
    %v1328 = vmul.f32 %v1327, 0.6931472
    %v1329 = vlog2.pop %v1268
    %v1330 = vmul.f32 %v1329, 0.6931472
    %v1331 = vlog2.pop %v1275
    %v1332 = vmul.f32 %v1331, 0.6931472
    %v1333 = vlog2.pop %v1282
    %v1334 = vmul.f32 %v1333, 0.6931472
    %v1335 = vlog2.pop %v1289
    %v1336 = vmul.f32 %v1335, 0.6931472
    %v1337 = vlog2.pop %v1296
    %v1338 = vmul.f32 %v1337, 0.6931472
    %v1339 = vlog2.pop %v1303
    %v1340 = vmul.f32 %v1339, 0.6931472
    %v1341 = vlog2.pop %v1310
    %v1342 = vmul.f32 %v1341, 0.6931472
    %v1345 = vrot.slane %v1094, 1
    %v1346 = vrot.slane %v1094, 2
    %v1347 = vrot.slane %v1094, 3
    %v1348 = vrot.slane %v1094, 4
    %v1349 = vrot.slane %v1094, 5
    %v1350 = vrot.slane %v1094, 6
    %v1351 = vrot.slane %v1094, 7
    %v1352 = vrot.slane %v1095, 1
    %v1353 = vrot.slane %v1095, 2
    %v1354 = vrot.slane %v1095, 3
    %v1355 = vrot.slane %v1095, 4
    %v1356 = vrot.slane %v1095, 5
    %v1357 = vrot.slane %v1095, 6
    %v1358 = vrot.slane %v1095, 7
    %v1375 = vadd.f32 %v1312, %v1094
    %v1376 = vadd.f32 %v1314, %v1345
    %v1377 = vadd.f32 %v1316, %v1346
    %v1378 = vadd.f32 %v1318, %v1347
    %v1379 = vadd.f32 %v1320, %v1348
    %v1380 = vadd.f32 %v1322, %v1349
    %v1381 = vadd.f32 %v1324, %v1350
    %v1382 = vadd.f32 %v1326, %v1351
    %v1383 = vadd.f32 %v1328, %v1095
    %v1384 = vadd.f32 %v1330, %v1352
    %v1385 = vadd.f32 %v1332, %v1353
    %v1386 = vadd.f32 %v1334, %v1354
    %v1387 = vadd.f32 %v1336, %v1355
    %v1388 = vadd.f32 %v1338, %v1356
    %v1389 = vadd.f32 %v1340, %v1357
    %v1390 = vadd.f32 %v1342, %v1358
    %v1391 = vadd.f32 %v1375, %v1128
    %v1392 = vadd.f32 %v1376, %v1128
    %v1393 = vadd.f32 %v1377, %v1128
    %v1394 = vadd.f32 %v1378, %v1128
    %v1395 = vadd.f32 %v1379, %v1128
    %v1396 = vadd.f32 %v1380, %v1128
    %v1397 = vadd.f32 %v1381, %v1128
    %v1398 = vadd.f32 %v1382, %v1128
    %v1399 = vadd.f32 %v1383, %v1128
    %v1400 = vadd.f32 %v1384, %v1128
    %v1401 = vadd.f32 %v1385, %v1128
    %v1402 = vadd.f32 %v1386, %v1128
    %v1403 = vadd.f32 %v1387, %v1128
    %v1404 = vadd.f32 %v1388, %v1128
    %v1405 = vadd.f32 %v1389, %v1128
    %v1406 = vadd.f32 %v1390, %v1128
    %v1407 = vadd.f32 %v1391, %v531
    %v1408 = vadd.f32 %v1392, %v536
    %v1409 = vadd.f32 %v1393, %v537
    %v1410 = vadd.f32 %v1394, %v538
    %v1411 = vadd.f32 %v1395, %v539
    %v1412 = vadd.f32 %v1396, %v540
    %v1413 = vadd.f32 %v1397, %v541
    %v1414 = vadd.f32 %v1398, %v542
    %v1415 = vadd.f32 %v1399, %v535
    %v1416 = vadd.f32 %v1400, %v543
    %v1417 = vadd.f32 %v1401, %v544
    %v1418 = vadd.f32 %v1402, %v545
    %v1419 = vadd.f32 %v1403, %v546
    %v1420 = vadd.f32 %v1404, %v547
    %v1421 = vadd.f32 %v1405, %v548
    %v1422 = vadd.f32 %v1406, %v549
    %vm1423 = vcmp.gt.f32.partialorder %v1058, 0.0
    %v1424 = vsel %vm1423, 1, 0
    %v1425 = vperm.slane %v1424, 0
    %vm1426 = vcmp.eq.s32.totalorder %v1425, 1
    %v1443 = vrot.slane %v1408, 7
    %v1444 = vsel %vm603, %v1443, %v1407
    %v1445 = vrot.slane %v1409, 6
    %v1446 = vsel %vm606, %v1445, %v1444
    %v1447 = vrot.slane %v1410, 5
    %v1448 = vsel %vm609, %v1447, %v1446
    %v1449 = vrot.slane %v1411, 4
    %v1450 = vsel %vm612, %v1449, %v1448
    %v1451 = vrot.slane %v1412, 3
    %v1452 = vsel %vm615, %v1451, %v1450
    %v1453 = vrot.slane %v1413, 2
    %v1454 = vsel %vm618, %v1453, %v1452
    %v1455 = vrot.slane %v1414, 1
    %v1456 = vsel %vm621, %v1455, %v1454
    %v1457 = vrot.slane %v1416, 7
    %v1458 = vsel %vm603, %v1457, %v1415
    %v1459 = vrot.slane %v1417, 6
    %v1460 = vsel %vm606, %v1459, %v1458
    %v1461 = vrot.slane %v1418, 5
    %v1462 = vsel %vm609, %v1461, %v1460
    %v1463 = vrot.slane %v1419, 4
    %v1464 = vsel %vm612, %v1463, %v1462
    %v1465 = vrot.slane %v1420, 3
    %v1466 = vsel %vm615, %v1465, %v1464
    %v1467 = vrot.slane %v1421, 2
    %v1468 = vsel %vm618, %v1467, %v1466
    %v1469 = vrot.slane %v1422, 1
    %v1470 = vsel %vm621, %v1469, %v1468
    %v1473 = vsel %vm1426, %v1456, %v1056
    %v1474 = vsel %vm1426, %v1470, %v1057
    %v1475 = vld [vmem:[%s3 + $0x4] sm:$0x1]
    %s1476 = scalar_lea.vmem [#allocation5], 64
    %v1477 = vld [vmem:[%s1476] sm:$0xff]
    %v1478 = vld [vmem:[%s1476 + $0x8] sm:$0xff]
    %v1479 = vmax.f32 %v1477, %v1478
    %v1480 = vrot.slane %v1479, 4
    %v1481 = vmax.f32 %v1479, %v1480
    %v1482 = vrot.slane %v1481, 2
    %v1483 = vmax.f32 %v1481, %v1482
    %v1484 = vrot.slane %v1483, 1
    %v1485 = vmax.f32 %v1483, %v1484
    %vm1486 = vcmp.eq.f32.partialorder %v1477, %v1485
    %vm1487 = vcmp.eq.f32.partialorder %v1478, %v1485
    %v1488 = vsel %vm1486, %v84, 16
    %v1489 = vsel %vm1487, %v85, 16
    %vm1490 = vcmp.lt.s32.totalorder %v1488, %v1489
    %v1491 = vsel %vm1490, %v1488, %v1489
    %v1492 = vrot.slane %v1491, 4
    %vm1493 = vcmp.lt.s32.totalorder %v1491, %v1492
    %v1494 = vsel %vm1493, %v1491, %v1492
    %v1495 = vrot.slane %v1494, 2
    %vm1496 = vcmp.lt.s32.totalorder %v1494, %v1495
    %v1497 = vsel %vm1496, %v1494, %v1495
    %v1498 = vrot.slane %v1497, 1
    %vm1499 = vcmp.lt.s32.totalorder %v1497, %v1498
    %v1500 = vsel %vm1499, %v1497, %v1498
    %1501 = vst [vmem:[#allocation9 + $0x4] sm:$0x1] %v1500
    %v1502 = vld [vmem:[%s2 + $0x4] sm:$0x1]
    %v1503 = vperm.slane %v1502, 0
    %vm1504 = vcmp.eq.s32.totalorder %v84, %v1503
    %vm1505 = vcmp.eq.s32.totalorder %v85, %v1503
    %v1506 = vsel %vm1504, 1, 0
    %v1507 = vsel %vm1505, 1, 0
    %v1508 = vcvt.s32.f32 %v1506
    %v1509 = vcvt.s32.f32 %v1507
    %s1510 = scalar_lea.vmem [#allocation2], 64
    %v1511 = vld [vmem:[%s1510] sm:$0xff]
    %v1512 = vld [vmem:[%s1510 + $0x8] sm:$0xff]
    %v1513 = vmul.f32 %v1511, %v1508
    %v1514 = vmul.f32 %v1512, %v1509
    %v1515 = vadd.f32 %v1513, %v1514
    %v1516 = vrot.slane %v1515, 4
    %v1517 = vadd.f32 %v1515, %v1516
    %v1518 = vrot.slane %v1517, 2
    %v1519 = vadd.f32 %v1517, %v1518
    %v1520 = vrot.slane %v1519, 1
    %v1521 = vadd.f32 %v1519, %v1520
    %v1522 = vmul.f32 %v1508, %v139
    %v1523 = vmul.f32 %v1509, %v144
    %v1524 = vadd.f32 %v1522, %v1523
    %v1525 = vrot.slane %v1524, 4
    %v1526 = vadd.f32 %v1524, %v1525
    %v1527 = vrot.slane %v1526, 2
    %v1528 = vadd.f32 %v1526, %v1527
    %v1529 = vrot.slane %v1528, 1
    %v1530 = vadd.f32 %v1528, %v1529
    %v1531 = vld [vmem:[%s4 + $0x3] sm:$0x1]
    %v1532 = vadd.f32 %v1531, %v1521
    %v1533 = vmul.f32 %v1532, %v1475
    %v1534 = vadd.f32 %v1121, %v1533
    %v1535 = vmul.f32 %v1113, %v1058
    %v1536 = vsub.f32 1.0, %v1475
    %v1537 = vmul.f32 %v1535, %v1536
    %v1538 = vadd.f32 %v1534, %v1537
    %v1539 = vmax.f32 %v1473, %v1474
    %v1540 = vrot.slane %v1539, 4
    %v1541 = vmax.f32 %v1539, %v1540
    %v1542 = vrot.slane %v1541, 2
    %v1543 = vmax.f32 %v1541, %v1542
    %v1544 = vrot.slane %v1543, 1
    %v1545 = vmax.f32 %v1543, %v1544
    %v1546 = vsub.f32 %v1473, %v1545
    %v1547 = vsub.f32 %v1474, %v1545
    %v1548 = vmul.f32 %v1546, 1.442695
    %v1549 = vpow.pop %v1548
    %v1550 = vmul.f32 %v1547, 1.442695
    %v1551 = vpow.pop %v1550
    %v1552 = vld [vmem:[#allocation7] sm:$0xff]
    %v1553 = vld [vmem:[#allocation7 + $0x8] sm:$0xff]
    %v1554 = vld [vmem:[#allocation7 + $0x10] sm:$0xff]
    %v1555 = vld [vmem:[#allocation7 + $0x18] sm:$0xff]
    %v1556 = vld [vmem:[#allocation7 + $0x20] sm:$0xff]
    %v1557 = vld [vmem:[#allocation7 + $0x28] sm:$0xff]
    %v1558 = vld [vmem:[#allocation7 + $0x30] sm:$0xff]
    %v1559 = vld [vmem:[#allocation7 + $0x38] sm:$0xff]
    %v1560 = vld [vmem:[#allocation7 + $0x40] sm:$0xff]
    %v1561 = vld [vmem:[#allocation7 + $0x48] sm:$0xff]
    %v1562 = vld [vmem:[#allocation7 + $0x50] sm:$0xff]
    %v1563 = vld [vmem:[#allocation7 + $0x58] sm:$0xff]
    %v1564 = vld [vmem:[#allocation7 + $0x60] sm:$0xff]
    %v1565 = vld [vmem:[#allocation7 + $0x68] sm:$0xff]
    %v1566 = vld [vmem:[#allocation7 + $0x70] sm:$0xff]
    %v1567 = vld [vmem:[#allocation7 + $0x78] sm:$0xff]
    %v1568 = vld [vmem:[#allocation7 + $0x80] sm:$0xff]
    %v1569 = vld [vmem:[#allocation7 + $0x88] sm:$0xff]
    %v1570 = vld [vmem:[#allocation7 + $0x90] sm:$0xff]
    %v1571 = vld [vmem:[#allocation7 + $0x98] sm:$0xff]
    %v1572 = vld [vmem:[#allocation7 + $0xa0] sm:$0xff]
    %v1573 = vld [vmem:[#allocation7 + $0xa8] sm:$0xff]
    %v1574 = vld [vmem:[#allocation7 + $0xb0] sm:$0xff]
    %v1575 = vld [vmem:[#allocation7 + $0xb8] sm:$0xff]
    %v1576 = vld [vmem:[#allocation7 + $0xc0] sm:$0xff]
    %v1577 = vld [vmem:[#allocation7 + $0xc8] sm:$0xff]
    %v1578 = vld [vmem:[#allocation7 + $0xd0] sm:$0xff]
    %v1579 = vld [vmem:[#allocation7 + $0xd8] sm:$0xff]
    %v1580 = vld [vmem:[#allocation7 + $0xe0] sm:$0xff]
    %v1581 = vld [vmem:[#allocation7 + $0xe8] sm:$0xff]
    %v1582 = vld [vmem:[#allocation7 + $0xf0] sm:$0xff]
    %v1583 = vld [vmem:[#allocation7 + $0xf8] sm:$0xff]
    %v1584 = vmul.f32 %v1549, %v1552
    %v1585 = vmul.f32 %v1551, %v1553
    %v1586 = vmul.f32 %v1549, %v1554
    %v1587 = vmul.f32 %v1551, %v1555
    %v1588 = vmul.f32 %v1549, %v1556
    %v1589 = vmul.f32 %v1551, %v1557
    %v1590 = vmul.f32 %v1549, %v1558
    %v1591 = vmul.f32 %v1551, %v1559
    %v1592 = vmul.f32 %v1549, %v1560
    %v1593 = vmul.f32 %v1551, %v1561
    %v1594 = vmul.f32 %v1549, %v1562
    %v1595 = vmul.f32 %v1551, %v1563
    %v1596 = vmul.f32 %v1549, %v1564
    %v1597 = vmul.f32 %v1551, %v1565
    %v1598 = vmul.f32 %v1549, %v1566
    %v1599 = vmul.f32 %v1551, %v1567
    %v1600 = vmul.f32 %v1549, %v1568
    %v1601 = vmul.f32 %v1551, %v1569
    %v1602 = vmul.f32 %v1549, %v1570
    %v1603 = vmul.f32 %v1551, %v1571
    %v1604 = vmul.f32 %v1549, %v1572
    %v1605 = vmul.f32 %v1551, %v1573
    %v1606 = vmul.f32 %v1549, %v1574
    %v1607 = vmul.f32 %v1551, %v1575
    %v1608 = vmul.f32 %v1549, %v1576
    %v1609 = vmul.f32 %v1551, %v1577
    %v1610 = vmul.f32 %v1549, %v1578
    %v1611 = vmul.f32 %v1551, %v1579
    %v1612 = vmul.f32 %v1549, %v1580
    %v1613 = vmul.f32 %v1551, %v1581
    %v1614 = vmul.f32 %v1549, %v1582
    %v1615 = vmul.f32 %v1551, %v1583
    %v1616 = vadd.f32 %v1584, %v1585
    %v1617 = vrot.slane %v1616, 4
    %v1618 = vadd.f32 %v1616, %v1617
    %v1619 = vrot.slane %v1618, 2
    %v1620 = vadd.f32 %v1618, %v1619
    %v1621 = vrot.slane %v1620, 1
    %v1622 = vadd.f32 %v1620, %v1621
    %v1623 = vadd.f32 %v1586, %v1587
    %v1624 = vrot.slane %v1623, 4
    %v1625 = vadd.f32 %v1623, %v1624
    %v1626 = vrot.slane %v1625, 2
    %v1627 = vadd.f32 %v1625, %v1626
    %v1628 = vrot.slane %v1627, 1
    %v1629 = vadd.f32 %v1627, %v1628
    %v1630 = vadd.f32 %v1588, %v1589
    %v1631 = vrot.slane %v1630, 4
    %v1632 = vadd.f32 %v1630, %v1631
    %v1633 = vrot.slane %v1632, 2
    %v1634 = vadd.f32 %v1632, %v1633
    %v1635 = vrot.slane %v1634, 1
    %v1636 = vadd.f32 %v1634, %v1635
    %v1637 = vadd.f32 %v1590, %v1591
    %v1638 = vrot.slane %v1637, 4
    %v1639 = vadd.f32 %v1637, %v1638
    %v1640 = vrot.slane %v1639, 2
    %v1641 = vadd.f32 %v1639, %v1640
    %v1642 = vrot.slane %v1641, 1
    %v1643 = vadd.f32 %v1641, %v1642
    %v1644 = vadd.f32 %v1592, %v1593
    %v1645 = vrot.slane %v1644, 4
    %v1646 = vadd.f32 %v1644, %v1645
    %v1647 = vrot.slane %v1646, 2
    %v1648 = vadd.f32 %v1646, %v1647
    %v1649 = vrot.slane %v1648, 1
    %v1650 = vadd.f32 %v1648, %v1649
    %v1651 = vadd.f32 %v1594, %v1595
    %v1652 = vrot.slane %v1651, 4
    %v1653 = vadd.f32 %v1651, %v1652
    %v1654 = vrot.slane %v1653, 2
    %v1655 = vadd.f32 %v1653, %v1654
    %v1656 = vrot.slane %v1655, 1
    %v1657 = vadd.f32 %v1655, %v1656
    %v1658 = vadd.f32 %v1596, %v1597
    %v1659 = vrot.slane %v1658, 4
    %v1660 = vadd.f32 %v1658, %v1659
    %v1661 = vrot.slane %v1660, 2
    %v1662 = vadd.f32 %v1660, %v1661
    %v1663 = vrot.slane %v1662, 1
    %v1664 = vadd.f32 %v1662, %v1663
    %v1665 = vadd.f32 %v1598, %v1599
    %v1666 = vrot.slane %v1665, 4
    %v1667 = vadd.f32 %v1665, %v1666
    %v1668 = vrot.slane %v1667, 2
    %v1669 = vadd.f32 %v1667, %v1668
    %v1670 = vrot.slane %v1669, 1
    %v1671 = vadd.f32 %v1669, %v1670
    %v1672 = vadd.f32 %v1600, %v1601
    %v1673 = vrot.slane %v1672, 4
    %v1674 = vadd.f32 %v1672, %v1673
    %v1675 = vrot.slane %v1674, 2
    %v1676 = vadd.f32 %v1674, %v1675
    %v1677 = vrot.slane %v1676, 1
    %v1678 = vadd.f32 %v1676, %v1677
    %v1679 = vadd.f32 %v1602, %v1603
    %v1680 = vrot.slane %v1679, 4
    %v1681 = vadd.f32 %v1679, %v1680
    %v1682 = vrot.slane %v1681, 2
    %v1683 = vadd.f32 %v1681, %v1682
    %v1684 = vrot.slane %v1683, 1
    %v1685 = vadd.f32 %v1683, %v1684
    %v1686 = vadd.f32 %v1604, %v1605
    %v1687 = vrot.slane %v1686, 4
    %v1688 = vadd.f32 %v1686, %v1687
    %v1689 = vrot.slane %v1688, 2
    %v1690 = vadd.f32 %v1688, %v1689
    %v1691 = vrot.slane %v1690, 1
    %v1692 = vadd.f32 %v1690, %v1691
    %v1693 = vadd.f32 %v1606, %v1607
    %v1694 = vrot.slane %v1693, 4
    %v1695 = vadd.f32 %v1693, %v1694
    %v1696 = vrot.slane %v1695, 2
    %v1697 = vadd.f32 %v1695, %v1696
    %v1698 = vrot.slane %v1697, 1
    %v1699 = vadd.f32 %v1697, %v1698
    %v1700 = vadd.f32 %v1608, %v1609
    %v1701 = vrot.slane %v1700, 4
    %v1702 = vadd.f32 %v1700, %v1701
    %v1703 = vrot.slane %v1702, 2
    %v1704 = vadd.f32 %v1702, %v1703
    %v1705 = vrot.slane %v1704, 1
    %v1706 = vadd.f32 %v1704, %v1705
    %v1707 = vadd.f32 %v1610, %v1611
    %v1708 = vrot.slane %v1707, 4
    %v1709 = vadd.f32 %v1707, %v1708
    %v1710 = vrot.slane %v1709, 2
    %v1711 = vadd.f32 %v1709, %v1710
    %v1712 = vrot.slane %v1711, 1
    %v1713 = vadd.f32 %v1711, %v1712
    %v1714 = vadd.f32 %v1612, %v1613
    %v1715 = vrot.slane %v1714, 4
    %v1716 = vadd.f32 %v1714, %v1715
    %v1717 = vrot.slane %v1716, 2
    %v1718 = vadd.f32 %v1716, %v1717
    %v1719 = vrot.slane %v1718, 1
    %v1720 = vadd.f32 %v1718, %v1719
    %v1721 = vadd.f32 %v1614, %v1615
    %v1722 = vrot.slane %v1721, 4
    %v1723 = vadd.f32 %v1721, %v1722
    %v1724 = vrot.slane %v1723, 2
    %v1725 = vadd.f32 %v1723, %v1724
    %v1726 = vrot.slane %v1725, 1
    %v1727 = vadd.f32 %v1725, %v1726
    %v1728 = vlog2.pop %v1622
    %v1729 = vmul.f32 %v1728, 0.6931472
    %v1730 = vlog2.pop %v1629
    %v1731 = vmul.f32 %v1730, 0.6931472
    %v1732 = vlog2.pop %v1636
    %v1733 = vmul.f32 %v1732, 0.6931472
    %v1734 = vlog2.pop %v1643
    %v1735 = vmul.f32 %v1734, 0.6931472
    %v1736 = vlog2.pop %v1650
    %v1737 = vmul.f32 %v1736, 0.6931472
    %v1738 = vlog2.pop %v1657
    %v1739 = vmul.f32 %v1738, 0.6931472
    %v1740 = vlog2.pop %v1664
    %v1741 = vmul.f32 %v1740, 0.6931472
    %v1742 = vlog2.pop %v1671
    %v1743 = vmul.f32 %v1742, 0.6931472
    %v1744 = vlog2.pop %v1678
    %v1745 = vmul.f32 %v1744, 0.6931472
    %v1746 = vlog2.pop %v1685
    %v1747 = vmul.f32 %v1746, 0.6931472
    %v1748 = vlog2.pop %v1692
    %v1749 = vmul.f32 %v1748, 0.6931472
    %v1750 = vlog2.pop %v1699
    %v1751 = vmul.f32 %v1750, 0.6931472
    %v1752 = vlog2.pop %v1706
    %v1753 = vmul.f32 %v1752, 0.6931472
    %v1754 = vlog2.pop %v1713
    %v1755 = vmul.f32 %v1754, 0.6931472
    %v1756 = vlog2.pop %v1720
    %v1757 = vmul.f32 %v1756, 0.6931472
    %v1758 = vlog2.pop %v1727
    %v1759 = vmul.f32 %v1758, 0.6931472
    %v1762 = vrot.slane %v1511, 1
    %v1763 = vrot.slane %v1511, 2
    %v1764 = vrot.slane %v1511, 3
    %v1765 = vrot.slane %v1511, 4
    %v1766 = vrot.slane %v1511, 5
    %v1767 = vrot.slane %v1511, 6
    %v1768 = vrot.slane %v1511, 7
    %v1769 = vrot.slane %v1512, 1
    %v1770 = vrot.slane %v1512, 2
    %v1771 = vrot.slane %v1512, 3
    %v1772 = vrot.slane %v1512, 4
    %v1773 = vrot.slane %v1512, 5
    %v1774 = vrot.slane %v1512, 6
    %v1775 = vrot.slane %v1512, 7
    %v1792 = vadd.f32 %v1729, %v1511
    %v1793 = vadd.f32 %v1731, %v1762
    %v1794 = vadd.f32 %v1733, %v1763
    %v1795 = vadd.f32 %v1735, %v1764
    %v1796 = vadd.f32 %v1737, %v1765
    %v1797 = vadd.f32 %v1739, %v1766
    %v1798 = vadd.f32 %v1741, %v1767
    %v1799 = vadd.f32 %v1743, %v1768
    %v1800 = vadd.f32 %v1745, %v1512
    %v1801 = vadd.f32 %v1747, %v1769
    %v1802 = vadd.f32 %v1749, %v1770
    %v1803 = vadd.f32 %v1751, %v1771
    %v1804 = vadd.f32 %v1753, %v1772
    %v1805 = vadd.f32 %v1755, %v1773
    %v1806 = vadd.f32 %v1757, %v1774
    %v1807 = vadd.f32 %v1759, %v1775
    %v1808 = vadd.f32 %v1792, %v1545
    %v1809 = vadd.f32 %v1793, %v1545
    %v1810 = vadd.f32 %v1794, %v1545
    %v1811 = vadd.f32 %v1795, %v1545
    %v1812 = vadd.f32 %v1796, %v1545
    %v1813 = vadd.f32 %v1797, %v1545
    %v1814 = vadd.f32 %v1798, %v1545
    %v1815 = vadd.f32 %v1799, %v1545
    %v1816 = vadd.f32 %v1800, %v1545
    %v1817 = vadd.f32 %v1801, %v1545
    %v1818 = vadd.f32 %v1802, %v1545
    %v1819 = vadd.f32 %v1803, %v1545
    %v1820 = vadd.f32 %v1804, %v1545
    %v1821 = vadd.f32 %v1805, %v1545
    %v1822 = vadd.f32 %v1806, %v1545
    %v1823 = vadd.f32 %v1807, %v1545
    %v1824 = vadd.f32 %v1808, %v531
    %v1825 = vadd.f32 %v1809, %v536
    %v1826 = vadd.f32 %v1810, %v537
    %v1827 = vadd.f32 %v1811, %v538
    %v1828 = vadd.f32 %v1812, %v539
    %v1829 = vadd.f32 %v1813, %v540
    %v1830 = vadd.f32 %v1814, %v541
    %v1831 = vadd.f32 %v1815, %v542
    %v1832 = vadd.f32 %v1816, %v535
    %v1833 = vadd.f32 %v1817, %v543
    %v1834 = vadd.f32 %v1818, %v544
    %v1835 = vadd.f32 %v1819, %v545
    %v1836 = vadd.f32 %v1820, %v546
    %v1837 = vadd.f32 %v1821, %v547
    %v1838 = vadd.f32 %v1822, %v548
    %v1839 = vadd.f32 %v1823, %v549
    %vm1840 = vcmp.gt.f32.partialorder %v1475, 0.0
    %v1841 = vsel %vm1840, 1, 0
    %v1842 = vperm.slane %v1841, 0
    %vm1843 = vcmp.eq.s32.totalorder %v1842, 1
    %v1860 = vrot.slane %v1825, 7
    %v1861 = vsel %vm603, %v1860, %v1824
    %v1862 = vrot.slane %v1826, 6
    %v1863 = vsel %vm606, %v1862, %v1861
    %v1864 = vrot.slane %v1827, 5
    %v1865 = vsel %vm609, %v1864, %v1863
    %v1866 = vrot.slane %v1828, 4
    %v1867 = vsel %vm612, %v1866, %v1865
    %v1868 = vrot.slane %v1829, 3
    %v1869 = vsel %vm615, %v1868, %v1867
    %v1870 = vrot.slane %v1830, 2
    %v1871 = vsel %vm618, %v1870, %v1869
    %v1872 = vrot.slane %v1831, 1
    %v1873 = vsel %vm621, %v1872, %v1871
    %v1874 = vrot.slane %v1833, 7
    %v1875 = vsel %vm603, %v1874, %v1832
    %v1876 = vrot.slane %v1834, 6
    %v1877 = vsel %vm606, %v1876, %v1875
    %v1878 = vrot.slane %v1835, 5
    %v1879 = vsel %vm609, %v1878, %v1877
    %v1880 = vrot.slane %v1836, 4
    %v1881 = vsel %vm612, %v1880, %v1879
    %v1882 = vrot.slane %v1837, 3
    %v1883 = vsel %vm615, %v1882, %v1881
    %v1884 = vrot.slane %v1838, 2
    %v1885 = vsel %vm618, %v1884, %v1883
    %v1886 = vrot.slane %v1839, 1
    %v1887 = vsel %vm621, %v1886, %v1885
    %v1890 = vsel %vm1843, %v1873, %v1473
    %v1891 = vsel %vm1843, %v1887, %v1474
    %v1892 = vld [vmem:[%s3 + $0x5] sm:$0x1]
    %s1893 = scalar_lea.vmem [#allocation5], 80
    %v1894 = vld [vmem:[%s1893] sm:$0xff]
    %v1895 = vld [vmem:[%s1893 + $0x8] sm:$0xff]
    %v1896 = vmax.f32 %v1894, %v1895
    %v1897 = vrot.slane %v1896, 4
    %v1898 = vmax.f32 %v1896, %v1897
    %v1899 = vrot.slane %v1898, 2
    %v1900 = vmax.f32 %v1898, %v1899
    %v1901 = vrot.slane %v1900, 1
    %v1902 = vmax.f32 %v1900, %v1901
    %vm1903 = vcmp.eq.f32.partialorder %v1894, %v1902
    %vm1904 = vcmp.eq.f32.partialorder %v1895, %v1902
    %v1905 = vsel %vm1903, %v84, 16
    %v1906 = vsel %vm1904, %v85, 16
    %vm1907 = vcmp.lt.s32.totalorder %v1905, %v1906
    %v1908 = vsel %vm1907, %v1905, %v1906
    %v1909 = vrot.slane %v1908, 4
    %vm1910 = vcmp.lt.s32.totalorder %v1908, %v1909
    %v1911 = vsel %vm1910, %v1908, %v1909
    %v1912 = vrot.slane %v1911, 2
    %vm1913 = vcmp.lt.s32.totalorder %v1911, %v1912
    %v1914 = vsel %vm1913, %v1911, %v1912
    %v1915 = vrot.slane %v1914, 1
    %vm1916 = vcmp.lt.s32.totalorder %v1914, %v1915
    %v1917 = vsel %vm1916, %v1914, %v1915
    %1918 = vst [vmem:[#allocation9 + $0x5] sm:$0x1] %v1917
    %v1919 = vld [vmem:[%s2 + $0x5] sm:$0x1]
    %v1920 = vperm.slane %v1919, 0
    %vm1921 = vcmp.eq.s32.totalorder %v84, %v1920
    %vm1922 = vcmp.eq.s32.totalorder %v85, %v1920
    %v1923 = vsel %vm1921, 1, 0
    %v1924 = vsel %vm1922, 1, 0
    %v1925 = vcvt.s32.f32 %v1923
    %v1926 = vcvt.s32.f32 %v1924
    %s1927 = scalar_lea.vmem [#allocation2], 80
    %v1928 = vld [vmem:[%s1927] sm:$0xff]
    %v1929 = vld [vmem:[%s1927 + $0x8] sm:$0xff]
    %v1930 = vmul.f32 %v1928, %v1925
    %v1931 = vmul.f32 %v1929, %v1926
    %v1932 = vadd.f32 %v1930, %v1931
    %v1933 = vrot.slane %v1932, 4
    %v1934 = vadd.f32 %v1932, %v1933
    %v1935 = vrot.slane %v1934, 2
    %v1936 = vadd.f32 %v1934, %v1935
    %v1937 = vrot.slane %v1936, 1
    %v1938 = vadd.f32 %v1936, %v1937
    %v1939 = vmul.f32 %v1925, %v139
    %v1940 = vmul.f32 %v1926, %v144
    %v1941 = vadd.f32 %v1939, %v1940
    %v1942 = vrot.slane %v1941, 4
    %v1943 = vadd.f32 %v1941, %v1942
    %v1944 = vrot.slane %v1943, 2
    %v1945 = vadd.f32 %v1943, %v1944
    %v1946 = vrot.slane %v1945, 1
    %v1947 = vadd.f32 %v1945, %v1946
    %v1948 = vld [vmem:[%s4 + $0x4] sm:$0x1]
    %v1949 = vadd.f32 %v1948, %v1938
    %v1950 = vmul.f32 %v1949, %v1892
    %v1951 = vadd.f32 %v1538, %v1950
    %v1952 = vmul.f32 %v1530, %v1475
    %v1953 = vsub.f32 1.0, %v1892
    %v1954 = vmul.f32 %v1952, %v1953
    %v1955 = vadd.f32 %v1951, %v1954
    %v1956 = vmax.f32 %v1890, %v1891
    %v1957 = vrot.slane %v1956, 4
    %v1958 = vmax.f32 %v1956, %v1957
    %v1959 = vrot.slane %v1958, 2
    %v1960 = vmax.f32 %v1958, %v1959
    %v1961 = vrot.slane %v1960, 1
    %v1962 = vmax.f32 %v1960, %v1961
    %v1963 = vsub.f32 %v1890, %v1962
    %v1964 = vsub.f32 %v1891, %v1962
    %v1965 = vmul.f32 %v1963, 1.442695
    %v1966 = vpow.pop %v1965
    %v1967 = vmul.f32 %v1964, 1.442695
    %v1968 = vpow.pop %v1967
    %v1969 = vld [vmem:[#allocation7] sm:$0xff]
    %v1970 = vld [vmem:[#allocation7 + $0x8] sm:$0xff]
    %v1971 = vld [vmem:[#allocation7 + $0x10] sm:$0xff]
    %v1972 = vld [vmem:[#allocation7 + $0x18] sm:$0xff]
    %v1973 = vld [vmem:[#allocation7 + $0x20] sm:$0xff]
    %v1974 = vld [vmem:[#allocation7 + $0x28] sm:$0xff]
    %v1975 = vld [vmem:[#allocation7 + $0x30] sm:$0xff]
    %v1976 = vld [vmem:[#allocation7 + $0x38] sm:$0xff]
    %v1977 = vld [vmem:[#allocation7 + $0x40] sm:$0xff]
    %v1978 = vld [vmem:[#allocation7 + $0x48] sm:$0xff]
    %v1979 = vld [vmem:[#allocation7 + $0x50] sm:$0xff]
    %v1980 = vld [vmem:[#allocation7 + $0x58] sm:$0xff]
    %v1981 = vld [vmem:[#allocation7 + $0x60] sm:$0xff]
    %v1982 = vld [vmem:[#allocation7 + $0x68] sm:$0xff]
    %v1983 = vld [vmem:[#allocation7 + $0x70] sm:$0xff]
    %v1984 = vld [vmem:[#allocation7 + $0x78] sm:$0xff]
    %v1985 = vld [vmem:[#allocation7 + $0x80] sm:$0xff]
    %v1986 = vld [vmem:[#allocation7 + $0x88] sm:$0xff]
    %v1987 = vld [vmem:[#allocation7 + $0x90] sm:$0xff]
    %v1988 = vld [vmem:[#allocation7 + $0x98] sm:$0xff]
    %v1989 = vld [vmem:[#allocation7 + $0xa0] sm:$0xff]
    %v1990 = vld [vmem:[#allocation7 + $0xa8] sm:$0xff]
    %v1991 = vld [vmem:[#allocation7 + $0xb0] sm:$0xff]
    %v1992 = vld [vmem:[#allocation7 + $0xb8] sm:$0xff]
    %v1993 = vld [vmem:[#allocation7 + $0xc0] sm:$0xff]
    %v1994 = vld [vmem:[#allocation7 + $0xc8] sm:$0xff]
    %v1995 = vld [vmem:[#allocation7 + $0xd0] sm:$0xff]
    %v1996 = vld [vmem:[#allocation7 + $0xd8] sm:$0xff]
    %v1997 = vld [vmem:[#allocation7 + $0xe0] sm:$0xff]
    %v1998 = vld [vmem:[#allocation7 + $0xe8] sm:$0xff]
    %v1999 = vld [vmem:[#allocation7 + $0xf0] sm:$0xff]
    %v2000 = vld [vmem:[#allocation7 + $0xf8] sm:$0xff]
    %v2001 = vmul.f32 %v1966, %v1969
    %v2002 = vmul.f32 %v1968, %v1970
    %v2003 = vmul.f32 %v1966, %v1971
    %v2004 = vmul.f32 %v1968, %v1972
    %v2005 = vmul.f32 %v1966, %v1973
    %v2006 = vmul.f32 %v1968, %v1974
    %v2007 = vmul.f32 %v1966, %v1975
    %v2008 = vmul.f32 %v1968, %v1976
    %v2009 = vmul.f32 %v1966, %v1977
    %v2010 = vmul.f32 %v1968, %v1978
    %v2011 = vmul.f32 %v1966, %v1979
    %v2012 = vmul.f32 %v1968, %v1980
    %v2013 = vmul.f32 %v1966, %v1981
    %v2014 = vmul.f32 %v1968, %v1982
    %v2015 = vmul.f32 %v1966, %v1983
    %v2016 = vmul.f32 %v1968, %v1984
    %v2017 = vmul.f32 %v1966, %v1985
    %v2018 = vmul.f32 %v1968, %v1986
    %v2019 = vmul.f32 %v1966, %v1987
    %v2020 = vmul.f32 %v1968, %v1988
    %v2021 = vmul.f32 %v1966, %v1989
    %v2022 = vmul.f32 %v1968, %v1990
    %v2023 = vmul.f32 %v1966, %v1991
    %v2024 = vmul.f32 %v1968, %v1992
    %v2025 = vmul.f32 %v1966, %v1993
    %v2026 = vmul.f32 %v1968, %v1994
    %v2027 = vmul.f32 %v1966, %v1995
    %v2028 = vmul.f32 %v1968, %v1996
    %v2029 = vmul.f32 %v1966, %v1997
    %v2030 = vmul.f32 %v1968, %v1998
    %v2031 = vmul.f32 %v1966, %v1999
    %v2032 = vmul.f32 %v1968, %v2000
    %v2033 = vadd.f32 %v2001, %v2002
    %v2034 = vrot.slane %v2033, 4
    %v2035 = vadd.f32 %v2033, %v2034
    %v2036 = vrot.slane %v2035, 2
    %v2037 = vadd.f32 %v2035, %v2036
    %v2038 = vrot.slane %v2037, 1
    %v2039 = vadd.f32 %v2037, %v2038
    %v2040 = vadd.f32 %v2003, %v2004
    %v2041 = vrot.slane %v2040, 4
    %v2042 = vadd.f32 %v2040, %v2041
    %v2043 = vrot.slane %v2042, 2
    %v2044 = vadd.f32 %v2042, %v2043
    %v2045 = vrot.slane %v2044, 1
    %v2046 = vadd.f32 %v2044, %v2045
    %v2047 = vadd.f32 %v2005, %v2006
    %v2048 = vrot.slane %v2047, 4
    %v2049 = vadd.f32 %v2047, %v2048
    %v2050 = vrot.slane %v2049, 2
    %v2051 = vadd.f32 %v2049, %v2050
    %v2052 = vrot.slane %v2051, 1
    %v2053 = vadd.f32 %v2051, %v2052
    %v2054 = vadd.f32 %v2007, %v2008
    %v2055 = vrot.slane %v2054, 4
    %v2056 = vadd.f32 %v2054, %v2055
    %v2057 = vrot.slane %v2056, 2
    %v2058 = vadd.f32 %v2056, %v2057
    %v2059 = vrot.slane %v2058, 1
    %v2060 = vadd.f32 %v2058, %v2059
    %v2061 = vadd.f32 %v2009, %v2010
    %v2062 = vrot.slane %v2061, 4
    %v2063 = vadd.f32 %v2061, %v2062
    %v2064 = vrot.slane %v2063, 2
    %v2065 = vadd.f32 %v2063, %v2064
    %v2066 = vrot.slane %v2065, 1
    %v2067 = vadd.f32 %v2065, %v2066
    %v2068 = vadd.f32 %v2011, %v2012
    %v2069 = vrot.slane %v2068, 4
    %v2070 = vadd.f32 %v2068, %v2069
    %v2071 = vrot.slane %v2070, 2
    %v2072 = vadd.f32 %v2070, %v2071
    %v2073 = vrot.slane %v2072, 1
    %v2074 = vadd.f32 %v2072, %v2073
    %v2075 = vadd.f32 %v2013, %v2014
    %v2076 = vrot.slane %v2075, 4
    %v2077 = vadd.f32 %v2075, %v2076
    %v2078 = vrot.slane %v2077, 2
    %v2079 = vadd.f32 %v2077, %v2078
    %v2080 = vrot.slane %v2079, 1
    %v2081 = vadd.f32 %v2079, %v2080
    %v2082 = vadd.f32 %v2015, %v2016
    %v2083 = vrot.slane %v2082, 4
    %v2084 = vadd.f32 %v2082, %v2083
    %v2085 = vrot.slane %v2084, 2
    %v2086 = vadd.f32 %v2084, %v2085
    %v2087 = vrot.slane %v2086, 1
    %v2088 = vadd.f32 %v2086, %v2087
    %v2089 = vadd.f32 %v2017, %v2018
    %v2090 = vrot.slane %v2089, 4
    %v2091 = vadd.f32 %v2089, %v2090
    %v2092 = vrot.slane %v2091, 2
    %v2093 = vadd.f32 %v2091, %v2092
    %v2094 = vrot.slane %v2093, 1
    %v2095 = vadd.f32 %v2093, %v2094
    %v2096 = vadd.f32 %v2019, %v2020
    %v2097 = vrot.slane %v2096, 4
    %v2098 = vadd.f32 %v2096, %v2097
    %v2099 = vrot.slane %v2098, 2
    %v2100 = vadd.f32 %v2098, %v2099
    %v2101 = vrot.slane %v2100, 1
    %v2102 = vadd.f32 %v2100, %v2101
    %v2103 = vadd.f32 %v2021, %v2022
    %v2104 = vrot.slane %v2103, 4
    %v2105 = vadd.f32 %v2103, %v2104
    %v2106 = vrot.slane %v2105, 2
    %v2107 = vadd.f32 %v2105, %v2106
    %v2108 = vrot.slane %v2107, 1
    %v2109 = vadd.f32 %v2107, %v2108
    %v2110 = vadd.f32 %v2023, %v2024
    %v2111 = vrot.slane %v2110, 4
    %v2112 = vadd.f32 %v2110, %v2111
    %v2113 = vrot.slane %v2112, 2
    %v2114 = vadd.f32 %v2112, %v2113
    %v2115 = vrot.slane %v2114, 1
    %v2116 = vadd.f32 %v2114, %v2115
    %v2117 = vadd.f32 %v2025, %v2026
    %v2118 = vrot.slane %v2117, 4
    %v2119 = vadd.f32 %v2117, %v2118
    %v2120 = vrot.slane %v2119, 2
    %v2121 = vadd.f32 %v2119, %v2120
    %v2122 = vrot.slane %v2121, 1
    %v2123 = vadd.f32 %v2121, %v2122
    %v2124 = vadd.f32 %v2027, %v2028
    %v2125 = vrot.slane %v2124, 4
    %v2126 = vadd.f32 %v2124, %v2125
    %v2127 = vrot.slane %v2126, 2
    %v2128 = vadd.f32 %v2126, %v2127
    %v2129 = vrot.slane %v2128, 1
    %v2130 = vadd.f32 %v2128, %v2129
    %v2131 = vadd.f32 %v2029, %v2030
    %v2132 = vrot.slane %v2131, 4
    %v2133 = vadd.f32 %v2131, %v2132
    %v2134 = vrot.slane %v2133, 2
    %v2135 = vadd.f32 %v2133, %v2134
    %v2136 = vrot.slane %v2135, 1
    %v2137 = vadd.f32 %v2135, %v2136
    %v2138 = vadd.f32 %v2031, %v2032
    %v2139 = vrot.slane %v2138, 4
    %v2140 = vadd.f32 %v2138, %v2139
    %v2141 = vrot.slane %v2140, 2
    %v2142 = vadd.f32 %v2140, %v2141
    %v2143 = vrot.slane %v2142, 1
    %v2144 = vadd.f32 %v2142, %v2143
    %v2145 = vlog2.pop %v2039
    %v2146 = vmul.f32 %v2145, 0.6931472
    %v2147 = vlog2.pop %v2046
    %v2148 = vmul.f32 %v2147, 0.6931472
    %v2149 = vlog2.pop %v2053
    %v2150 = vmul.f32 %v2149, 0.6931472
    %v2151 = vlog2.pop %v2060
    %v2152 = vmul.f32 %v2151, 0.6931472
    %v2153 = vlog2.pop %v2067
    %v2154 = vmul.f32 %v2153, 0.6931472
    %v2155 = vlog2.pop %v2074
    %v2156 = vmul.f32 %v2155, 0.6931472
    %v2157 = vlog2.pop %v2081
    %v2158 = vmul.f32 %v2157, 0.6931472
    %v2159 = vlog2.pop %v2088
    %v2160 = vmul.f32 %v2159, 0.6931472
    %v2161 = vlog2.pop %v2095
    %v2162 = vmul.f32 %v2161, 0.6931472
    %v2163 = vlog2.pop %v2102
    %v2164 = vmul.f32 %v2163, 0.6931472
    %v2165 = vlog2.pop %v2109
    %v2166 = vmul.f32 %v2165, 0.6931472
    %v2167 = vlog2.pop %v2116
    %v2168 = vmul.f32 %v2167, 0.6931472
    %v2169 = vlog2.pop %v2123
    %v2170 = vmul.f32 %v2169, 0.6931472
    %v2171 = vlog2.pop %v2130
    %v2172 = vmul.f32 %v2171, 0.6931472
    %v2173 = vlog2.pop %v2137
    %v2174 = vmul.f32 %v2173, 0.6931472
    %v2175 = vlog2.pop %v2144
    %v2176 = vmul.f32 %v2175, 0.6931472
    %v2179 = vrot.slane %v1928, 1
    %v2180 = vrot.slane %v1928, 2
    %v2181 = vrot.slane %v1928, 3
    %v2182 = vrot.slane %v1928, 4
    %v2183 = vrot.slane %v1928, 5
    %v2184 = vrot.slane %v1928, 6
    %v2185 = vrot.slane %v1928, 7
    %v2186 = vrot.slane %v1929, 1
    %v2187 = vrot.slane %v1929, 2
    %v2188 = vrot.slane %v1929, 3
    %v2189 = vrot.slane %v1929, 4
    %v2190 = vrot.slane %v1929, 5
    %v2191 = vrot.slane %v1929, 6
    %v2192 = vrot.slane %v1929, 7
    %v2209 = vadd.f32 %v2146, %v1928
    %v2210 = vadd.f32 %v2148, %v2179
    %v2211 = vadd.f32 %v2150, %v2180
    %v2212 = vadd.f32 %v2152, %v2181
    %v2213 = vadd.f32 %v2154, %v2182
    %v2214 = vadd.f32 %v2156, %v2183
    %v2215 = vadd.f32 %v2158, %v2184
    %v2216 = vadd.f32 %v2160, %v2185
    %v2217 = vadd.f32 %v2162, %v1929
    %v2218 = vadd.f32 %v2164, %v2186
    %v2219 = vadd.f32 %v2166, %v2187
    %v2220 = vadd.f32 %v2168, %v2188
    %v2221 = vadd.f32 %v2170, %v2189
    %v2222 = vadd.f32 %v2172, %v2190
    %v2223 = vadd.f32 %v2174, %v2191
    %v2224 = vadd.f32 %v2176, %v2192
    %v2225 = vadd.f32 %v2209, %v1962
    %v2226 = vadd.f32 %v2210, %v1962
    %v2227 = vadd.f32 %v2211, %v1962
    %v2228 = vadd.f32 %v2212, %v1962
    %v2229 = vadd.f32 %v2213, %v1962
    %v2230 = vadd.f32 %v2214, %v1962
    %v2231 = vadd.f32 %v2215, %v1962
    %v2232 = vadd.f32 %v2216, %v1962
    %v2233 = vadd.f32 %v2217, %v1962
    %v2234 = vadd.f32 %v2218, %v1962
    %v2235 = vadd.f32 %v2219, %v1962
    %v2236 = vadd.f32 %v2220, %v1962
    %v2237 = vadd.f32 %v2221, %v1962
    %v2238 = vadd.f32 %v2222, %v1962
    %v2239 = vadd.f32 %v2223, %v1962
    %v2240 = vadd.f32 %v2224, %v1962
    %v2241 = vadd.f32 %v2225, %v531
    %v2242 = vadd.f32 %v2226, %v536
    %v2243 = vadd.f32 %v2227, %v537
    %v2244 = vadd.f32 %v2228, %v538
    %v2245 = vadd.f32 %v2229, %v539
    %v2246 = vadd.f32 %v2230, %v540
    %v2247 = vadd.f32 %v2231, %v541
    %v2248 = vadd.f32 %v2232, %v542
    %v2249 = vadd.f32 %v2233, %v535
    %v2250 = vadd.f32 %v2234, %v543
    %v2251 = vadd.f32 %v2235, %v544
    %v2252 = vadd.f32 %v2236, %v545
    %v2253 = vadd.f32 %v2237, %v546
    %v2254 = vadd.f32 %v2238, %v547
    %v2255 = vadd.f32 %v2239, %v548
    %v2256 = vadd.f32 %v2240, %v549
    %vm2257 = vcmp.gt.f32.partialorder %v1892, 0.0
    %v2258 = vsel %vm2257, 1, 0
    %v2259 = vperm.slane %v2258, 0
    %vm2260 = vcmp.eq.s32.totalorder %v2259, 1
    %v2277 = vrot.slane %v2242, 7
    %v2278 = vsel %vm603, %v2277, %v2241
    %v2279 = vrot.slane %v2243, 6
    %v2280 = vsel %vm606, %v2279, %v2278
    %v2281 = vrot.slane %v2244, 5
    %v2282 = vsel %vm609, %v2281, %v2280
    %v2283 = vrot.slane %v2245, 4
    %v2284 = vsel %vm612, %v2283, %v2282
    %v2285 = vrot.slane %v2246, 3
    %v2286 = vsel %vm615, %v2285, %v2284
    %v2287 = vrot.slane %v2247, 2
    %v2288 = vsel %vm618, %v2287, %v2286
    %v2289 = vrot.slane %v2248, 1
    %v2290 = vsel %vm621, %v2289, %v2288
    %v2291 = vrot.slane %v2250, 7
    %v2292 = vsel %vm603, %v2291, %v2249
    %v2293 = vrot.slane %v2251, 6
    %v2294 = vsel %vm606, %v2293, %v2292
    %v2295 = vrot.slane %v2252, 5
    %v2296 = vsel %vm609, %v2295, %v2294
    %v2297 = vrot.slane %v2253, 4
    %v2298 = vsel %vm612, %v2297, %v2296
    %v2299 = vrot.slane %v2254, 3
    %v2300 = vsel %vm615, %v2299, %v2298
    %v2301 = vrot.slane %v2255, 2
    %v2302 = vsel %vm618, %v2301, %v2300
    %v2303 = vrot.slane %v2256, 1
    %v2304 = vsel %vm621, %v2303, %v2302
    %v2307 = vsel %vm2260, %v2290, %v1890
    %v2308 = vsel %vm2260, %v2304, %v1891
    %v2309 = vld [vmem:[%s3 + $0x6] sm:$0x1]
    %s2310 = scalar_lea.vmem [#allocation5], 96
    %v2311 = vld [vmem:[%s2310] sm:$0xff]
    %v2312 = vld [vmem:[%s2310 + $0x8] sm:$0xff]
    %v2313 = vmax.f32 %v2311, %v2312
    %v2314 = vrot.slane %v2313, 4
    %v2315 = vmax.f32 %v2313, %v2314
    %v2316 = vrot.slane %v2315, 2
    %v2317 = vmax.f32 %v2315, %v2316
    %v2318 = vrot.slane %v2317, 1
    %v2319 = vmax.f32 %v2317, %v2318
    %vm2320 = vcmp.eq.f32.partialorder %v2311, %v2319
    %vm2321 = vcmp.eq.f32.partialorder %v2312, %v2319
    %v2322 = vsel %vm2320, %v84, 16
    %v2323 = vsel %vm2321, %v85, 16
    %vm2324 = vcmp.lt.s32.totalorder %v2322, %v2323
    %v2325 = vsel %vm2324, %v2322, %v2323
    %v2326 = vrot.slane %v2325, 4
    %vm2327 = vcmp.lt.s32.totalorder %v2325, %v2326
    %v2328 = vsel %vm2327, %v2325, %v2326
    %v2329 = vrot.slane %v2328, 2
    %vm2330 = vcmp.lt.s32.totalorder %v2328, %v2329
    %v2331 = vsel %vm2330, %v2328, %v2329
    %v2332 = vrot.slane %v2331, 1
    %vm2333 = vcmp.lt.s32.totalorder %v2331, %v2332
    %v2334 = vsel %vm2333, %v2331, %v2332
    %2335 = vst [vmem:[#allocation9 + $0x6] sm:$0x1] %v2334
    %v2336 = vld [vmem:[%s2 + $0x6] sm:$0x1]
    %v2337 = vperm.slane %v2336, 0
    %vm2338 = vcmp.eq.s32.totalorder %v84, %v2337
    %vm2339 = vcmp.eq.s32.totalorder %v85, %v2337
    %v2340 = vsel %vm2338, 1, 0
    %v2341 = vsel %vm2339, 1, 0
    %v2342 = vcvt.s32.f32 %v2340
    %v2343 = vcvt.s32.f32 %v2341
    %s2344 = scalar_lea.vmem [#allocation2], 96
    %v2345 = vld [vmem:[%s2344] sm:$0xff]
    %v2346 = vld [vmem:[%s2344 + $0x8] sm:$0xff]
    %v2347 = vmul.f32 %v2345, %v2342
    %v2348 = vmul.f32 %v2346, %v2343
    %v2349 = vadd.f32 %v2347, %v2348
    %v2350 = vrot.slane %v2349, 4
    %v2351 = vadd.f32 %v2349, %v2350
    %v2352 = vrot.slane %v2351, 2
    %v2353 = vadd.f32 %v2351, %v2352
    %v2354 = vrot.slane %v2353, 1
    %v2355 = vadd.f32 %v2353, %v2354
    %v2356 = vmul.f32 %v2342, %v139
    %v2357 = vmul.f32 %v2343, %v144
    %v2358 = vadd.f32 %v2356, %v2357
    %v2359 = vrot.slane %v2358, 4
    %v2360 = vadd.f32 %v2358, %v2359
    %v2361 = vrot.slane %v2360, 2
    %v2362 = vadd.f32 %v2360, %v2361
    %v2363 = vrot.slane %v2362, 1
    %v2364 = vadd.f32 %v2362, %v2363
    %v2365 = vld [vmem:[%s4 + $0x5] sm:$0x1]
    %v2366 = vadd.f32 %v2365, %v2355
    %v2367 = vmul.f32 %v2366, %v2309
    %v2368 = vadd.f32 %v1955, %v2367
    %v2369 = vmul.f32 %v1947, %v1892
    %v2370 = vsub.f32 1.0, %v2309
    %v2371 = vmul.f32 %v2369, %v2370
    %v2372 = vadd.f32 %v2368, %v2371
    %v2373 = vmax.f32 %v2307, %v2308
    %v2374 = vrot.slane %v2373, 4
    %v2375 = vmax.f32 %v2373, %v2374
    %v2376 = vrot.slane %v2375, 2
    %v2377 = vmax.f32 %v2375, %v2376
    %v2378 = vrot.slane %v2377, 1
    %v2379 = vmax.f32 %v2377, %v2378
    %v2380 = vsub.f32 %v2307, %v2379
    %v2381 = vsub.f32 %v2308, %v2379
    %v2382 = vmul.f32 %v2380, 1.442695
    %v2383 = vpow.pop %v2382
    %v2384 = vmul.f32 %v2381, 1.442695
    %v2385 = vpow.pop %v2384
    %v2386 = vld [vmem:[#allocation7] sm:$0xff]
    %v2387 = vld [vmem:[#allocation7 + $0x8] sm:$0xff]
    %v2388 = vld [vmem:[#allocation7 + $0x10] sm:$0xff]
    %v2389 = vld [vmem:[#allocation7 + $0x18] sm:$0xff]
    %v2390 = vld [vmem:[#allocation7 + $0x20] sm:$0xff]
    %v2391 = vld [vmem:[#allocation7 + $0x28] sm:$0xff]
    %v2392 = vld [vmem:[#allocation7 + $0x30] sm:$0xff]
    %v2393 = vld [vmem:[#allocation7 + $0x38] sm:$0xff]
    %v2394 = vld [vmem:[#allocation7 + $0x40] sm:$0xff]
    %v2395 = vld [vmem:[#allocation7 + $0x48] sm:$0xff]
    %v2396 = vld [vmem:[#allocation7 + $0x50] sm:$0xff]
    %v2397 = vld [vmem:[#allocation7 + $0x58] sm:$0xff]
    %v2398 = vld [vmem:[#allocation7 + $0x60] sm:$0xff]
    %v2399 = vld [vmem:[#allocation7 + $0x68] sm:$0xff]
    %v2400 = vld [vmem:[#allocation7 + $0x70] sm:$0xff]
    %v2401 = vld [vmem:[#allocation7 + $0x78] sm:$0xff]
    %v2402 = vld [vmem:[#allocation7 + $0x80] sm:$0xff]
    %v2403 = vld [vmem:[#allocation7 + $0x88] sm:$0xff]
    %v2404 = vld [vmem:[#allocation7 + $0x90] sm:$0xff]
    %v2405 = vld [vmem:[#allocation7 + $0x98] sm:$0xff]
    %v2406 = vld [vmem:[#allocation7 + $0xa0] sm:$0xff]
    %v2407 = vld [vmem:[#allocation7 + $0xa8] sm:$0xff]
    %v2408 = vld [vmem:[#allocation7 + $0xb0] sm:$0xff]
    %v2409 = vld [vmem:[#allocation7 + $0xb8] sm:$0xff]
    %v2410 = vld [vmem:[#allocation7 + $0xc0] sm:$0xff]
    %v2411 = vld [vmem:[#allocation7 + $0xc8] sm:$0xff]
    %v2412 = vld [vmem:[#allocation7 + $0xd0] sm:$0xff]
    %v2413 = vld [vmem:[#allocation7 + $0xd8] sm:$0xff]
    %v2414 = vld [vmem:[#allocation7 + $0xe0] sm:$0xff]
    %v2415 = vld [vmem:[#allocation7 + $0xe8] sm:$0xff]
    %v2416 = vld [vmem:[#allocation7 + $0xf0] sm:$0xff]
    %v2417 = vld [vmem:[#allocation7 + $0xf8] sm:$0xff]
    %v2418 = vmul.f32 %v2383, %v2386
    %v2419 = vmul.f32 %v2385, %v2387
    %v2420 = vmul.f32 %v2383, %v2388
    %v2421 = vmul.f32 %v2385, %v2389
    %v2422 = vmul.f32 %v2383, %v2390
    %v2423 = vmul.f32 %v2385, %v2391
    %v2424 = vmul.f32 %v2383, %v2392
    %v2425 = vmul.f32 %v2385, %v2393
    %v2426 = vmul.f32 %v2383, %v2394
    %v2427 = vmul.f32 %v2385, %v2395
    %v2428 = vmul.f32 %v2383, %v2396
    %v2429 = vmul.f32 %v2385, %v2397
    %v2430 = vmul.f32 %v2383, %v2398
    %v2431 = vmul.f32 %v2385, %v2399
    %v2432 = vmul.f32 %v2383, %v2400
    %v2433 = vmul.f32 %v2385, %v2401
    %v2434 = vmul.f32 %v2383, %v2402
    %v2435 = vmul.f32 %v2385, %v2403
    %v2436 = vmul.f32 %v2383, %v2404
    %v2437 = vmul.f32 %v2385, %v2405
    %v2438 = vmul.f32 %v2383, %v2406
    %v2439 = vmul.f32 %v2385, %v2407
    %v2440 = vmul.f32 %v2383, %v2408
    %v2441 = vmul.f32 %v2385, %v2409
    %v2442 = vmul.f32 %v2383, %v2410
    %v2443 = vmul.f32 %v2385, %v2411
    %v2444 = vmul.f32 %v2383, %v2412
    %v2445 = vmul.f32 %v2385, %v2413
    %v2446 = vmul.f32 %v2383, %v2414
    %v2447 = vmul.f32 %v2385, %v2415
    %v2448 = vmul.f32 %v2383, %v2416
    %v2449 = vmul.f32 %v2385, %v2417
    %v2450 = vadd.f32 %v2418, %v2419
    %v2451 = vrot.slane %v2450, 4
    %v2452 = vadd.f32 %v2450, %v2451
    %v2453 = vrot.slane %v2452, 2
    %v2454 = vadd.f32 %v2452, %v2453
    %v2455 = vrot.slane %v2454, 1
    %v2456 = vadd.f32 %v2454, %v2455
    %v2457 = vadd.f32 %v2420, %v2421
    %v2458 = vrot.slane %v2457, 4
    %v2459 = vadd.f32 %v2457, %v2458
    %v2460 = vrot.slane %v2459, 2
    %v2461 = vadd.f32 %v2459, %v2460
    %v2462 = vrot.slane %v2461, 1
    %v2463 = vadd.f32 %v2461, %v2462
    %v2464 = vadd.f32 %v2422, %v2423
    %v2465 = vrot.slane %v2464, 4
    %v2466 = vadd.f32 %v2464, %v2465
    %v2467 = vrot.slane %v2466, 2
    %v2468 = vadd.f32 %v2466, %v2467
    %v2469 = vrot.slane %v2468, 1
    %v2470 = vadd.f32 %v2468, %v2469
    %v2471 = vadd.f32 %v2424, %v2425
    %v2472 = vrot.slane %v2471, 4
    %v2473 = vadd.f32 %v2471, %v2472
    %v2474 = vrot.slane %v2473, 2
    %v2475 = vadd.f32 %v2473, %v2474
    %v2476 = vrot.slane %v2475, 1
    %v2477 = vadd.f32 %v2475, %v2476
    %v2478 = vadd.f32 %v2426, %v2427
    %v2479 = vrot.slane %v2478, 4
    %v2480 = vadd.f32 %v2478, %v2479
    %v2481 = vrot.slane %v2480, 2
    %v2482 = vadd.f32 %v2480, %v2481
    %v2483 = vrot.slane %v2482, 1
    %v2484 = vadd.f32 %v2482, %v2483
    %v2485 = vadd.f32 %v2428, %v2429
    %v2486 = vrot.slane %v2485, 4
    %v2487 = vadd.f32 %v2485, %v2486
    %v2488 = vrot.slane %v2487, 2
    %v2489 = vadd.f32 %v2487, %v2488
    %v2490 = vrot.slane %v2489, 1
    %v2491 = vadd.f32 %v2489, %v2490
    %v2492 = vadd.f32 %v2430, %v2431
    %v2493 = vrot.slane %v2492, 4
    %v2494 = vadd.f32 %v2492, %v2493
    %v2495 = vrot.slane %v2494, 2
    %v2496 = vadd.f32 %v2494, %v2495
    %v2497 = vrot.slane %v2496, 1
    %v2498 = vadd.f32 %v2496, %v2497
    %v2499 = vadd.f32 %v2432, %v2433
    %v2500 = vrot.slane %v2499, 4
    %v2501 = vadd.f32 %v2499, %v2500
    %v2502 = vrot.slane %v2501, 2
    %v2503 = vadd.f32 %v2501, %v2502
    %v2504 = vrot.slane %v2503, 1
    %v2505 = vadd.f32 %v2503, %v2504
    %v2506 = vadd.f32 %v2434, %v2435
    %v2507 = vrot.slane %v2506, 4
    %v2508 = vadd.f32 %v2506, %v2507
    %v2509 = vrot.slane %v2508, 2
    %v2510 = vadd.f32 %v2508, %v2509
    %v2511 = vrot.slane %v2510, 1
    %v2512 = vadd.f32 %v2510, %v2511
    %v2513 = vadd.f32 %v2436, %v2437
    %v2514 = vrot.slane %v2513, 4
    %v2515 = vadd.f32 %v2513, %v2514
    %v2516 = vrot.slane %v2515, 2
    %v2517 = vadd.f32 %v2515, %v2516
    %v2518 = vrot.slane %v2517, 1
    %v2519 = vadd.f32 %v2517, %v2518
    %v2520 = vadd.f32 %v2438, %v2439
    %v2521 = vrot.slane %v2520, 4
    %v2522 = vadd.f32 %v2520, %v2521
    %v2523 = vrot.slane %v2522, 2
    %v2524 = vadd.f32 %v2522, %v2523
    %v2525 = vrot.slane %v2524, 1
    %v2526 = vadd.f32 %v2524, %v2525
    %v2527 = vadd.f32 %v2440, %v2441
    %v2528 = vrot.slane %v2527, 4
    %v2529 = vadd.f32 %v2527, %v2528
    %v2530 = vrot.slane %v2529, 2
    %v2531 = vadd.f32 %v2529, %v2530
    %v2532 = vrot.slane %v2531, 1
    %v2533 = vadd.f32 %v2531, %v2532
    %v2534 = vadd.f32 %v2442, %v2443
    %v2535 = vrot.slane %v2534, 4
    %v2536 = vadd.f32 %v2534, %v2535
    %v2537 = vrot.slane %v2536, 2
    %v2538 = vadd.f32 %v2536, %v2537
    %v2539 = vrot.slane %v2538, 1
    %v2540 = vadd.f32 %v2538, %v2539
    %v2541 = vadd.f32 %v2444, %v2445
    %v2542 = vrot.slane %v2541, 4
    %v2543 = vadd.f32 %v2541, %v2542
    %v2544 = vrot.slane %v2543, 2
    %v2545 = vadd.f32 %v2543, %v2544
    %v2546 = vrot.slane %v2545, 1
    %v2547 = vadd.f32 %v2545, %v2546
    %v2548 = vadd.f32 %v2446, %v2447
    %v2549 = vrot.slane %v2548, 4
    %v2550 = vadd.f32 %v2548, %v2549
    %v2551 = vrot.slane %v2550, 2
    %v2552 = vadd.f32 %v2550, %v2551
    %v2553 = vrot.slane %v2552, 1
    %v2554 = vadd.f32 %v2552, %v2553
    %v2555 = vadd.f32 %v2448, %v2449
    %v2556 = vrot.slane %v2555, 4
    %v2557 = vadd.f32 %v2555, %v2556
    %v2558 = vrot.slane %v2557, 2
    %v2559 = vadd.f32 %v2557, %v2558
    %v2560 = vrot.slane %v2559, 1
    %v2561 = vadd.f32 %v2559, %v2560
    %v2562 = vlog2.pop %v2456
    %v2563 = vmul.f32 %v2562, 0.6931472
    %v2564 = vlog2.pop %v2463
    %v2565 = vmul.f32 %v2564, 0.6931472
    %v2566 = vlog2.pop %v2470
    %v2567 = vmul.f32 %v2566, 0.6931472
    %v2568 = vlog2.pop %v2477
    %v2569 = vmul.f32 %v2568, 0.6931472
    %v2570 = vlog2.pop %v2484
    %v2571 = vmul.f32 %v2570, 0.6931472
    %v2572 = vlog2.pop %v2491
    %v2573 = vmul.f32 %v2572, 0.6931472
    %v2574 = vlog2.pop %v2498
    %v2575 = vmul.f32 %v2574, 0.6931472
    %v2576 = vlog2.pop %v2505
    %v2577 = vmul.f32 %v2576, 0.6931472
    %v2578 = vlog2.pop %v2512
    %v2579 = vmul.f32 %v2578, 0.6931472
    %v2580 = vlog2.pop %v2519
    %v2581 = vmul.f32 %v2580, 0.6931472
    %v2582 = vlog2.pop %v2526
    %v2583 = vmul.f32 %v2582, 0.6931472
    %v2584 = vlog2.pop %v2533
    %v2585 = vmul.f32 %v2584, 0.6931472
    %v2586 = vlog2.pop %v2540
    %v2587 = vmul.f32 %v2586, 0.6931472
    %v2588 = vlog2.pop %v2547
    %v2589 = vmul.f32 %v2588, 0.6931472
    %v2590 = vlog2.pop %v2554
    %v2591 = vmul.f32 %v2590, 0.6931472
    %v2592 = vlog2.pop %v2561
    %v2593 = vmul.f32 %v2592, 0.6931472
    %v2596 = vrot.slane %v2345, 1
    %v2597 = vrot.slane %v2345, 2
    %v2598 = vrot.slane %v2345, 3
    %v2599 = vrot.slane %v2345, 4
    %v2600 = vrot.slane %v2345, 5
    %v2601 = vrot.slane %v2345, 6
    %v2602 = vrot.slane %v2345, 7
    %v2603 = vrot.slane %v2346, 1
    %v2604 = vrot.slane %v2346, 2
    %v2605 = vrot.slane %v2346, 3
    %v2606 = vrot.slane %v2346, 4
    %v2607 = vrot.slane %v2346, 5
    %v2608 = vrot.slane %v2346, 6
    %v2609 = vrot.slane %v2346, 7
    %v2626 = vadd.f32 %v2563, %v2345
    %v2627 = vadd.f32 %v2565, %v2596
    %v2628 = vadd.f32 %v2567, %v2597
    %v2629 = vadd.f32 %v2569, %v2598
    %v2630 = vadd.f32 %v2571, %v2599
    %v2631 = vadd.f32 %v2573, %v2600
    %v2632 = vadd.f32 %v2575, %v2601
    %v2633 = vadd.f32 %v2577, %v2602
    %v2634 = vadd.f32 %v2579, %v2346
    %v2635 = vadd.f32 %v2581, %v2603
    %v2636 = vadd.f32 %v2583, %v2604
    %v2637 = vadd.f32 %v2585, %v2605
    %v2638 = vadd.f32 %v2587, %v2606
    %v2639 = vadd.f32 %v2589, %v2607
    %v2640 = vadd.f32 %v2591, %v2608
    %v2641 = vadd.f32 %v2593, %v2609
    %v2642 = vadd.f32 %v2626, %v2379
    %v2643 = vadd.f32 %v2627, %v2379
    %v2644 = vadd.f32 %v2628, %v2379
    %v2645 = vadd.f32 %v2629, %v2379
    %v2646 = vadd.f32 %v2630, %v2379
    %v2647 = vadd.f32 %v2631, %v2379
    %v2648 = vadd.f32 %v2632, %v2379
    %v2649 = vadd.f32 %v2633, %v2379
    %v2650 = vadd.f32 %v2634, %v2379
    %v2651 = vadd.f32 %v2635, %v2379
    %v2652 = vadd.f32 %v2636, %v2379
    %v2653 = vadd.f32 %v2637, %v2379
    %v2654 = vadd.f32 %v2638, %v2379
    %v2655 = vadd.f32 %v2639, %v2379
    %v2656 = vadd.f32 %v2640, %v2379
    %v2657 = vadd.f32 %v2641, %v2379
    %v2658 = vadd.f32 %v2642, %v531
    %v2659 = vadd.f32 %v2643, %v536
    %v2660 = vadd.f32 %v2644, %v537
    %v2661 = vadd.f32 %v2645, %v538
    %v2662 = vadd.f32 %v2646, %v539
    %v2663 = vadd.f32 %v2647, %v540
    %v2664 = vadd.f32 %v2648, %v541
    %v2665 = vadd.f32 %v2649, %v542
    %v2666 = vadd.f32 %v2650, %v535
    %v2667 = vadd.f32 %v2651, %v543
    %v2668 = vadd.f32 %v2652, %v544
    %v2669 = vadd.f32 %v2653, %v545
    %v2670 = vadd.f32 %v2654, %v546
    %v2671 = vadd.f32 %v2655, %v547
    %v2672 = vadd.f32 %v2656, %v548
    %v2673 = vadd.f32 %v2657, %v549
    %vm2674 = vcmp.gt.f32.partialorder %v2309, 0.0
    %v2675 = vsel %vm2674, 1, 0
    %v2676 = vperm.slane %v2675, 0
    %vm2677 = vcmp.eq.s32.totalorder %v2676, 1
    %v2694 = vrot.slane %v2659, 7
    %v2695 = vsel %vm603, %v2694, %v2658
    %v2696 = vrot.slane %v2660, 6
    %v2697 = vsel %vm606, %v2696, %v2695
    %v2698 = vrot.slane %v2661, 5
    %v2699 = vsel %vm609, %v2698, %v2697
    %v2700 = vrot.slane %v2662, 4
    %v2701 = vsel %vm612, %v2700, %v2699
    %v2702 = vrot.slane %v2663, 3
    %v2703 = vsel %vm615, %v2702, %v2701
    %v2704 = vrot.slane %v2664, 2
    %v2705 = vsel %vm618, %v2704, %v2703
    %v2706 = vrot.slane %v2665, 1
    %v2707 = vsel %vm621, %v2706, %v2705
    %v2708 = vrot.slane %v2667, 7
    %v2709 = vsel %vm603, %v2708, %v2666
    %v2710 = vrot.slane %v2668, 6
    %v2711 = vsel %vm606, %v2710, %v2709
    %v2712 = vrot.slane %v2669, 5
    %v2713 = vsel %vm609, %v2712, %v2711
    %v2714 = vrot.slane %v2670, 4
    %v2715 = vsel %vm612, %v2714, %v2713
    %v2716 = vrot.slane %v2671, 3
    %v2717 = vsel %vm615, %v2716, %v2715
    %v2718 = vrot.slane %v2672, 2
    %v2719 = vsel %vm618, %v2718, %v2717
    %v2720 = vrot.slane %v2673, 1
    %v2721 = vsel %vm621, %v2720, %v2719
    %v2724 = vsel %vm2677, %v2707, %v2307
    %v2725 = vsel %vm2677, %v2721, %v2308
    %v2726 = vld [vmem:[%s3 + $0x7] sm:$0x1]
    %s2727 = scalar_lea.vmem [#allocation5], 112
    %v2728 = vld [vmem:[%s2727] sm:$0xff]
    %v2729 = vld [vmem:[%s2727 + $0x8] sm:$0xff]
    %v2730 = vmax.f32 %v2728, %v2729
    %v2731 = vrot.slane %v2730, 4
    %v2732 = vmax.f32 %v2730, %v2731
    %v2733 = vrot.slane %v2732, 2
    %v2734 = vmax.f32 %v2732, %v2733
    %v2735 = vrot.slane %v2734, 1
    %v2736 = vmax.f32 %v2734, %v2735
    %vm2737 = vcmp.eq.f32.partialorder %v2728, %v2736
    %vm2738 = vcmp.eq.f32.partialorder %v2729, %v2736
    %v2739 = vsel %vm2737, %v84, 16
    %v2740 = vsel %vm2738, %v85, 16
    %vm2741 = vcmp.lt.s32.totalorder %v2739, %v2740
    %v2742 = vsel %vm2741, %v2739, %v2740
    %v2743 = vrot.slane %v2742, 4
    %vm2744 = vcmp.lt.s32.totalorder %v2742, %v2743
    %v2745 = vsel %vm2744, %v2742, %v2743
    %v2746 = vrot.slane %v2745, 2
    %vm2747 = vcmp.lt.s32.totalorder %v2745, %v2746
    %v2748 = vsel %vm2747, %v2745, %v2746
    %v2749 = vrot.slane %v2748, 1
    %vm2750 = vcmp.lt.s32.totalorder %v2748, %v2749
    %v2751 = vsel %vm2750, %v2748, %v2749
    %2752 = vst [vmem:[#allocation9 + $0x7] sm:$0x1] %v2751
    %v2753 = vld [vmem:[%s2 + $0x7] sm:$0x1]
    %v2754 = vperm.slane %v2753, 0
    %vm2755 = vcmp.eq.s32.totalorder %v84, %v2754
    %vm2756 = vcmp.eq.s32.totalorder %v85, %v2754
    %v2757 = vsel %vm2755, 1, 0
    %v2758 = vsel %vm2756, 1, 0
    %v2759 = vcvt.s32.f32 %v2757
    %v2760 = vcvt.s32.f32 %v2758
    %s2761 = scalar_lea.vmem [#allocation2], 112
    %v2762 = vld [vmem:[%s2761] sm:$0xff]
    %v2763 = vld [vmem:[%s2761 + $0x8] sm:$0xff]
    %v2764 = vmul.f32 %v2762, %v2759
    %v2765 = vmul.f32 %v2763, %v2760
    %v2766 = vadd.f32 %v2764, %v2765
    %v2767 = vrot.slane %v2766, 4
    %v2768 = vadd.f32 %v2766, %v2767
    %v2769 = vrot.slane %v2768, 2
    %v2770 = vadd.f32 %v2768, %v2769
    %v2771 = vrot.slane %v2770, 1
    %v2772 = vadd.f32 %v2770, %v2771
    %v2773 = vmul.f32 %v2759, %v139
    %v2774 = vmul.f32 %v2760, %v144
    %v2775 = vadd.f32 %v2773, %v2774
    %v2776 = vrot.slane %v2775, 4
    %v2777 = vadd.f32 %v2775, %v2776
    %v2778 = vrot.slane %v2777, 2
    %v2779 = vadd.f32 %v2777, %v2778
    %v2780 = vrot.slane %v2779, 1
    %v2781 = vadd.f32 %v2779, %v2780
    %v2782 = vld [vmem:[%s4 + $0x6] sm:$0x1]
    %v2783 = vadd.f32 %v2782, %v2772
    %v2784 = vmul.f32 %v2783, %v2726
    %v2785 = vadd.f32 %v2372, %v2784
    %v2786 = vmul.f32 %v2364, %v2309
    %v2787 = vsub.f32 1.0, %v2726
    %v2788 = vmul.f32 %v2786, %v2787
    %v2789 = vadd.f32 %v2785, %v2788
    %v2790 = vmax.f32 %v2724, %v2725
    %v2791 = vrot.slane %v2790, 4
    %v2792 = vmax.f32 %v2790, %v2791
    %v2793 = vrot.slane %v2792, 2
    %v2794 = vmax.f32 %v2792, %v2793
    %v2795 = vrot.slane %v2794, 1
    %v2796 = vmax.f32 %v2794, %v2795
    %v2797 = vsub.f32 %v2724, %v2796
    %v2798 = vsub.f32 %v2725, %v2796
    %v2799 = vmul.f32 %v2797, 1.442695
    %v2800 = vpow.pop %v2799
    %v2801 = vmul.f32 %v2798, 1.442695
    %v2802 = vpow.pop %v2801
    %v2803 = vld [vmem:[#allocation7] sm:$0xff]
    %v2804 = vld [vmem:[#allocation7 + $0x8] sm:$0xff]
    %v2805 = vld [vmem:[#allocation7 + $0x10] sm:$0xff]
    %v2806 = vld [vmem:[#allocation7 + $0x18] sm:$0xff]
    %v2807 = vld [vmem:[#allocation7 + $0x20] sm:$0xff]
    %v2808 = vld [vmem:[#allocation7 + $0x28] sm:$0xff]
    %v2809 = vld [vmem:[#allocation7 + $0x30] sm:$0xff]
    %v2810 = vld [vmem:[#allocation7 + $0x38] sm:$0xff]
    %v2811 = vld [vmem:[#allocation7 + $0x40] sm:$0xff]
    %v2812 = vld [vmem:[#allocation7 + $0x48] sm:$0xff]
    %v2813 = vld [vmem:[#allocation7 + $0x50] sm:$0xff]
    %v2814 = vld [vmem:[#allocation7 + $0x58] sm:$0xff]
    %v2815 = vld [vmem:[#allocation7 + $0x60] sm:$0xff]
    %v2816 = vld [vmem:[#allocation7 + $0x68] sm:$0xff]
    %v2817 = vld [vmem:[#allocation7 + $0x70] sm:$0xff]
    %v2818 = vld [vmem:[#allocation7 + $0x78] sm:$0xff]
    %v2819 = vld [vmem:[#allocation7 + $0x80] sm:$0xff]
    %v2820 = vld [vmem:[#allocation7 + $0x88] sm:$0xff]
    %v2821 = vld [vmem:[#allocation7 + $0x90] sm:$0xff]
    %v2822 = vld [vmem:[#allocation7 + $0x98] sm:$0xff]
    %v2823 = vld [vmem:[#allocation7 + $0xa0] sm:$0xff]
    %v2824 = vld [vmem:[#allocation7 + $0xa8] sm:$0xff]
    %v2825 = vld [vmem:[#allocation7 + $0xb0] sm:$0xff]
    %v2826 = vld [vmem:[#allocation7 + $0xb8] sm:$0xff]
    %v2827 = vld [vmem:[#allocation7 + $0xc0] sm:$0xff]
    %v2828 = vld [vmem:[#allocation7 + $0xc8] sm:$0xff]
    %v2829 = vld [vmem:[#allocation7 + $0xd0] sm:$0xff]
    %v2830 = vld [vmem:[#allocation7 + $0xd8] sm:$0xff]
    %v2831 = vld [vmem:[#allocation7 + $0xe0] sm:$0xff]
    %v2832 = vld [vmem:[#allocation7 + $0xe8] sm:$0xff]
    %v2833 = vld [vmem:[#allocation7 + $0xf0] sm:$0xff]
    %v2834 = vld [vmem:[#allocation7 + $0xf8] sm:$0xff]
    %v2835 = vmul.f32 %v2800, %v2803
    %v2836 = vmul.f32 %v2802, %v2804
    %v2837 = vmul.f32 %v2800, %v2805
    %v2838 = vmul.f32 %v2802, %v2806
    %v2839 = vmul.f32 %v2800, %v2807
    %v2840 = vmul.f32 %v2802, %v2808
    %v2841 = vmul.f32 %v2800, %v2809
    %v2842 = vmul.f32 %v2802, %v2810
    %v2843 = vmul.f32 %v2800, %v2811
    %v2844 = vmul.f32 %v2802, %v2812
    %v2845 = vmul.f32 %v2800, %v2813
    %v2846 = vmul.f32 %v2802, %v2814
    %v2847 = vmul.f32 %v2800, %v2815
    %v2848 = vmul.f32 %v2802, %v2816
    %v2849 = vmul.f32 %v2800, %v2817
    %v2850 = vmul.f32 %v2802, %v2818
    %v2851 = vmul.f32 %v2800, %v2819
    %v2852 = vmul.f32 %v2802, %v2820
    %v2853 = vmul.f32 %v2800, %v2821
    %v2854 = vmul.f32 %v2802, %v2822
    %v2855 = vmul.f32 %v2800, %v2823
    %v2856 = vmul.f32 %v2802, %v2824
    %v2857 = vmul.f32 %v2800, %v2825
    %v2858 = vmul.f32 %v2802, %v2826
    %v2859 = vmul.f32 %v2800, %v2827
    %v2860 = vmul.f32 %v2802, %v2828
    %v2861 = vmul.f32 %v2800, %v2829
    %v2862 = vmul.f32 %v2802, %v2830
    %v2863 = vmul.f32 %v2800, %v2831
    %v2864 = vmul.f32 %v2802, %v2832
    %v2865 = vmul.f32 %v2800, %v2833
    %v2866 = vmul.f32 %v2802, %v2834
    %v2867 = vadd.f32 %v2835, %v2836
    %v2868 = vrot.slane %v2867, 4
    %v2869 = vadd.f32 %v2867, %v2868
    %v2870 = vrot.slane %v2869, 2
    %v2871 = vadd.f32 %v2869, %v2870
    %v2872 = vrot.slane %v2871, 1
    %v2873 = vadd.f32 %v2871, %v2872
    %v2874 = vadd.f32 %v2837, %v2838
    %v2875 = vrot.slane %v2874, 4
    %v2876 = vadd.f32 %v2874, %v2875
    %v2877 = vrot.slane %v2876, 2
    %v2878 = vadd.f32 %v2876, %v2877
    %v2879 = vrot.slane %v2878, 1
    %v2880 = vadd.f32 %v2878, %v2879
    %v2881 = vadd.f32 %v2839, %v2840
    %v2882 = vrot.slane %v2881, 4
    %v2883 = vadd.f32 %v2881, %v2882
    %v2884 = vrot.slane %v2883, 2
    %v2885 = vadd.f32 %v2883, %v2884
    %v2886 = vrot.slane %v2885, 1
    %v2887 = vadd.f32 %v2885, %v2886
    %v2888 = vadd.f32 %v2841, %v2842
    %v2889 = vrot.slane %v2888, 4
    %v2890 = vadd.f32 %v2888, %v2889
    %v2891 = vrot.slane %v2890, 2
    %v2892 = vadd.f32 %v2890, %v2891
    %v2893 = vrot.slane %v2892, 1
    %v2894 = vadd.f32 %v2892, %v2893
    %v2895 = vadd.f32 %v2843, %v2844
    %v2896 = vrot.slane %v2895, 4
    %v2897 = vadd.f32 %v2895, %v2896
    %v2898 = vrot.slane %v2897, 2
    %v2899 = vadd.f32 %v2897, %v2898
    %v2900 = vrot.slane %v2899, 1
    %v2901 = vadd.f32 %v2899, %v2900
    %v2902 = vadd.f32 %v2845, %v2846
    %v2903 = vrot.slane %v2902, 4
    %v2904 = vadd.f32 %v2902, %v2903
    %v2905 = vrot.slane %v2904, 2
    %v2906 = vadd.f32 %v2904, %v2905
    %v2907 = vrot.slane %v2906, 1
    %v2908 = vadd.f32 %v2906, %v2907
    %v2909 = vadd.f32 %v2847, %v2848
    %v2910 = vrot.slane %v2909, 4
    %v2911 = vadd.f32 %v2909, %v2910
    %v2912 = vrot.slane %v2911, 2
    %v2913 = vadd.f32 %v2911, %v2912
    %v2914 = vrot.slane %v2913, 1
    %v2915 = vadd.f32 %v2913, %v2914
    %v2916 = vadd.f32 %v2849, %v2850
    %v2917 = vrot.slane %v2916, 4
    %v2918 = vadd.f32 %v2916, %v2917
    %v2919 = vrot.slane %v2918, 2
    %v2920 = vadd.f32 %v2918, %v2919
    %v2921 = vrot.slane %v2920, 1
    %v2922 = vadd.f32 %v2920, %v2921
    %v2923 = vadd.f32 %v2851, %v2852
    %v2924 = vrot.slane %v2923, 4
    %v2925 = vadd.f32 %v2923, %v2924
    %v2926 = vrot.slane %v2925, 2
    %v2927 = vadd.f32 %v2925, %v2926
    %v2928 = vrot.slane %v2927, 1
    %v2929 = vadd.f32 %v2927, %v2928
    %v2930 = vadd.f32 %v2853, %v2854
    %v2931 = vrot.slane %v2930, 4
    %v2932 = vadd.f32 %v2930, %v2931
    %v2933 = vrot.slane %v2932, 2
    %v2934 = vadd.f32 %v2932, %v2933
    %v2935 = vrot.slane %v2934, 1
    %v2936 = vadd.f32 %v2934, %v2935
    %v2937 = vadd.f32 %v2855, %v2856
    %v2938 = vrot.slane %v2937, 4
    %v2939 = vadd.f32 %v2937, %v2938
    %v2940 = vrot.slane %v2939, 2
    %v2941 = vadd.f32 %v2939, %v2940
    %v2942 = vrot.slane %v2941, 1
    %v2943 = vadd.f32 %v2941, %v2942
    %v2944 = vadd.f32 %v2857, %v2858
    %v2945 = vrot.slane %v2944, 4
    %v2946 = vadd.f32 %v2944, %v2945
    %v2947 = vrot.slane %v2946, 2
    %v2948 = vadd.f32 %v2946, %v2947
    %v2949 = vrot.slane %v2948, 1
    %v2950 = vadd.f32 %v2948, %v2949
    %v2951 = vadd.f32 %v2859, %v2860
    %v2952 = vrot.slane %v2951, 4
    %v2953 = vadd.f32 %v2951, %v2952
    %v2954 = vrot.slane %v2953, 2
    %v2955 = vadd.f32 %v2953, %v2954
    %v2956 = vrot.slane %v2955, 1
    %v2957 = vadd.f32 %v2955, %v2956
    %v2958 = vadd.f32 %v2861, %v2862
    %v2959 = vrot.slane %v2958, 4
    %v2960 = vadd.f32 %v2958, %v2959
    %v2961 = vrot.slane %v2960, 2
    %v2962 = vadd.f32 %v2960, %v2961
    %v2963 = vrot.slane %v2962, 1
    %v2964 = vadd.f32 %v2962, %v2963
    %v2965 = vadd.f32 %v2863, %v2864
    %v2966 = vrot.slane %v2965, 4
    %v2967 = vadd.f32 %v2965, %v2966
    %v2968 = vrot.slane %v2967, 2
    %v2969 = vadd.f32 %v2967, %v2968
    %v2970 = vrot.slane %v2969, 1
    %v2971 = vadd.f32 %v2969, %v2970
    %v2972 = vadd.f32 %v2865, %v2866
    %v2973 = vrot.slane %v2972, 4
    %v2974 = vadd.f32 %v2972, %v2973
    %v2975 = vrot.slane %v2974, 2
    %v2976 = vadd.f32 %v2974, %v2975
    %v2977 = vrot.slane %v2976, 1
    %v2978 = vadd.f32 %v2976, %v2977
    %v2979 = vlog2.pop %v2873
    %v2980 = vmul.f32 %v2979, 0.6931472
    %v2981 = vlog2.pop %v2880
    %v2982 = vmul.f32 %v2981, 0.6931472
    %v2983 = vlog2.pop %v2887
    %v2984 = vmul.f32 %v2983, 0.6931472
    %v2985 = vlog2.pop %v2894
    %v2986 = vmul.f32 %v2985, 0.6931472
    %v2987 = vlog2.pop %v2901
    %v2988 = vmul.f32 %v2987, 0.6931472
    %v2989 = vlog2.pop %v2908
    %v2990 = vmul.f32 %v2989, 0.6931472
    %v2991 = vlog2.pop %v2915
    %v2992 = vmul.f32 %v2991, 0.6931472
    %v2993 = vlog2.pop %v2922
    %v2994 = vmul.f32 %v2993, 0.6931472
    %v2995 = vlog2.pop %v2929
    %v2996 = vmul.f32 %v2995, 0.6931472
    %v2997 = vlog2.pop %v2936
    %v2998 = vmul.f32 %v2997, 0.6931472
    %v2999 = vlog2.pop %v2943
    %v3000 = vmul.f32 %v2999, 0.6931472
    %v3001 = vlog2.pop %v2950
    %v3002 = vmul.f32 %v3001, 0.6931472
    %v3003 = vlog2.pop %v2957
    %v3004 = vmul.f32 %v3003, 0.6931472
    %v3005 = vlog2.pop %v2964
    %v3006 = vmul.f32 %v3005, 0.6931472
    %v3007 = vlog2.pop %v2971
    %v3008 = vmul.f32 %v3007, 0.6931472
    %v3009 = vlog2.pop %v2978
    %v3010 = vmul.f32 %v3009, 0.6931472
    %v3013 = vrot.slane %v2762, 1
    %v3014 = vrot.slane %v2762, 2
    %v3015 = vrot.slane %v2762, 3
    %v3016 = vrot.slane %v2762, 4
    %v3017 = vrot.slane %v2762, 5
    %v3018 = vrot.slane %v2762, 6
    %v3019 = vrot.slane %v2762, 7
    %v3020 = vrot.slane %v2763, 1
    %v3021 = vrot.slane %v2763, 2
    %v3022 = vrot.slane %v2763, 3
    %v3023 = vrot.slane %v2763, 4
    %v3024 = vrot.slane %v2763, 5
    %v3025 = vrot.slane %v2763, 6
    %v3026 = vrot.slane %v2763, 7
    %v3043 = vadd.f32 %v2980, %v2762
    %v3044 = vadd.f32 %v2982, %v3013
    %v3045 = vadd.f32 %v2984, %v3014
    %v3046 = vadd.f32 %v2986, %v3015
    %v3047 = vadd.f32 %v2988, %v3016
    %v3048 = vadd.f32 %v2990, %v3017
    %v3049 = vadd.f32 %v2992, %v3018
    %v3050 = vadd.f32 %v2994, %v3019
    %v3051 = vadd.f32 %v2996, %v2763
    %v3052 = vadd.f32 %v2998, %v3020
    %v3053 = vadd.f32 %v3000, %v3021
    %v3054 = vadd.f32 %v3002, %v3022
    %v3055 = vadd.f32 %v3004, %v3023
    %v3056 = vadd.f32 %v3006, %v3024
    %v3057 = vadd.f32 %v3008, %v3025
    %v3058 = vadd.f32 %v3010, %v3026
    %v3059 = vadd.f32 %v3043, %v2796
    %v3060 = vadd.f32 %v3044, %v2796
    %v3061 = vadd.f32 %v3045, %v2796
    %v3062 = vadd.f32 %v3046, %v2796
    %v3063 = vadd.f32 %v3047, %v2796
    %v3064 = vadd.f32 %v3048, %v2796
    %v3065 = vadd.f32 %v3049, %v2796
    %v3066 = vadd.f32 %v3050, %v2796
    %v3067 = vadd.f32 %v3051, %v2796
    %v3068 = vadd.f32 %v3052, %v2796
    %v3069 = vadd.f32 %v3053, %v2796
    %v3070 = vadd.f32 %v3054, %v2796
    %v3071 = vadd.f32 %v3055, %v2796
    %v3072 = vadd.f32 %v3056, %v2796
    %v3073 = vadd.f32 %v3057, %v2796
    %v3074 = vadd.f32 %v3058, %v2796
    %v3075 = vadd.f32 %v3059, %v531
    %v3076 = vadd.f32 %v3060, %v536
    %v3077 = vadd.f32 %v3061, %v537
    %v3078 = vadd.f32 %v3062, %v538
    %v3079 = vadd.f32 %v3063, %v539
    %v3080 = vadd.f32 %v3064, %v540
    %v3081 = vadd.f32 %v3065, %v541
    %v3082 = vadd.f32 %v3066, %v542
    %v3083 = vadd.f32 %v3067, %v535
    %v3084 = vadd.f32 %v3068, %v543
    %v3085 = vadd.f32 %v3069, %v544
    %v3086 = vadd.f32 %v3070, %v545
    %v3087 = vadd.f32 %v3071, %v546
    %v3088 = vadd.f32 %v3072, %v547
    %v3089 = vadd.f32 %v3073, %v548
    %v3090 = vadd.f32 %v3074, %v549
    %vm3091 = vcmp.gt.f32.partialorder %v2726, 0.0
    %v3092 = vsel %vm3091, 1, 0
    %v3093 = vperm.slane %v3092, 0
    %vm3094 = vcmp.eq.s32.totalorder %v3093, 1
    %v3111 = vrot.slane %v3076, 7
    %v3112 = vsel %vm603, %v3111, %v3075
    %v3113 = vrot.slane %v3077, 6
    %v3114 = vsel %vm606, %v3113, %v3112
    %v3115 = vrot.slane %v3078, 5
    %v3116 = vsel %vm609, %v3115, %v3114
    %v3117 = vrot.slane %v3079, 4
    %v3118 = vsel %vm612, %v3117, %v3116
    %v3119 = vrot.slane %v3080, 3
    %v3120 = vsel %vm615, %v3119, %v3118
    %v3121 = vrot.slane %v3081, 2
    %v3122 = vsel %vm618, %v3121, %v3120
    %v3123 = vrot.slane %v3082, 1
    %v3124 = vsel %vm621, %v3123, %v3122
    %v3125 = vrot.slane %v3084, 7
    %v3126 = vsel %vm603, %v3125, %v3083
    %v3127 = vrot.slane %v3085, 6
    %v3128 = vsel %vm606, %v3127, %v3126
    %v3129 = vrot.slane %v3086, 5
    %v3130 = vsel %vm609, %v3129, %v3128
    %v3131 = vrot.slane %v3087, 4
    %v3132 = vsel %vm612, %v3131, %v3130
    %v3133 = vrot.slane %v3088, 3
    %v3134 = vsel %vm615, %v3133, %v3132
    %v3135 = vrot.slane %v3089, 2
    %v3136 = vsel %vm618, %v3135, %v3134
    %v3137 = vrot.slane %v3090, 1
    %v3138 = vsel %vm621, %v3137, %v3136
    %v3141 = vsel %vm3094, %v3124, %v2724
    %v3142 = vsel %vm3094, %v3138, %v2725
    %v3143 = vmul.f32 %v2781, %v2726
    %v3144 = vadd.f32 %v2789, %v3143
    %v3145 = vadd.f32 %v3141, %v139
    %v3146 = vadd.f32 %v3142, %v144
    %v3147 = vmax.f32 %v3145, %v3146
    %v3148 = vrot.slane %v3147, 4
    %v3149 = vmax.f32 %v3147, %v3148
    %v3150 = vrot.slane %v3149, 2
    %v3151 = vmax.f32 %v3149, %v3150
    %v3152 = vrot.slane %v3151, 1
    %v3153 = vmax.f32 %v3151, %v3152
    %v3154 = vsub.f32 %v3145, %v3153
    %v3155 = vsub.f32 %v3146, %v3153
    %v3156 = vmul.f32 %v3154, 1.442695
    %v3157 = vpow.pop %v3156
    %v3158 = vmul.f32 %v3155, 1.442695
    %v3159 = vpow.pop %v3158
    %v3160 = vadd.f32 %v3157, %v3159
    %v3161 = vrot.slane %v3160, 4
    %v3162 = vadd.f32 %v3160, %v3161
    %v3163 = vrot.slane %v3162, 2
    %v3164 = vadd.f32 %v3162, %v3163
    %v3165 = vrot.slane %v3164, 1
    %v3166 = vadd.f32 %v3164, %v3165
    %v3167 = vlog2.pop %v3166
    %v3168 = vmul.f32 %v3167, 0.6931472
    %v3169 = vadd.f32 %v3153, %v3168
    %vm3170 = vcmp.gt.f32.partialorder %v155, 0.0
    %v3171 = vsel %vm3170, 1, 0
    %v3172 = vcvt.s32.f32 %v3171
    %v3173 = vsub.f32 %v3169, %v3144
    %v3174 = vmul.f32 %v3173, %v3172
    %3175 = vst [vmem:[#allocation8] sm:$0x1] %v3174
    // Predicated region
    $region50: #{tpu_custom_call.1} parent=1 // pred_check
      _
    $region51: #{tpu_custom_call.1} parent=1 // pred_check_branch
      %3177 = sbr.rel (0) target = $region53
    $region52: #{tpu_custom_call.1} parent=1 // pred_region
      %3179 = vsyncadd [#allocation4], 0
      %s3181 = sshll.u32 [#allocation8], 4
      %s3182 = int_to_ptr.vmem [resolvable:$true] %s3181
      %s3183 = sshll.u32 %s9, 4
      %s3184 = int_to_ptr.hbm [resolvable:$true] %s3183
      %3186 = dma.vmem_to_hbm [thread:$0]  %s3182, 16, %s3184, [#allocation4]
    $region53: #{tpu_custom_call.1} parent=1 // pred_fallthru
      _
    // Predicated region
    $region54: #{tpu_custom_call.1} parent=1 // pred_check
      _
    $region55: #{tpu_custom_call.1} parent=1 // pred_check_branch
      %3188 = sbr.rel (0) target = $region57
    $region56: #{tpu_custom_call.1} parent=1 // pred_region
      %3190 = vsyncadd [#allocation10], 0
      %s3192 = sshll.u32 [#allocation9], 4
      %s3193 = int_to_ptr.vmem [resolvable:$true] %s3192
      %s3194 = sshll.u32 %s10, 4
      %s3195 = int_to_ptr.hbm [resolvable:$true] %s3194
      %3197 = dma.vmem_to_hbm [thread:$0]  %s3193, 128, %s3195, [#allocation10]
    $region57: #{tpu_custom_call.1} parent=1 // pred_fallthru
      _
    // Predicated region
    $region58: #{tpu_custom_call.1} parent=1 // pred_check
      _
    $region59: #{tpu_custom_call.1} parent=1 // pred_check_branch
      %3199 = sbr.rel (0) target = $region61
    $region60: #{tpu_custom_call.1} parent=1 // pred_region
      %3201 = dma.done [#allocation4], 16
    $region61: #{tpu_custom_call.1} parent=1 // pred_fallthru
      _
    // Predicated region
    $region62: #{tpu_custom_call.1} parent=1 // pred_check
      _
    $region63: #{tpu_custom_call.1} parent=1 // pred_check_branch
      %3203 = sbr.rel (0) target = $region65
    $region64: #{tpu_custom_call.1} parent=1 // pred_region
      %3205 = dma.done [#allocation10], 128
    $region65: #{tpu_custom_call.1} parent=1 // pred_fallthru
      _
    %3206 = vsyncpa [#allocation3], 1
    %3207 = vsyncpa [#allocation6], 1
    %3208 = vsyncpa [#allocation4], 1
    %3209 = vsyncpa [#allocation10], 1

</llo_original>
